<compile_context>
chip_gen: v6e
topology: v6e:2x2x1
jax: 0.10.0
libtpu: 0.0.40
codegen_flags: <defaults>
</compile_context>

<pallas_src>
import functools

import jax
import jax.numpy as jnp
from jax import lax
from jax.experimental import pallas as pl
from jax.experimental.pallas import tpu as pltpu

EPS = 1e-5
LANE = 128


def _round_up(n, m):
    return ((n + m - 1) // m) * m


# ------------------------------- fused kernel ---------------------------------


def _bn_affine(y, gamma, beta, relu):
    """Training-mode BatchNorm over rows (rows == N*H*W), per-channel cols.

    Single pass: var = E[y^2] - E[y]^2, everything in f32.
    """
    mean = jnp.mean(y, axis=0, keepdims=True)
    meansq = jnp.mean(y * y, axis=0, keepdims=True)
    var = meansq - mean * mean
    out = (y - mean) * lax.rsqrt(var + EPS) * gamma + beta
    if relu:
        out = jnp.maximum(out, 0.0)
    return out


def _bottleneck_kernel(*refs, stride, has_proj, dims):
    """Whole bottleneck block; every intermediate stays resident in VMEM."""
    if has_proj:
        (x_ref, w1_ref, g1_ref, b1_ref, w2_ref, g2_ref, b2_ref,
         w3_ref, g3_ref, b3_ref, ws_ref, gs_ref, bs_ref,
         o_ref, pad_ref) = refs
    else:
        (x_ref, w1_ref, g1_ref, b1_ref, w2_ref, g2_ref, b2_ref,
         w3_ref, g3_ref, b3_ref,
         o_ref, pad_ref) = refs
        ws_ref = gs_ref = bs_ref = None

    n, hh, wh, ho, wo, pp, cp, cop = dims
    s = stride
    bp = s * s * n                 # phase-decomposed batch (s*s phases x N)
    m_in = bp * hh * wh            # == N*H*W
    m_out = n * ho * wo
    cdt = x_ref.dtype              # matmul / storage dtype (bf16 or f32)

    # --- conv1 (1x1) + BN1 + ReLU: one MXU matmul over all rows --------------
    x2d = x_ref[...].reshape(m_in, cp)
    y1 = jnp.dot(x2d, w1_ref[...], preferred_element_type=jnp.float32)
    t1 = _bn_affine(y1, g1_ref[...], b1_ref[...], relu=True)

    # Stash t1 into the spatially padded, phase-major VMEM scratch.  Only the
    # 1-wide halo border that the taps read is zeroed (4 slab stores); the
    # interior is fully overwritten, so the old full-buffer zero-fill was a
    # wasted store pass (v5e has a single vector-store slot).
    zrow = jnp.zeros((bp, 1, wh + 2, pp), cdt)
    zcol = jnp.zeros((bp, hh + 2, 1, pp), cdt)
    pad_ref[:, 0:1, :, :] = zrow
    pad_ref[:, hh + 1:hh + 2, :, :] = zrow
    pad_ref[:, :, 0:1, :] = zcol
    pad_ref[:, :, wh + 1:wh + 2, :] = zcol
    pad_ref[:, 1:hh + 1, 1:wh + 1, :] = t1.reshape(bp, hh, wh, pp).astype(cdt)

    # --- conv2 (3x3, stride) as 9 accumulating per-tap matmuls ---------------
    # No im2col buffer: each tap is a contiguous static slice of the resident
    # padded t1 (the conv stride is absorbed into the phase index), fed
    # straight to the MXU and accumulated in f32.
    y2 = jnp.zeros((m_out, pp), jnp.float32)
    for dy in range(3):
        qy, py = divmod(dy - 1, s)
        for dx in range(3):
            qx, px = divmod(dx - 1, s)
            ph = py * s + px
            k = dy * 3 + dx
            tap = pad_ref[ph * n:(ph + 1) * n,
                          qy + 1:qy + 1 + ho,
                          qx + 1:qx + 1 + wo, :].reshape(m_out, pp)
            y2 = y2 + jnp.dot(tap, w2_ref[k * pp:(k + 1) * pp, :],
                              preferred_element_type=jnp.float32)
    t2 = _bn_affine(y2, g2_ref[...], b2_ref[...], relu=True)

    # --- shortcut: phase (0,0) of x == x[:, ::s, ::s, :], already in VMEM ----
    xs = x_ref[0:n].reshape(m_out, cp)
    if has_proj:
        ysc = jnp.dot(xs, ws_ref[...], preferred_element_type=jnp.float32)
        short = _bn_affine(ysc, gs_ref[...], bs_ref[...], relu=False)
    else:
        short = xs.astype(jnp.float32)

    # --- conv3 (1x1) + BN3 + residual add + ReLU -----------------------------
    y3 = jnp.dot(t2.astype(cdt), w3_ref[...], preferred_element_type=jnp.float32)
    out = _bn_affine(y3, g3_ref[...], b3_ref[...], relu=False) + short
    o_ref[...] = jnp.maximum(out, 0.0).astype(o_ref.dtype)


# ------------------------------ wrapper / glue ---------------------------------


def _full_spec(shape):
    nd = len(shape)
    return pl.BlockSpec(shape, lambda i, _nd=nd: (0,) * _nd)


def _pad_last(a, target):
    d = target - a.shape[-1]
    if d == 0:
        return a
    return jnp.pad(a, [(0, 0)] * (a.ndim - 1) + [(0, d)])


def _pad_2d(a, rows, cols):
    return jnp.pad(a, ((0, rows - a.shape[0]), (0, cols - a.shape[1])))


def bottleneck_forward(x_nchw, params, stride, compute_dtype=jnp.bfloat16):
    """Fused forward of the PyTorch BottleneckResidualBlock (training-mode BN).

    `compute_dtype` is the dtype of x / weights fed to the MXU (bf16 default);
    accumulation, BN statistics and affine stay in f32.
    """
    N, Cin, H, W = x_nchw.shape
    P = params["w1"].shape[1]
    Cout = params["w3"].shape[1]
    s = int(stride)
    assert H % s == 0 and W % s == 0, "phase layout needs H, W divisible by stride"
    Hh, Wh = H // s, W // s
    Ho, Wo = Hh, Wh                       # k=3, pad=1, stride=s, H % s == 0
    has_proj = (s != 1) or (Cin != Cout)

    # Lane-dense channel widths (multiple of 128): unmasked stores, clean
    # (8,128) layouts.  NOTE: at toy widths (planes=4) most MXU work is zero
    # padding; at real ResNet widths (64/128/256/512) this padding is benign.
    Cp, Pp, Cop = (_round_up(c, LANE) for c in (Cin, P, Cout))

    # NCHW -> NHWC, channel-pad, then phase (space-to-batch) re-layout: one XLA
    # pass over x, no size blow-up.  Inside the kernel every strided access
    # (3x3 taps, strided shortcut) becomes a contiguous static slice.
    x = _pad_last(jnp.transpose(x_nchw, (0, 2, 3, 1)).astype(compute_dtype), Cp)
    x_ph = (x.reshape(N, Hh, s, Wh, s, Cp)
             .transpose(2, 4, 0, 1, 3, 5)
             .reshape(s * s * N, Hh, Wh, Cp))

    # Weights / BN params, zero-padded to lane-dense widths.  gamma is padded
    # with 0 (not 1) so padded channels stay exactly 0 through every stage.
    # Weights go to compute_dtype; BN gamma/beta stay f32.
    w1 = _pad_2d(params["w1"], Cp, Pp).astype(compute_dtype)
    g1, b1 = _pad_last(params["g1"], Pp), _pad_last(params["b1"], Pp)
    w2 = jnp.pad(params["w2"], ((0, 0), (0, 0), (0, Pp - P), (0, Pp - P))
                 ).reshape(9 * Pp, Pp).astype(compute_dtype)
    g2, b2 = _pad_last(params["g2"], Pp), _pad_last(params["b2"], Pp)
    w3 = _pad_2d(params["w3"], Pp, Cop).astype(compute_dtype)
    g3, b3 = _pad_last(params["g3"], Cop), _pad_last(params["b3"], Cop)

    inputs = [x_ph, w1, g1, b1, w2, g2, b2, w3, g3, b3]
    if has_proj:
        inputs += [_pad_2d(params["ws"], Cp, Cop).astype(compute_dtype),
                   _pad_last(params["gs"], Cop), _pad_last(params["bs"], Cop)]

    M_out = N * Ho * Wo
    dims = (N, Hh, Wh, Ho, Wo, Pp, Cp, Cop)
    kernel = functools.partial(_bottleneck_kernel, stride=s,
                               has_proj=has_proj, dims=dims)

    flops = 2 * (s * s * N * Hh * Wh) * Cp * Pp          # conv1
    flops += 2 * M_out * (9 * Pp) * Pp                   # conv2 (9 taps)
    flops += 2 * M_out * Pp * Cop                        # conv3
    if has_proj:
        flops += 2 * M_out * Cp * Cop                    # shortcut conv
    bytes_accessed = (sum(int(a.size) * a.dtype.itemsize for a in inputs)
                      + M_out * Cop * 4)

    out2d = pl.pallas_call(
        kernel,
        out_shape=jax.ShapeDtypeStruct((M_out, Cop), jnp.float32),
        grid=(1,),
        in_specs=[_full_spec(a.shape) for a in inputs],
        out_specs=_full_spec((M_out, Cop)),
        scratch_shapes=[
            # spatially padded t1 in phase layout (never leaves VMEM)
            pltpu.VMEM((s * s * N, Hh + 2, Wh + 2, Pp), compute_dtype),
        ],
        compiler_params=pltpu.CompilerParams(
            dimension_semantics=("arbitrary",),
            # 48 MiB fits v7x's 64 MiB/TC; raise toward ~96-100 MiB on
            # v5e/v6e (128 MiB physical) when sizing larger resident tiles.
            vmem_limit_bytes=48 * 1024 * 1024),
        cost_estimate=pl.CostEstimate(flops=int(flops), transcendentals=0,
                                      bytes_accessed=int(bytes_accessed)),
    )(*inputs)

    out = out2d.reshape(N, Ho, Wo, Cop)[..., :Cout]
    return jnp.transpose(out, (0, 3, 1, 2))   # back to NCHW


# --------------------------- pure-JAX reference --------------------------------


def _ref_forward(x, params, stride):
    def conv(x, w_oihw, s, p):
        return lax.conv_general_dilated(
            x, w_oihw, (s, s), [(p, p), (p, p)],
            dimension_numbers=("NCHW", "OIHW", "NCHW"))

    def bn(x, g, b):
        mean = jnp.mean(x, axis=(0, 2, 3), keepdims=True)
        var = jnp.mean((x - mean) ** 2, axis=(0, 2, 3), keepdims=True)
        return ((x - mean) * lax.rsqrt(var + EPS)
                * g.reshape(1, -1, 1, 1) + b.reshape(1, -1, 1, 1))

    w1 = params["w1"].T[:, :, None, None]
    w2 = jnp.transpose(params["w2"], (3, 2, 0, 1))
    w3 = params["w3"].T[:, :, None, None]
    out = jax.nn.relu(bn(conv(x, w1, 1, 0), params["g1"], params["b1"]))
    out = jax.nn.relu(bn(conv(out, w2, stride, 1), params["g2"], params["b2"]))
    out = bn(conv(out, w3, 1, 0), params["g3"], params["b3"])
    Cin, Cout = params["w1"].shape[0], params["w3"].shape[1]
    if stride != 1 or Cin != Cout:
        ws = params["ws"].T[:, :, None, None]
        short = bn(conv(x, ws, stride, 0), params["gs"], params["bs"])
    else:
        short = x
    return jax.nn.relu(out + short)


# ------------------------------- params / main ----------------------------------


def make_params(key, in_planes, planes, stride, expansion=4):
    cout = expansion * planes
    ks = jax.random.split(key, 12)

    def nrm(k, shape, scale=0.2):
        return scale * jax.random.normal(k, shape, jnp.float32)

    return {
        "w1": nrm(ks[0], (in_planes, planes)),
        "g1": 1.0 + nrm(ks[1], (1, planes), 0.1),
        "b1": nrm(ks[2], (1, planes), 0.1),
        "w2": nrm(ks[3], (3, 3, planes, planes)),       # (kh, kw, in, out)
        "g2": 1.0 + nrm(ks[4], (1, planes), 0.1),
        "b2": nrm(ks[5], (1, planes), 0.1),
        "w3": nrm(ks[6], (planes, cout)),
        "g3": 1.0 + nrm(ks[7], (1, cout), 0.1),
        "b3": nrm(ks[8], (1, cout), 0.1),
        "ws": nrm(ks[9], (in_planes, cout)),
        "gs": 1.0 + nrm(ks[10], (1, cout), 0.1),
        "bs": nrm(ks[11], (1, cout), 0.1),
    }


if __name__ == "__main__":
    key = jax.random.PRNGKey(0)
    kx, kp = jax.random.split(key)

    # --- config 1: stride-2 block with projection shortcut -------------------
    in_planes, planes, stride = 4, 4, 2
    N, H, W = 2, 16, 16
    x = jax.random.normal(kx, (N, in_planes, H, W), jnp.float32)
    params = make_params(kp, in_planes, planes, stride)
    ref = _ref_forward(x, params, stride)

    out_f32 = jax.block_until_ready(
        bottleneck_forward(x, params, stride, compute_dtype=jnp.float32))
    assert out_f32.shape == ref.shape == (N, 4 * planes, H // stride, W // stride)
    assert jnp.allclose(out_f32, ref, atol=1e-3, rtol=1e-3), "mismatch (s=2, f32)"

    out_bf16 = jax.block_until_ready(
        bottleneck_forward(x, params, stride, compute_dtype=jnp.bfloat16))
    assert jnp.allclose(out_bf16, ref, atol=5e-2, rtol=5e-2), "mismatch (s=2, bf16)"

    # --- config 2: stride-1 block with identity shortcut ---------------------
    in_planes2, planes2, stride2 = 16, 4, 1
    N2, H2, W2 = 2, 8, 8
    kx2, kp2 = jax.random.split(kp)
    x2 = jax.random.normal(kx2, (N2, in_planes2, H2, W2), jnp.float32)
    params2 = make_params(kp2, in_planes2, planes2, stride2)
    ref2 = _ref_forward(x2, params2, stride2)

    out2_f32 = jax.block_until_ready(
        bottleneck_forward(x2, params2, stride2, compute_dtype=jnp.float32))
    assert out2_f32.shape == ref2.shape == (N2, 4 * planes2, H2, W2)
    assert jnp.allclose(out2_f32, ref2, atol=1e-3, rtol=1e-3), "mismatch (s=1, f32)"

    out2_bf16 = jax.block_until_ready(
        bottleneck_forward(x2, params2, stride2, compute_dtype=jnp.bfloat16))
    assert jnp.allclose(out2_bf16, ref2, atol=5e-2, rtol=5e-2), "mismatch (s=1, bf16)"

    print("KERNEL_OK")
</pallas_src>

<mosaic_0001>
module attributes {stable_mosaic.version = 11 : i64} {
  func.func @_bottleneck_kernel(%arg0: i32, %arg1: memref<8x8x8x128xf32, #tpu.memory_space<vmem>>, %arg2: memref<128x128xf32, #tpu.memory_space<vmem>>, %arg3: memref<1x128xf32, #tpu.memory_space<vmem>>, %arg4: memref<1x128xf32, #tpu.memory_space<vmem>>, %arg5: memref<1152x128xf32, #tpu.memory_space<vmem>>, %arg6: memref<1x128xf32, #tpu.memory_space<vmem>>, %arg7: memref<1x128xf32, #tpu.memory_space<vmem>>, %arg8: memref<128x128xf32, #tpu.memory_space<vmem>>, %arg9: memref<1x128xf32, #tpu.memory_space<vmem>>, %arg10: memref<1x128xf32, #tpu.memory_space<vmem>>, %arg11: memref<128x128xf32, #tpu.memory_space<vmem>>, %arg12: memref<1x128xf32, #tpu.memory_space<vmem>>, %arg13: memref<1x128xf32, #tpu.memory_space<vmem>>, %arg14: memref<128x128xf32, #tpu.memory_space<vmem>>, %arg15: memref<8x10x10x128xf32, #tpu.memory_space<vmem>>) attributes {dimension_semantics = [#tpu.dimension_semantics<arbitrary>], iteration_bounds = array<i64: 1>, scalar_prefetch = 0 : i64, scratch_operands = 1 : i64, tpu.core_type = #tpu.core_type<tc>, window_params = [{pipeline_mode = #tpu.pipeline_mode<synchronous>, transform_indices = @transform_0, window_bounds = array<i64: 8, 8, 8, 128>}, {pipeline_mode = #tpu.pipeline_mode<synchronous>, transform_indices = @transform_1, window_bounds = array<i64: 128, 128>}, {pipeline_mode = #tpu.pipeline_mode<synchronous>, transform_indices = @transform_2, window_bounds = array<i64: 1, 128>}, {pipeline_mode = #tpu.pipeline_mode<synchronous>, transform_indices = @transform_3, window_bounds = array<i64: 1, 128>}, {pipeline_mode = #tpu.pipeline_mode<synchronous>, transform_indices = @transform_4, window_bounds = array<i64: 1152, 128>}, {pipeline_mode = #tpu.pipeline_mode<synchronous>, transform_indices = @transform_5, window_bounds = array<i64: 1, 128>}, {pipeline_mode = #tpu.pipeline_mode<synchronous>, transform_indices = @transform_6, window_bounds = array<i64: 1, 128>}, {pipeline_mode = #tpu.pipeline_mode<synchronous>, transform_indices = @transform_7, window_bounds = array<i64: 128, 128>}, {pipeline_mode = #tpu.pipeline_mode<synchronous>, transform_indices = @transform_8, window_bounds = array<i64: 1, 128>}, {pipeline_mode = #tpu.pipeline_mode<synchronous>, transform_indices = @transform_9, window_bounds = array<i64: 1, 128>}, {pipeline_mode = #tpu.pipeline_mode<synchronous>, transform_indices = @transform_10, window_bounds = array<i64: 128, 128>}, {pipeline_mode = #tpu.pipeline_mode<synchronous>, transform_indices = @transform_11, window_bounds = array<i64: 1, 128>}, {pipeline_mode = #tpu.pipeline_mode<synchronous>, transform_indices = @transform_12, window_bounds = array<i64: 1, 128>}, {pipeline_mode = #tpu.pipeline_mode<synchronous>, transform_indices = @transform_13, window_bounds = array<i64: 128, 128>}]} {
    %c0 = arith.constant 0 : index
    %c0_0 = arith.constant 0 : index
    %c0_1 = arith.constant 0 : index
    %c0_2 = arith.constant 0 : index
    %0 = vector.load %arg1[%c0, %c0_0, %c0_1, %c0_2] : memref<8x8x8x128xf32, #tpu.memory_space<vmem>>, vector<8x8x8x128xf32>
    %1 = vector.shape_cast %0 : vector<8x8x8x128xf32> to vector<512x128xf32>
    %c0_3 = arith.constant 0 : index
    %c0_4 = arith.constant 0 : index
    %2 = vector.load %arg2[%c0_3, %c0_4] : memref<128x128xf32, #tpu.memory_space<vmem>>, vector<128x128xf32>
    %cst = arith.constant dense<0.000000e+00> : vector<512x128xf32>
    %3 = tpu.matmul %1, %2, %cst {dimension_numbers = #tpu.dot_dimension_numbers<[1], [0], [0], [1], [0, 0, 1, 1], [], []>} : vector<512x128xf32>, vector<128x128xf32>, vector<512x128xf32> -> vector<512x128xf32>
    %c0_5 = arith.constant 0 : index
    %c0_6 = arith.constant 0 : index
    %4 = vector.load %arg3[%c0_5, %c0_6] : memref<1x128xf32, #tpu.memory_space<vmem>>, vector<1x128xf32>
    %c0_7 = arith.constant 0 : index
    %c0_8 = arith.constant 0 : index
    %5 = vector.load %arg4[%c0_7, %c0_8] : memref<1x128xf32, #tpu.memory_space<vmem>>, vector<1x128xf32>
    %cst_9 = arith.constant dense<0.000000e+00> : vector<128xf32>
    %6 = vector.multi_reduction <add>, %3, %cst_9 [0] : vector<512x128xf32> to vector<128xf32>
    %7 = vector.shape_cast %6 : vector<128xf32> to vector<1x128xf32>
    %cst_10 = arith.constant 5.120000e+02 : f32
    %8 = vector.broadcast %cst_10 : f32 to vector<1x128xf32>
    %9 = arith.divf %7, %8 : vector<1x128xf32>
    %10 = arith.mulf %3, %3 : vector<512x128xf32>
    %cst_11 = arith.constant dense<0.000000e+00> : vector<128xf32>
    %11 = vector.multi_reduction <add>, %10, %cst_11 [0] : vector<512x128xf32> to vector<128xf32>
    %12 = vector.shape_cast %11 : vector<128xf32> to vector<1x128xf32>
    %cst_12 = arith.constant 5.120000e+02 : f32
    %13 = vector.broadcast %cst_12 : f32 to vector<1x128xf32>
    %14 = arith.divf %12, %13 : vector<1x128xf32>
    %15 = arith.mulf %9, %9 : vector<1x128xf32>
    %16 = arith.subf %14, %15 : vector<1x128xf32>
    %17 = vector.broadcast %9 : vector<1x128xf32> to vector<512x128xf32>
    %18 = arith.subf %3, %17 : vector<512x128xf32>
    %cst_13 = arith.constant 9.99999974E-6 : f32
    %19 = vector.broadcast %cst_13 : f32 to vector<1x128xf32>
    %20 = arith.addf %16, %19 : vector<1x128xf32>
    %21 = math.rsqrt %20 : vector<1x128xf32>
    %22 = vector.broadcast %21 : vector<1x128xf32> to vector<512x128xf32>
    %23 = arith.mulf %18, %22 : vector<512x128xf32>
    %24 = vector.broadcast %4 : vector<1x128xf32> to vector<512x128xf32>
    %25 = arith.mulf %23, %24 : vector<512x128xf32>
    %26 = vector.broadcast %5 : vector<1x128xf32> to vector<512x128xf32>
    %27 = arith.addf %25, %26 : vector<512x128xf32>
    %cst_14 = arith.constant 0.000000e+00 : f32
    %28 = vector.broadcast %cst_14 : f32 to vector<512x128xf32>
    %29 = arith.maximumf %27, %28 : vector<512x128xf32>
    %cst_15 = arith.constant 0.000000e+00 : f32
    %30 = vector.broadcast %cst_15 : f32 to vector<8x1x10x128xf32>
    %cst_16 = arith.constant 0.000000e+00 : f32
    %31 = vector.broadcast %cst_16 : f32 to vector<8x10x1x128xf32>
    %c0_17 = arith.constant 0 : index
    %c0_18 = arith.constant 0 : index
    %c0_19 = arith.constant 0 : index
    %c0_20 = arith.constant 0 : index
    %32 = vector.load %arg15[%c0_17, %c0_18, %c0_19, %c0_20] : memref<8x10x10x128xf32, #tpu.memory_space<vmem>>, vector<8x1x10x128xf32>
    tpu.vector_store %arg15[%c0_17, %c0_18, %c0_19, %c0_20], %30 {strides = array<i32>} : memref<8x10x10x128xf32, #tpu.memory_space<vmem>>, vector<8x1x10x128xf32>,
    %c0_21 = arith.constant 0 : index
    %c9 = arith.constant 9 : index
    %c0_22 = arith.constant 0 : index
    %c0_23 = arith.constant 0 : index
    %33 = vector.load %arg15[%c0_21, %c9, %c0_22, %c0_23] : memref<8x10x10x128xf32, #tpu.memory_space<vmem>>, vector<8x1x10x128xf32>
    tpu.vector_store %arg15[%c0_21, %c9, %c0_22, %c0_23], %30 {strides = array<i32>} : memref<8x10x10x128xf32, #tpu.memory_space<vmem>>, vector<8x1x10x128xf32>,
    %c0_24 = arith.constant 0 : index
    %c0_25 = arith.constant 0 : index
    %c0_26 = arith.constant 0 : index
    %c0_27 = arith.constant 0 : index
    %34 = vector.load %arg15[%c0_24, %c0_25, %c0_26, %c0_27] : memref<8x10x10x128xf32, #tpu.memory_space<vmem>>, vector<8x10x1x128xf32>
    tpu.vector_store %arg15[%c0_24, %c0_25, %c0_26, %c0_27], %31 {strides = array<i32>} : memref<8x10x10x128xf32, #tpu.memory_space<vmem>>, vector<8x10x1x128xf32>,
    %c0_28 = arith.constant 0 : index
    %c0_29 = arith.constant 0 : index
    %c9_30 = arith.constant 9 : index
    %c0_31 = arith.constant 0 : index
    %35 = vector.load %arg15[%c0_28, %c0_29, %c9_30, %c0_31] : memref<8x10x10x128xf32, #tpu.memory_space<vmem>>, vector<8x10x1x128xf32>
    tpu.vector_store %arg15[%c0_28, %c0_29, %c9_30, %c0_31], %31 {strides = array<i32>} : memref<8x10x10x128xf32, #tpu.memory_space<vmem>>, vector<8x10x1x128xf32>,
    %36 = vector.shape_cast %29 : vector<512x128xf32> to vector<8x8x8x128xf32>
    %c0_32 = arith.constant 0 : index
    %c1 = arith.constant 1 : index
    %c1_33 = arith.constant 1 : index
    %c0_34 = arith.constant 0 : index
    %37 = vector.load %arg15[%c0_32, %c1, %c1_33, %c0_34] : memref<8x10x10x128xf32, #tpu.memory_space<vmem>>, vector<8x8x8x128xf32>
    tpu.vector_store %arg15[%c0_32, %c1, %c1_33, %c0_34], %36 {strides = array<i32>} : memref<8x10x10x128xf32, #tpu.memory_space<vmem>>, vector<8x8x8x128xf32>,
    %cst_35 = arith.constant 0.000000e+00 : f32
    %38 = vector.broadcast %cst_35 : f32 to vector<128x128xf32>
    %c6 = arith.constant 6 : index
    %c0_36 = arith.constant 0 : index
    %c0_37 = arith.constant 0 : index
    %c0_38 = arith.constant 0 : index
    %39 = vector.load %arg15[%c6, %c0_36, %c0_37, %c0_38] : memref<8x10x10x128xf32, #tpu.memory_space<vmem>>, vector<2x8x8x128xf32>
    %40 = vector.shape_cast %39 : vector<2x8x8x128xf32> to vector<128x128xf32>
    %c0_39 = arith.constant 0 : index
    %c0_40 = arith.constant 0 : index
    %41 = vector.load %arg5[%c0_39, %c0_40] : memref<1152x128xf32, #tpu.memory_space<vmem>>, vector<128x128xf32>
    %cst_41 = arith.constant dense<0.000000e+00> : vector<128x128xf32>
    %42 = tpu.matmul %40, %41, %cst_41 {dimension_numbers = #tpu.dot_dimension_numbers<[1], [0], [0], [1], [0, 0, 1, 1], [], []>} : vector<128x128xf32>, vector<128x128xf32>, vector<128x128xf32> -> vector<128x128xf32>
    %43 = arith.addf %38, %42 : vector<128x128xf32>
    %c4 = arith.constant 4 : index
    %c0_42 = arith.constant 0 : index
    %c1_43 = arith.constant 1 : index
    %c0_44 = arith.constant 0 : index
    %44 = vector.load %arg15[%c4, %c0_42, %c1_43, %c0_44] : memref<8x10x10x128xf32, #tpu.memory_space<vmem>>, vector<2x8x8x128xf32>
    %45 = vector.shape_cast %44 : vector<2x8x8x128xf32> to vector<128x128xf32>
    %c128 = arith.constant 128 : index
    %c0_45 = arith.constant 0 : index
    %46 = vector.load %arg5[%c128, %c0_45] : memref<1152x128xf32, #tpu.memory_space<vmem>>, vector<128x128xf32>
    %cst_46 = arith.constant dense<0.000000e+00> : vector<128x128xf32>
    %47 = tpu.matmul %45, %46, %cst_46 {dimension_numbers = #tpu.dot_dimension_numbers<[1], [0], [0], [1], [0, 0, 1, 1], [], []>} : vector<128x128xf32>, vector<128x128xf32>, vector<128x128xf32> -> vector<128x128xf32>
    %48 = arith.addf %43, %47 : vector<128x128xf32>
    %c6_47 = arith.constant 6 : index
    %c0_48 = arith.constant 0 : index
    %c1_49 = arith.constant 1 : index
    %c0_50 = arith.constant 0 : index
    %49 = vector.load %arg15[%c6_47, %c0_48, %c1_49, %c0_50] : memref<8x10x10x128xf32, #tpu.memory_space<vmem>>, vector<2x8x8x128xf32>
    %50 = vector.shape_cast %49 : vector<2x8x8x128xf32> to vector<128x128xf32>
    %c256 = arith.constant 256 : index
    %c0_51 = arith.constant 0 : index
    %51 = vector.load %arg5[%c256, %c0_51] : memref<1152x128xf32, #tpu.memory_space<vmem>>, vector<128x128xf32>
    %cst_52 = arith.constant dense<0.000000e+00> : vector<128x128xf32>
    %52 = tpu.matmul %50, %51, %cst_52 {dimension_numbers = #tpu.dot_dimension_numbers<[1], [0], [0], [1], [0, 0, 1, 1], [], []>} : vector<128x128xf32>, vector<128x128xf32>, vector<128x128xf32> -> vector<128x128xf32>
    %53 = arith.addf %48, %52 : vector<128x128xf32>
    %c2 = arith.constant 2 : index
    %c1_53 = arith.constant 1 : index
    %c0_54 = arith.constant 0 : index
    %c0_55 = arith.constant 0 : index
    %54 = vector.load %arg15[%c2, %c1_53, %c0_54, %c0_55] : memref<8x10x10x128xf32, #tpu.memory_space<vmem>>, vector<2x8x8x128xf32>
    %55 = vector.shape_cast %54 : vector<2x8x8x128xf32> to vector<128x128xf32>
    %c384 = arith.constant 384 : index
    %c0_56 = arith.constant 0 : index
    %56 = vector.load %arg5[%c384, %c0_56] : memref<1152x128xf32, #tpu.memory_space<vmem>>, vector<128x128xf32>
    %cst_57 = arith.constant dense<0.000000e+00> : vector<128x128xf32>
    %57 = tpu.matmul %55, %56, %cst_57 {dimension_numbers = #tpu.dot_dimension_numbers<[1], [0], [0], [1], [0, 0, 1, 1], [], []>} : vector<128x128xf32>, vector<128x128xf32>, vector<128x128xf32> -> vector<128x128xf32>
    %58 = arith.addf %53, %57 : vector<128x128xf32>
    %c0_58 = arith.constant 0 : index
    %c1_59 = arith.constant 1 : index
    %c1_60 = arith.constant 1 : index
    %c0_61 = arith.constant 0 : index
    %59 = vector.load %arg15[%c0_58, %c1_59, %c1_60, %c0_61] : memref<8x10x10x128xf32, #tpu.memory_space<vmem>>, vector<2x8x8x128xf32>
    %60 = vector.shape_cast %59 : vector<2x8x8x128xf32> to vector<128x128xf32>
    %c512 = arith.constant 512 : index
    %c0_62 = arith.constant 0 : index
    %61 = vector.load %arg5[%c512, %c0_62] : memref<1152x128xf32, #tpu.memory_space<vmem>>, vector<128x128xf32>
    %cst_63 = arith.constant dense<0.000000e+00> : vector<128x128xf32>
    %62 = tpu.matmul %60, %61, %cst_63 {dimension_numbers = #tpu.dot_dimension_numbers<[1], [0], [0], [1], [0, 0, 1, 1], [], []>} : vector<128x128xf32>, vector<128x128xf32>, vector<128x128xf32> -> vector<128x128xf32>
    %63 = arith.addf %58, %62 : vector<128x128xf32>
    %c2_64 = arith.constant 2 : index
    %c1_65 = arith.constant 1 : index
    %c1_66 = arith.constant 1 : index
    %c0_67 = arith.constant 0 : index
    %64 = vector.load %arg15[%c2_64, %c1_65, %c1_66, %c0_67] : memref<8x10x10x128xf32, #tpu.memory_space<vmem>>, vector<2x8x8x128xf32>
    %65 = vector.shape_cast %64 : vector<2x8x8x128xf32> to vector<128x128xf32>
    %c640 = arith.constant 640 : index
    %c0_68 = arith.constant 0 : index
    %66 = vector.load %arg5[%c640, %c0_68] : memref<1152x128xf32, #tpu.memory_space<vmem>>, vector<128x128xf32>
    %cst_69 = arith.constant dense<0.000000e+00> : vector<128x128xf32>
    %67 = tpu.matmul %65, %66, %cst_69 {dimension_numbers = #tpu.dot_dimension_numbers<[1], [0], [0], [1], [0, 0, 1, 1], [], []>} : vector<128x128xf32>, vector<128x128xf32>, vector<128x128xf32> -> vector<128x128xf32>
    %68 = arith.addf %63, %67 : vector<128x128xf32>
    %c6_70 = arith.constant 6 : index
    %c1_71 = arith.constant 1 : index
    %c0_72 = arith.constant 0 : index
    %c0_73 = arith.constant 0 : index
    %69 = vector.load %arg15[%c6_70, %c1_71, %c0_72, %c0_73] : memref<8x10x10x128xf32, #tpu.memory_space<vmem>>, vector<2x8x8x128xf32>
    %70 = vector.shape_cast %69 : vector<2x8x8x128xf32> to vector<128x128xf32>
    %c768 = arith.constant 768 : index
    %c0_74 = arith.constant 0 : index
    %71 = vector.load %arg5[%c768, %c0_74] : memref<1152x128xf32, #tpu.memory_space<vmem>>, vector<128x128xf32>
    %cst_75 = arith.constant dense<0.000000e+00> : vector<128x128xf32>
    %72 = tpu.matmul %70, %71, %cst_75 {dimension_numbers = #tpu.dot_dimension_numbers<[1], [0], [0], [1], [0, 0, 1, 1], [], []>} : vector<128x128xf32>, vector<128x128xf32>, vector<128x128xf32> -> vector<128x128xf32>
    %73 = arith.addf %68, %72 : vector<128x128xf32>
    %c4_76 = arith.constant 4 : index
    %c1_77 = arith.constant 1 : index
    %c1_78 = arith.constant 1 : index
    %c0_79 = arith.constant 0 : index
    %74 = vector.load %arg15[%c4_76, %c1_77, %c1_78, %c0_79] : memref<8x10x10x128xf32, #tpu.memory_space<vmem>>, vector<2x8x8x128xf32>
    %75 = vector.shape_cast %74 : vector<2x8x8x128xf32> to vector<128x128xf32>
    %c896 = arith.constant 896 : index
    %c0_80 = arith.constant 0 : index
    %76 = vector.load %arg5[%c896, %c0_80] : memref<1152x128xf32, #tpu.memory_space<vmem>>, vector<128x128xf32>
    %cst_81 = arith.constant dense<0.000000e+00> : vector<128x128xf32>
    %77 = tpu.matmul %75, %76, %cst_81 {dimension_numbers = #tpu.dot_dimension_numbers<[1], [0], [0], [1], [0, 0, 1, 1], [], []>} : vector<128x128xf32>, vector<128x128xf32>, vector<128x128xf32> -> vector<128x128xf32>
    %78 = arith.addf %73, %77 : vector<128x128xf32>
    %c6_82 = arith.constant 6 : index
    %c1_83 = arith.constant 1 : index
    %c1_84 = arith.constant 1 : index
    %c0_85 = arith.constant 0 : index
    %79 = vector.load %arg15[%c6_82, %c1_83, %c1_84, %c0_85] : memref<8x10x10x128xf32, #tpu.memory_space<vmem>>, vector<2x8x8x128xf32>
    %80 = vector.shape_cast %79 : vector<2x8x8x128xf32> to vector<128x128xf32>
    %c1024 = arith.constant 1024 : index
    %c0_86 = arith.constant 0 : index
    %81 = vector.load %arg5[%c1024, %c0_86] : memref<1152x128xf32, #tpu.memory_space<vmem>>, vector<128x128xf32>
    %cst_87 = arith.constant dense<0.000000e+00> : vector<128x128xf32>
    %82 = tpu.matmul %80, %81, %cst_87 {dimension_numbers = #tpu.dot_dimension_numbers<[1], [0], [0], [1], [0, 0, 1, 1], [], []>} : vector<128x128xf32>, vector<128x128xf32>, vector<128x128xf32> -> vector<128x128xf32>
    %83 = arith.addf %78, %82 : vector<128x128xf32>
    %c0_88 = arith.constant 0 : index
    %c0_89 = arith.constant 0 : index
    %84 = vector.load %arg6[%c0_88, %c0_89] : memref<1x128xf32, #tpu.memory_space<vmem>>, vector<1x128xf32>
    %c0_90 = arith.constant 0 : index
    %c0_91 = arith.constant 0 : index
    %85 = vector.load %arg7[%c0_90, %c0_91] : memref<1x128xf32, #tpu.memory_space<vmem>>, vector<1x128xf32>
    %cst_92 = arith.constant dense<0.000000e+00> : vector<128xf32>
    %86 = vector.multi_reduction <add>, %83, %cst_92 [0] : vector<128x128xf32> to vector<128xf32>
    %87 = vector.shape_cast %86 : vector<128xf32> to vector<1x128xf32>
    %cst_93 = arith.constant 1.280000e+02 : f32
    %88 = vector.broadcast %cst_93 : f32 to vector<1x128xf32>
    %89 = arith.divf %87, %88 : vector<1x128xf32>
    %90 = arith.mulf %83, %83 : vector<128x128xf32>
    %cst_94 = arith.constant dense<0.000000e+00> : vector<128xf32>
    %91 = vector.multi_reduction <add>, %90, %cst_94 [0] : vector<128x128xf32> to vector<128xf32>
    %92 = vector.shape_cast %91 : vector<128xf32> to vector<1x128xf32>
    %cst_95 = arith.constant 1.280000e+02 : f32
    %93 = vector.broadcast %cst_95 : f32 to vector<1x128xf32>
    %94 = arith.divf %92, %93 : vector<1x128xf32>
    %95 = arith.mulf %89, %89 : vector<1x128xf32>
    %96 = arith.subf %94, %95 : vector<1x128xf32>
    %97 = vector.broadcast %89 : vector<1x128xf32> to vector<128x128xf32>
    %98 = arith.subf %83, %97 : vector<128x128xf32>
    %cst_96 = arith.constant 9.99999974E-6 : f32
    %99 = vector.broadcast %cst_96 : f32 to vector<1x128xf32>
    %100 = arith.addf %96, %99 : vector<1x128xf32>
    %101 = math.rsqrt %100 : vector<1x128xf32>
    %102 = vector.broadcast %101 : vector<1x128xf32> to vector<128x128xf32>
    %103 = arith.mulf %98, %102 : vector<128x128xf32>
    %104 = vector.broadcast %84 : vector<1x128xf32> to vector<128x128xf32>
    %105 = arith.mulf %103, %104 : vector<128x128xf32>
    %106 = vector.broadcast %85 : vector<1x128xf32> to vector<128x128xf32>
    %107 = arith.addf %105, %106 : vector<128x128xf32>
    %cst_97 = arith.constant 0.000000e+00 : f32
    %108 = vector.broadcast %cst_97 : f32 to vector<128x128xf32>
    %109 = arith.maximumf %107, %108 : vector<128x128xf32>
    %c0_98 = arith.constant 0 : index
    %c0_99 = arith.constant 0 : index
    %c0_100 = arith.constant 0 : index
    %c0_101 = arith.constant 0 : index
    %110 = vector.load %arg1[%c0_98, %c0_99, %c0_100, %c0_101] : memref<8x8x8x128xf32, #tpu.memory_space<vmem>>, vector<2x8x8x128xf32>
    %111 = vector.shape_cast %110 : vector<2x8x8x128xf32> to vector<128x128xf32>
    %c0_102 = arith.constant 0 : index
    %c0_103 = arith.constant 0 : index
    %112 = vector.load %arg11[%c0_102, %c0_103] : memref<128x128xf32, #tpu.memory_space<vmem>>, vector<128x128xf32>
    %cst_104 = arith.constant dense<0.000000e+00> : vector<128x128xf32>
    %113 = tpu.matmul %111, %112, %cst_104 {dimension_numbers = #tpu.dot_dimension_numbers<[1], [0], [0], [1], [0, 0, 1, 1], [], []>} : vector<128x128xf32>, vector<128x128xf32>, vector<128x128xf32> -> vector<128x128xf32>
    %c0_105 = arith.constant 0 : index
    %c0_106 = arith.constant 0 : index
    %114 = vector.load %arg12[%c0_105, %c0_106] : memref<1x128xf32, #tpu.memory_space<vmem>>, vector<1x128xf32>
    %c0_107 = arith.constant 0 : index
    %c0_108 = arith.constant 0 : index
    %115 = vector.load %arg13[%c0_107, %c0_108] : memref<1x128xf32, #tpu.memory_space<vmem>>, vector<1x128xf32>
    %cst_109 = arith.constant dense<0.000000e+00> : vector<128xf32>
    %116 = vector.multi_reduction <add>, %113, %cst_109 [0] : vector<128x128xf32> to vector<128xf32>
    %117 = vector.shape_cast %116 : vector<128xf32> to vector<1x128xf32>
    %cst_110 = arith.constant 1.280000e+02 : f32
    %118 = vector.broadcast %cst_110 : f32 to vector<1x128xf32>
    %119 = arith.divf %117, %118 : vector<1x128xf32>
    %120 = arith.mulf %113, %113 : vector<128x128xf32>
    %cst_111 = arith.constant dense<0.000000e+00> : vector<128xf32>
    %121 = vector.multi_reduction <add>, %120, %cst_111 [0] : vector<128x128xf32> to vector<128xf32>
    %122 = vector.shape_cast %121 : vector<128xf32> to vector<1x128xf32>
    %cst_112 = arith.constant 1.280000e+02 : f32
    %123 = vector.broadcast %cst_112 : f32 to vector<1x128xf32>
    %124 = arith.divf %122, %123 : vector<1x128xf32>
    %125 = arith.mulf %119, %119 : vector<1x128xf32>
    %126 = arith.subf %124, %125 : vector<1x128xf32>
    %127 = vector.broadcast %119 : vector<1x128xf32> to vector<128x128xf32>
    %128 = arith.subf %113, %127 : vector<128x128xf32>
    %cst_113 = arith.constant 9.99999974E-6 : f32
    %129 = vector.broadcast %cst_113 : f32 to vector<1x128xf32>
    %130 = arith.addf %126, %129 : vector<1x128xf32>
    %131 = math.rsqrt %130 : vector<1x128xf32>
    %132 = vector.broadcast %131 : vector<1x128xf32> to vector<128x128xf32>
    %133 = arith.mulf %128, %132 : vector<128x128xf32>
    %134 = vector.broadcast %114 : vector<1x128xf32> to vector<128x128xf32>
    %135 = arith.mulf %133, %134 : vector<128x128xf32>
    %136 = vector.broadcast %115 : vector<1x128xf32> to vector<128x128xf32>
    %137 = arith.addf %135, %136 : vector<128x128xf32>
    %c0_114 = arith.constant 0 : index
    %c0_115 = arith.constant 0 : index
    %138 = vector.load %arg8[%c0_114, %c0_115] : memref<128x128xf32, #tpu.memory_space<vmem>>, vector<128x128xf32>
    %cst_116 = arith.constant dense<0.000000e+00> : vector<128x128xf32>
    %139 = tpu.matmul %109, %138, %cst_116 {dimension_numbers = #tpu.dot_dimension_numbers<[1], [0], [0], [1], [0, 0, 1, 1], [], []>} : vector<128x128xf32>, vector<128x128xf32>, vector<128x128xf32> -> vector<128x128xf32>
    %c0_117 = arith.constant 0 : index
    %c0_118 = arith.constant 0 : index
    %140 = vector.load %arg9[%c0_117, %c0_118] : memref<1x128xf32, #tpu.memory_space<vmem>>, vector<1x128xf32>
    %c0_119 = arith.constant 0 : index
    %c0_120 = arith.constant 0 : index
    %141 = vector.load %arg10[%c0_119, %c0_120] : memref<1x128xf32, #tpu.memory_space<vmem>>, vector<1x128xf32>
    %cst_121 = arith.constant dense<0.000000e+00> : vector<128xf32>
    %142 = vector.multi_reduction <add>, %139, %cst_121 [0] : vector<128x128xf32> to vector<128xf32>
    %143 = vector.shape_cast %142 : vector<128xf32> to vector<1x128xf32>
    %cst_122 = arith.constant 1.280000e+02 : f32
    %144 = vector.broadcast %cst_122 : f32 to vector<1x128xf32>
    %145 = arith.divf %143, %144 : vector<1x128xf32>
    %146 = arith.mulf %139, %139 : vector<128x128xf32>
    %cst_123 = arith.constant dense<0.000000e+00> : vector<128xf32>
    %147 = vector.multi_reduction <add>, %146, %cst_123 [0] : vector<128x128xf32> to vector<128xf32>
    %148 = vector.shape_cast %147 : vector<128xf32> to vector<1x128xf32>
    %cst_124 = arith.constant 1.280000e+02 : f32
    %149 = vector.broadcast %cst_124 : f32 to vector<1x128xf32>
    %150 = arith.divf %148, %149 : vector<1x128xf32>
    %151 = arith.mulf %145, %145 : vector<1x128xf32>
    %152 = arith.subf %150, %151 : vector<1x128xf32>
    %153 = vector.broadcast %145 : vector<1x128xf32> to vector<128x128xf32>
    %154 = arith.subf %139, %153 : vector<128x128xf32>
    %cst_125 = arith.constant 9.99999974E-6 : f32
    %155 = vector.broadcast %cst_125 : f32 to vector<1x128xf32>
    %156 = arith.addf %152, %155 : vector<1x128xf32>
    %157 = math.rsqrt %156 : vector<1x128xf32>
    %158 = vector.broadcast %157 : vector<1x128xf32> to vector<128x128xf32>
    %159 = arith.mulf %154, %158 : vector<128x128xf32>
    %160 = vector.broadcast %140 : vector<1x128xf32> to vector<128x128xf32>
    %161 = arith.mulf %159, %160 : vector<128x128xf32>
    %162 = vector.broadcast %141 : vector<1x128xf32> to vector<128x128xf32>
    %163 = arith.addf %161, %162 : vector<128x128xf32>
    %164 = arith.addf %163, %137 : vector<128x128xf32>
    %cst_126 = arith.constant 0.000000e+00 : f32
    %165 = vector.broadcast %cst_126 : f32 to vector<128x128xf32>
    %166 = arith.maximumf %164, %165 : vector<128x128xf32>
    %c0_127 = arith.constant 0 : index
    %c0_128 = arith.constant 0 : index
    %167 = vector.load %arg14[%c0_127, %c0_128] : memref<128x128xf32, #tpu.memory_space<vmem>>, vector<128x128xf32>
    tpu.vector_store %arg14[%c0_127, %c0_128], %166 {strides = array<i32>} : memref<128x128xf32, #tpu.memory_space<vmem>>, vector<128x128xf32>,
    return
  }
  func.func @transform_0(%arg0: i32) -> (i32, i32, i32, i32) {
    %c0_i32 = arith.constant 0 : i32
    %c0_i32_0 = arith.constant 0 : i32
    %c0_i32_1 = arith.constant 0 : i32
    %c0_i32_2 = arith.constant 0 : i32
    %c0_i32_3 = arith.constant 0 : i32
    return %c0_i32, %c0_i32_0, %c0_i32_1, %c0_i32_2 : i32, i32, i32, i32
  }
  func.func @transform_1(%arg0: i32) -> (i32, i32) {
    %c0_i32 = arith.constant 0 : i32
    %c0_i32_0 = arith.constant 0 : i32
    %c0_i32_1 = arith.constant 0 : i32
    return %c0_i32, %c0_i32_0 : i32, i32
  }
  func.func @transform_2(%arg0: i32) -> (i32, i32) {
    %c0_i32 = arith.constant 0 : i32
    %c0_i32_0 = arith.constant 0 : i32
    %c0_i32_1 = arith.constant 0 : i32
    return %c0_i32, %c0_i32_0 : i32, i32
  }
  func.func @transform_3(%arg0: i32) -> (i32, i32) {
    %c0_i32 = arith.constant 0 : i32
    %c0_i32_0 = arith.constant 0 : i32
    %c0_i32_1 = arith.constant 0 : i32
    return %c0_i32, %c0_i32_0 : i32, i32
  }
  func.func @transform_4(%arg0: i32) -> (i32, i32) {
    %c0_i32 = arith.constant 0 : i32
    %c0_i32_0 = arith.constant 0 : i32
    %c0_i32_1 = arith.constant 0 : i32
    return %c0_i32, %c0_i32_0 : i32, i32
  }
  func.func @transform_5(%arg0: i32) -> (i32, i32) {
    %c0_i32 = arith.constant 0 : i32
    %c0_i32_0 = arith.constant 0 : i32
    %c0_i32_1 = arith.constant 0 : i32
    return %c0_i32, %c0_i32_0 : i32, i32
  }
  func.func @transform_6(%arg0: i32) -> (i32, i32) {
    %c0_i32 = arith.constant 0 : i32
    %c0_i32_0 = arith.constant 0 : i32
    %c0_i32_1 = arith.constant 0 : i32
    return %c0_i32, %c0_i32_0 : i32, i32
  }
  func.func @transform_7(%arg0: i32) -> (i32, i32) {
    %c0_i32 = arith.constant 0 : i32
    %c0_i32_0 = arith.constant 0 : i32
    %c0_i32_1 = arith.constant 0 : i32
    return %c0_i32, %c0_i32_0 : i32, i32
  }
  func.func @transform_8(%arg0: i32) -> (i32, i32) {
    %c0_i32 = arith.constant 0 : i32
    %c0_i32_0 = arith.constant 0 : i32
    %c0_i32_1 = arith.constant 0 : i32
    return %c0_i32, %c0_i32_0 : i32, i32
  }
  func.func @transform_9(%arg0: i32) -> (i32, i32) {
    %c0_i32 = arith.constant 0 : i32
    %c0_i32_0 = arith.constant 0 : i32
    %c0_i32_1 = arith.constant 0 : i32
    return %c0_i32, %c0_i32_0 : i32, i32
  }
  func.func @transform_10(%arg0: i32) -> (i32, i32) {
    %c0_i32 = arith.constant 0 : i32
    %c0_i32_0 = arith.constant 0 : i32
    %c0_i32_1 = arith.constant 0 : i32
    return %c0_i32, %c0_i32_0 : i32, i32
  }
  func.func @transform_11(%arg0: i32) -> (i32, i32) {
    %c0_i32 = arith.constant 0 : i32
    %c0_i32_0 = arith.constant 0 : i32
    %c0_i32_1 = arith.constant 0 : i32
    return %c0_i32, %c0_i32_0 : i32, i32
  }
  func.func @transform_12(%arg0: i32) -> (i32, i32) {
    %c0_i32 = arith.constant 0 : i32
    %c0_i32_0 = arith.constant 0 : i32
    %c0_i32_1 = arith.constant 0 : i32
    return %c0_i32, %c0_i32_0 : i32, i32
  }
  func.func @transform_13(%arg0: i32) -> (i32, i32) {
    %c0_i32 = arith.constant 0 : i32
    %c0_i32_0 = arith.constant 0 : i32
    %c0_i32_1 = arith.constant 0 : i32
    return %c0_i32, %c0_i32_0 : i32, i32
  }
}

</mosaic_0001>

<llo_original>
// kernel: tpu_custom_call.1
$region0: #{tpu_custom_call.1}
  #allocation0 [shape = 'u32[]', space=smem, size = 0x4, offset = 0x4, fixed_abs, tag = 'smem constant byte address 0x4 - core index']
  #allocation1 [shape = 'u32[144,128]{1,0:T(1,128)}', space=vmem, size = 0x12000, scoped, tag = 'internal scratch']
  #allocation2 [shape = 'f32[8,10,10,128]{3,2,1,0:T(8,128)}', space=vmem, size = 0xa0000, scoped, tag = 'scratch operand']
  %s0 = inlined_call_operand.hbm [shape: f32[8,8,8,128], index: 0, kind: input, shape index: {}]
  %s1 = inlined_call_operand.hbm [shape: f32[128,128], index: 1, kind: input, shape index: {}]
  %s2 = inlined_call_operand.vmem [shape: f32[1,128], index: 2, kind: input, shape index: {}]
  %s3 = inlined_call_operand.vmem [shape: f32[1,128], index: 3, kind: input, shape index: {}]
  %s4 = inlined_call_operand.hbm [shape: f32[1152,128], index: 4, kind: input, shape index: {}]
  %s5 = inlined_call_operand.vmem [shape: f32[1,128], index: 5, kind: input, shape index: {}]
  %s6 = inlined_call_operand.vmem [shape: f32[1,128], index: 6, kind: input, shape index: {}]
  %s7 = inlined_call_operand.hbm [shape: f32[128,128], index: 7, kind: input, shape index: {}]
  %s8 = inlined_call_operand.vmem [shape: f32[1,128], index: 8, kind: input, shape index: {}]
  %s9 = inlined_call_operand.vmem [shape: f32[1,128], index: 9, kind: input, shape index: {}]
  %s10 = inlined_call_operand.hbm [shape: f32[128,128], index: 10, kind: input, shape index: {}]
  %s11 = inlined_call_operand.vmem [shape: f32[1,128], index: 11, kind: input, shape index: {}]
  %s12 = inlined_call_operand.vmem [shape: f32[1,128], index: 12, kind: input, shape index: {}]
  %s13 = inlined_call_operand.hbm [shape: f32[128,128], index: 13, kind: output, shape index: {}]
  %s14 = sld [smem:[#allocation0]]
  $region82: #{tpu_custom_call.1} parent=0
    _
  %s16 = ssub.s32 1, %s14
  %s17 = scalar_select 0, %s16, %s14
  $region1: #{tpu_custom_call.1} parent=0
    #allocation3 [shape = 'u8[262144]{0}', space=vmem, size = 0x40000, scoped, tag = 'input window, operand 0, single buffered']
    #allocation4 [shape = 's32[1]{0}', space=sflag, size = 0x4, scoped, tag = 'scoped memory for tpu_custom_call.1']
    #allocation5 [shape = 's32[1]{0}', space=sflag, size = 0x4, scoped, tag = 'scoped memory for tpu_custom_call.1']
    #allocation6 [shape = 'u8[65536]{0}', space=vmem, size = 0x10000, scoped, tag = 'input window, operand 1, single buffered']
    #allocation7 [shape = 's32[1]{0}', space=sflag, size = 0x4, scoped, tag = 'scoped memory for tpu_custom_call.1']
    #allocation8 [shape = 'u8[589824]{0}', space=vmem, size = 0x90000, scoped, tag = 'input window, operand 4, single buffered']
    #allocation9 [shape = 'u8[65536]{0}', space=vmem, size = 0x10000, scoped, tag = 'input window, operand 7, single buffered']
    #allocation10 [shape = 's32[1]{0}', space=sflag, size = 0x4, scoped, tag = 'scoped memory for tpu_custom_call.1']
    #allocation11 [shape = 'u8[65536]{0}', space=vmem, size = 0x10000, scoped, tag = 'input window, operand 10, single buffered']
    #allocation12 [shape = 'u8[65536]{0}', space=vmem, size = 0x10000, scoped, tag = 'output window, operand 0, single buffered']
    %18 = vsyncpa [#allocation4], 0
    %19 = vsyncpa [#allocation7], 0
    %20 = vsyncpa [#allocation10], 0
    %21 = vsyncpa [#allocation5], 0
    // Predicated region
    $region2: #{tpu_custom_call.1} parent=1 // pred_check
      _
    $region3: #{tpu_custom_call.1} parent=1 // pred_check_branch
      %23 = sbr.rel (0) target = $region5
    $region4: #{tpu_custom_call.1} parent=1 // pred_region
      %s25 = ssub.s32 8192, 8192
      %26 = vsyncadd [#allocation4], %s25
      %s27 = sshll.u32 [#allocation3], 4
      %s28 = int_to_ptr.vmem [resolvable:$true] %s27
      %33 = dma.hbm_to_vmem [thread:$0]  %s0, 8192, %s28, [#allocation4], 128, 128, 8
    $region5: #{tpu_custom_call.1} parent=1 // pred_fallthru
      _
    // Predicated region
    $region6: #{tpu_custom_call.1} parent=1 // pred_check
      _
    $region7: #{tpu_custom_call.1} parent=1 // pred_check_branch
      %35 = sbr.rel (0) target = $region9
    $region8: #{tpu_custom_call.1} parent=1 // pred_region
      %s37 = ssub.s32 2048, 2048
      %38 = vsyncadd [#allocation7], %s37
      %s39 = sshll.u32 [#allocation6], 4
      %s40 = int_to_ptr.vmem [resolvable:$true] %s39
      %45 = dma.hbm_to_vmem [thread:$0]  %s1, 2048, %s40, [#allocation7], 128, 128, 8
    $region9: #{tpu_custom_call.1} parent=1 // pred_fallthru
      _
    // Predicated region
    $region10: #{tpu_custom_call.1} parent=1 // pred_check
      _
    $region11: #{tpu_custom_call.1} parent=1 // pred_check_branch
      %47 = sbr.rel (0) target = $region13
    $region12: #{tpu_custom_call.1} parent=1 // pred_region
      _
    $region13: #{tpu_custom_call.1} parent=1 // pred_fallthru
      _
    // Predicated region
    $region14: #{tpu_custom_call.1} parent=1 // pred_check
      _
    $region15: #{tpu_custom_call.1} parent=1 // pred_check_branch
      %49 = sbr.rel (0) target = $region17
    $region16: #{tpu_custom_call.1} parent=1 // pred_region
      _
    $region17: #{tpu_custom_call.1} parent=1 // pred_fallthru
      _
    // Predicated region
    $region18: #{tpu_custom_call.1} parent=1 // pred_check
      _
    $region19: #{tpu_custom_call.1} parent=1 // pred_check_branch
      %51 = sbr.rel (0) target = $region21
    $region20: #{tpu_custom_call.1} parent=1 // pred_region
      %s53 = ssub.s32 18432, 18432
      %54 = vsyncadd [#allocation7], %s53
      %s55 = sshll.u32 [#allocation8], 4
      %s56 = int_to_ptr.vmem [resolvable:$true] %s55
      %61 = dma.hbm_to_vmem [thread:$0]  %s4, 18432, %s56, [#allocation7], 128, 128, 8
    $region21: #{tpu_custom_call.1} parent=1 // pred_fallthru
      _
    // Predicated region
    $region22: #{tpu_custom_call.1} parent=1 // pred_check
      _
    $region23: #{tpu_custom_call.1} parent=1 // pred_check_branch
      %63 = sbr.rel (0) target = $region25
    $region24: #{tpu_custom_call.1} parent=1 // pred_region
      _
    $region25: #{tpu_custom_call.1} parent=1 // pred_fallthru
      _
    // Predicated region
    $region26: #{tpu_custom_call.1} parent=1 // pred_check
      _
    $region27: #{tpu_custom_call.1} parent=1 // pred_check_branch
      %65 = sbr.rel (0) target = $region29
    $region28: #{tpu_custom_call.1} parent=1 // pred_region
      _
    $region29: #{tpu_custom_call.1} parent=1 // pred_fallthru
      _
    // Predicated region
    $region30: #{tpu_custom_call.1} parent=1 // pred_check
      _
    $region31: #{tpu_custom_call.1} parent=1 // pred_check_branch
      %67 = sbr.rel (0) target = $region33
    $region32: #{tpu_custom_call.1} parent=1 // pred_region
      %s69 = ssub.s32 2048, 2048
      %70 = vsyncadd [#allocation10], %s69
      %s71 = sshll.u32 [#allocation9], 4
      %s72 = int_to_ptr.vmem [resolvable:$true] %s71
      %77 = dma.hbm_to_vmem [thread:$0]  %s7, 2048, %s72, [#allocation10], 128, 128, 8
    $region33: #{tpu_custom_call.1} parent=1 // pred_fallthru
      _
    // Predicated region
    $region34: #{tpu_custom_call.1} parent=1 // pred_check
      _
    $region35: #{tpu_custom_call.1} parent=1 // pred_check_branch
      %79 = sbr.rel (0) target = $region37
    $region36: #{tpu_custom_call.1} parent=1 // pred_region
      _
    $region37: #{tpu_custom_call.1} parent=1 // pred_fallthru
      _
    // Predicated region
    $region38: #{tpu_custom_call.1} parent=1 // pred_check
      _
    $region39: #{tpu_custom_call.1} parent=1 // pred_check_branch
      %81 = sbr.rel (0) target = $region41
    $region40: #{tpu_custom_call.1} parent=1 // pred_region
      _
    $region41: #{tpu_custom_call.1} parent=1 // pred_fallthru
      _
    // Predicated region
    $region42: #{tpu_custom_call.1} parent=1 // pred_check
      _
    $region43: #{tpu_custom_call.1} parent=1 // pred_check_branch
      %83 = sbr.rel (0) target = $region45
    $region44: #{tpu_custom_call.1} parent=1 // pred_region
      %s85 = ssub.s32 2048, 2048
      %86 = vsyncadd [#allocation10], %s85
      %s87 = sshll.u32 [#allocation11], 4
      %s88 = int_to_ptr.vmem [resolvable:$true] %s87
      %93 = dma.hbm_to_vmem [thread:$0]  %s10, 2048, %s88, [#allocation10], 128, 128, 8
    $region45: #{tpu_custom_call.1} parent=1 // pred_fallthru
      _
    // Predicated region
    $region46: #{tpu_custom_call.1} parent=1 // pred_check
      _
    $region47: #{tpu_custom_call.1} parent=1 // pred_check_branch
      %95 = sbr.rel (0) target = $region49
    $region48: #{tpu_custom_call.1} parent=1 // pred_region
      _
    $region49: #{tpu_custom_call.1} parent=1 // pred_fallthru
      _
    // Predicated region
    $region50: #{tpu_custom_call.1} parent=1 // pred_check
      _
    $region51: #{tpu_custom_call.1} parent=1 // pred_check_branch
      %97 = sbr.rel (0) target = $region53
    $region52: #{tpu_custom_call.1} parent=1 // pred_region
      _
    $region53: #{tpu_custom_call.1} parent=1 // pred_fallthru
      _
    // Predicated region
    $region54: #{tpu_custom_call.1} parent=1 // pred_check
      _
    $region55: #{tpu_custom_call.1} parent=1 // pred_check_branch
      %99 = sbr.rel (0) target = $region57
    $region56: #{tpu_custom_call.1} parent=1 // pred_region
      %100 = dma.done [#allocation4], 8192
    $region57: #{tpu_custom_call.1} parent=1 // pred_fallthru
      _
    // Predicated region
    $region58: #{tpu_custom_call.1} parent=1 // pred_check
      _
    $region59: #{tpu_custom_call.1} parent=1 // pred_check_branch
      %102 = sbr.rel (0) target = $region61
    $region60: #{tpu_custom_call.1} parent=1 // pred_region
      %103 = dma.done [#allocation7], 2048
    $region61: #{tpu_custom_call.1} parent=1 // pred_fallthru
      _
    // Predicated region
    $region62: #{tpu_custom_call.1} parent=1 // pred_check
      _
    $region63: #{tpu_custom_call.1} parent=1 // pred_check_branch
      %105 = sbr.rel (0) target = $region65
    $region64: #{tpu_custom_call.1} parent=1 // pred_region
      %106 = dma.done [#allocation7], 18432
    $region65: #{tpu_custom_call.1} parent=1 // pred_fallthru
      _
    // Predicated region
    $region66: #{tpu_custom_call.1} parent=1 // pred_check
      _
    $region67: #{tpu_custom_call.1} parent=1 // pred_check_branch
      %108 = sbr.rel (0) target = $region69
    $region68: #{tpu_custom_call.1} parent=1 // pred_region
      %109 = dma.done [#allocation10], 2048
    $region69: #{tpu_custom_call.1} parent=1 // pred_fallthru
      _
    // Predicated region
    $region70: #{tpu_custom_call.1} parent=1 // pred_check
      _
    $region71: #{tpu_custom_call.1} parent=1 // pred_check_branch
      %111 = sbr.rel (0) target = $region73
    $region72: #{tpu_custom_call.1} parent=1 // pred_region
      %112 = dma.done [#allocation10], 2048
    $region73: #{tpu_custom_call.1} parent=1 // pred_fallthru
      _
    %v113 = vld [vmem:[#allocation3] sm:$0xff]
    %v114 = vld [vmem:[#allocation3 + $0x8] sm:$0xff]
    %v115 = vld [vmem:[#allocation3 + $0x10] sm:$0xff]
    %v116 = vld [vmem:[#allocation3 + $0x18] sm:$0xff]
    %v117 = vld [vmem:[#allocation3 + $0x20] sm:$0xff]
    %v118 = vld [vmem:[#allocation3 + $0x28] sm:$0xff]
    %v119 = vld [vmem:[#allocation3 + $0x30] sm:$0xff]
    %v120 = vld [vmem:[#allocation3 + $0x38] sm:$0xff]
    %v121 = vld [vmem:[#allocation3 + $0x40] sm:$0xff]
    %v122 = vld [vmem:[#allocation3 + $0x48] sm:$0xff]
    %v123 = vld [vmem:[#allocation3 + $0x50] sm:$0xff]
    %v124 = vld [vmem:[#allocation3 + $0x58] sm:$0xff]
    %v125 = vld [vmem:[#allocation3 + $0x60] sm:$0xff]
    %v126 = vld [vmem:[#allocation3 + $0x68] sm:$0xff]
    %v127 = vld [vmem:[#allocation3 + $0x70] sm:$0xff]
    %v128 = vld [vmem:[#allocation3 + $0x78] sm:$0xff]
    %v129 = vld [vmem:[#allocation3 + $0x80] sm:$0xff]
    %v130 = vld [vmem:[#allocation3 + $0x88] sm:$0xff]
    %v131 = vld [vmem:[#allocation3 + $0x90] sm:$0xff]
    %v132 = vld [vmem:[#allocation3 + $0x98] sm:$0xff]
    %v133 = vld [vmem:[#allocation3 + $0xa0] sm:$0xff]
    %v134 = vld [vmem:[#allocation3 + $0xa8] sm:$0xff]
    %v135 = vld [vmem:[#allocation3 + $0xb0] sm:$0xff]
    %v136 = vld [vmem:[#allocation3 + $0xb8] sm:$0xff]
    %v137 = vld [vmem:[#allocation3 + $0xc0] sm:$0xff]
    %v138 = vld [vmem:[#allocation3 + $0xc8] sm:$0xff]
    %v139 = vld [vmem:[#allocation3 + $0xd0] sm:$0xff]
    %v140 = vld [vmem:[#allocation3 + $0xd8] sm:$0xff]
    %v141 = vld [vmem:[#allocation3 + $0xe0] sm:$0xff]
    %v142 = vld [vmem:[#allocation3 + $0xe8] sm:$0xff]
    %v143 = vld [vmem:[#allocation3 + $0xf0] sm:$0xff]
    %v144 = vld [vmem:[#allocation3 + $0xf8] sm:$0xff]
    %v145 = vld [vmem:[#allocation3 + $0x100] sm:$0xff]
    %v146 = vld [vmem:[#allocation3 + $0x108] sm:$0xff]
    %v147 = vld [vmem:[#allocation3 + $0x110] sm:$0xff]
    %v148 = vld [vmem:[#allocation3 + $0x118] sm:$0xff]
    %v149 = vld [vmem:[#allocation3 + $0x120] sm:$0xff]
    %v150 = vld [vmem:[#allocation3 + $0x128] sm:$0xff]
    %v151 = vld [vmem:[#allocation3 + $0x130] sm:$0xff]
    %v152 = vld [vmem:[#allocation3 + $0x138] sm:$0xff]
    %v153 = vld [vmem:[#allocation3 + $0x140] sm:$0xff]
    %v154 = vld [vmem:[#allocation3 + $0x148] sm:$0xff]
    %v155 = vld [vmem:[#allocation3 + $0x150] sm:$0xff]
    %v156 = vld [vmem:[#allocation3 + $0x158] sm:$0xff]
    %v157 = vld [vmem:[#allocation3 + $0x160] sm:$0xff]
    %v158 = vld [vmem:[#allocation3 + $0x168] sm:$0xff]
    %v159 = vld [vmem:[#allocation3 + $0x170] sm:$0xff]
    %v160 = vld [vmem:[#allocation3 + $0x178] sm:$0xff]
    %v161 = vld [vmem:[#allocation3 + $0x180] sm:$0xff]
    %v162 = vld [vmem:[#allocation3 + $0x188] sm:$0xff]
    %v163 = vld [vmem:[#allocation3 + $0x190] sm:$0xff]
    %v164 = vld [vmem:[#allocation3 + $0x198] sm:$0xff]
    %v165 = vld [vmem:[#allocation3 + $0x1a0] sm:$0xff]
    %v166 = vld [vmem:[#allocation3 + $0x1a8] sm:$0xff]
    %v167 = vld [vmem:[#allocation3 + $0x1b0] sm:$0xff]
    %v168 = vld [vmem:[#allocation3 + $0x1b8] sm:$0xff]
    %v169 = vld [vmem:[#allocation3 + $0x1c0] sm:$0xff]
    %v170 = vld [vmem:[#allocation3 + $0x1c8] sm:$0xff]
    %v171 = vld [vmem:[#allocation3 + $0x1d0] sm:$0xff]
    %v172 = vld [vmem:[#allocation3 + $0x1d8] sm:$0xff]
    %v173 = vld [vmem:[#allocation3 + $0x1e0] sm:$0xff]
    %v174 = vld [vmem:[#allocation3 + $0x1e8] sm:$0xff]
    %v175 = vld [vmem:[#allocation3 + $0x1f0] sm:$0xff]
    %v176 = vld [vmem:[#allocation3 + $0x1f8] sm:$0xff]
    %v177 = vld [vmem:[#allocation6] sm:$0xff]
    %v178 = vld [vmem:[#allocation6 + $0x8] sm:$0xff]
    %v179 = vld [vmem:[#allocation6 + $0x10] sm:$0xff]
    %v180 = vld [vmem:[#allocation6 + $0x18] sm:$0xff]
    %v181 = vld [vmem:[#allocation6 + $0x20] sm:$0xff]
    %v182 = vld [vmem:[#allocation6 + $0x28] sm:$0xff]
    %v183 = vld [vmem:[#allocation6 + $0x30] sm:$0xff]
    %v184 = vld [vmem:[#allocation6 + $0x38] sm:$0xff]
    %v185 = vld [vmem:[#allocation6 + $0x40] sm:$0xff]
    %v186 = vld [vmem:[#allocation6 + $0x48] sm:$0xff]
    %v187 = vld [vmem:[#allocation6 + $0x50] sm:$0xff]
    %v188 = vld [vmem:[#allocation6 + $0x58] sm:$0xff]
    %v189 = vld [vmem:[#allocation6 + $0x60] sm:$0xff]
    %v190 = vld [vmem:[#allocation6 + $0x68] sm:$0xff]
    %v191 = vld [vmem:[#allocation6 + $0x70] sm:$0xff]
    %v192 = vld [vmem:[#allocation6 + $0x78] sm:$0xff]
    %193 = vmatprep.subr.mxu0 0.0
    %194 = vmatpush1.msra.mxu0 %v192
    %195 = vmatprep.subr.mxu0 0.0
    %196 = vmatpush1.msra.mxu0 %v191
    %197 = vmatprep.subr.mxu0 0.0
    %198 = vmatpush1.msra.mxu0 %v190
    %199 = vmatprep.subr.mxu0 0.0
    %200 = vmatpush1.msra.mxu0 %v189
    %201 = vmatprep.subr.mxu0 0.0
    %202 = vmatpush1.msra.mxu0 %v188
    %203 = vmatprep.subr.mxu0 0.0
    %204 = vmatpush1.msra.mxu0 %v187
    %205 = vmatprep.subr.mxu0 0.0
    %206 = vmatpush1.msra.mxu0 %v186
    %207 = vmatprep.subr.mxu0 0.0
    %208 = vmatpush1.msra.mxu0 %v185
    %209 = vmatprep.subr.mxu0 0.0
    %210 = vmatpush1.msra.mxu0 %v184
    %211 = vmatprep.subr.mxu0 0.0
    %212 = vmatpush1.msra.mxu0 %v183
    %213 = vmatprep.subr.mxu0 0.0
    %214 = vmatpush1.msra.mxu0 %v182
    %215 = vmatprep.subr.mxu0 0.0
    %216 = vmatpush1.msra.mxu0 %v181
    %217 = vmatprep.subr.mxu0 0.0
    %218 = vmatpush1.msra.mxu0 %v180
    %219 = vmatprep.subr.mxu0 0.0
    %220 = vmatpush1.msra.mxu0 %v179
    %221 = vmatprep.subr.mxu0 0.0
    %222 = vmatpush1.msra.mxu0 %v178
    %223 = vmatprep.subr.mxu0 0.0
    %224 = vmatpush1.msra.mxu0 %v177
    %225 = vmatprep.subr.mxu0 0.0
    %226 = vmatpush2.msra.mxu0 0.0
    %227 = vmatprep.subr.mxu0 0.0
    %228 = vmatpush2.msra.mxu0 0.0
    %229 = vmatprep.subr.mxu0 0.0
    %230 = vmatpush2.msra.mxu0 0.0
    %231 = vmatprep.subr.mxu0 0.0
    %232 = vmatpush2.msra.mxu0 0.0
    %233 = vmatprep.subr.mxu0 0.0
    %234 = vmatpush2.msra.mxu0 0.0
    %235 = vmatprep.subr.mxu0 0.0
    %236 = vmatpush2.msra.mxu0 0.0
    %237 = vmatprep.subr.mxu0 0.0
    %238 = vmatpush2.msra.mxu0 0.0
    %239 = vmatprep.subr.mxu0 0.0
    %240 = vmatpush2.msra.mxu0 0.0
    %241 = vmatprep.subr.mxu0 0.0
    %242 = vmatpush2.msra.mxu0 0.0
    %243 = vmatprep.subr.mxu0 0.0
    %244 = vmatpush2.msra.mxu0 0.0
    %245 = vmatprep.subr.mxu0 0.0
    %246 = vmatpush2.msra.mxu0 0.0
    %247 = vmatprep.subr.mxu0 0.0
    %248 = vmatpush2.msra.mxu0 0.0
    %249 = vmatprep.subr.mxu0 0.0
    %250 = vmatpush2.msra.mxu0 0.0
    %251 = vmatprep.subr.mxu0 0.0
    %252 = vmatpush2.msra.mxu0 0.0
    %253 = vmatprep.subr.mxu0 0.0
    %254 = vmatpush2.msra.mxu0 0.0
    %255 = vmatprep.subr.mxu0 0.0
    %256 = vmatpush2.msra.mxu0 0.0
    %257 = vmatprep.mubr.f32.mxu0 0.0
    %258 = vmatmul.mubr.f32.gmra.mxu0 %v113
    %v259 = vpop.f32.mrf.mxu0
    %v260 = vadd.f32 0.0, %v259
    %v261 = vpop.f32.mrf.mxu0
    %262 = vmatprep.mubr.f32.mxu0 0.0
    %263 = vmatmul.mubr.f32.gmra.mxu0 %v114
    %v264 = vpop.f32.mrf.mxu0
    %v265 = vadd.f32 0.0, %v264
    %v266 = vpop.f32.mrf.mxu0
    %267 = vmatprep.mubr.f32.mxu0 0.0
    %268 = vmatmul.mubr.f32.gmra.mxu0 %v115
    %v269 = vpop.f32.mrf.mxu0
    %v270 = vadd.f32 0.0, %v269
    %v271 = vpop.f32.mrf.mxu0
    %272 = vmatprep.mubr.f32.mxu0 0.0
    %273 = vmatmul.mubr.f32.gmra.mxu0 %v116
    %v274 = vpop.f32.mrf.mxu0
    %v275 = vadd.f32 0.0, %v274
    %v276 = vpop.f32.mrf.mxu0
    %277 = vmatprep.mubr.f32.mxu0 0.0
    %278 = vmatmul.mubr.f32.gmra.mxu0 %v117
    %v279 = vpop.f32.mrf.mxu0
    %v280 = vadd.f32 0.0, %v279
    %v281 = vpop.f32.mrf.mxu0
    %282 = vmatprep.mubr.f32.mxu0 0.0
    %283 = vmatmul.mubr.f32.gmra.mxu0 %v118
    %v284 = vpop.f32.mrf.mxu0
    %v285 = vadd.f32 0.0, %v284
    %v286 = vpop.f32.mrf.mxu0
    %287 = vmatprep.mubr.f32.mxu0 0.0
    %288 = vmatmul.mubr.f32.gmra.mxu0 %v119
    %v289 = vpop.f32.mrf.mxu0
    %v290 = vadd.f32 0.0, %v289
    %v291 = vpop.f32.mrf.mxu0
    %292 = vmatprep.mubr.f32.mxu0 0.0
    %293 = vmatmul.mubr.f32.gmra.mxu0 %v120
    %v294 = vpop.f32.mrf.mxu0
    %v295 = vadd.f32 0.0, %v294
    %v296 = vpop.f32.mrf.mxu0
    %297 = vmatprep.mubr.f32.mxu0 0.0
    %298 = vmatmul.mubr.f32.gmra.mxu0 %v121
    %v299 = vpop.f32.mrf.mxu0
    %v300 = vadd.f32 0.0, %v299
    %v301 = vpop.f32.mrf.mxu0
    %302 = vmatprep.mubr.f32.mxu0 0.0
    %303 = vmatmul.mubr.f32.gmra.mxu0 %v122
    %v304 = vpop.f32.mrf.mxu0
    %v305 = vadd.f32 0.0, %v304
    %v306 = vpop.f32.mrf.mxu0
    %307 = vmatprep.mubr.f32.mxu0 0.0
    %308 = vmatmul.mubr.f32.gmra.mxu0 %v123
    %v309 = vpop.f32.mrf.mxu0
    %v310 = vadd.f32 0.0, %v309
    %v311 = vpop.f32.mrf.mxu0
    %312 = vmatprep.mubr.f32.mxu0 0.0
    %313 = vmatmul.mubr.f32.gmra.mxu0 %v124
    %v314 = vpop.f32.mrf.mxu0
    %v315 = vadd.f32 0.0, %v314
    %v316 = vpop.f32.mrf.mxu0
    %317 = vmatprep.mubr.f32.mxu0 0.0
    %318 = vmatmul.mubr.f32.gmra.mxu0 %v125
    %v319 = vpop.f32.mrf.mxu0
    %v320 = vadd.f32 0.0, %v319
    %v321 = vpop.f32.mrf.mxu0
    %322 = vmatprep.mubr.f32.mxu0 0.0
    %323 = vmatmul.mubr.f32.gmra.mxu0 %v126
    %v324 = vpop.f32.mrf.mxu0
    %v325 = vadd.f32 0.0, %v324
    %v326 = vpop.f32.mrf.mxu0
    %327 = vmatprep.mubr.f32.mxu0 0.0
    %328 = vmatmul.mubr.f32.gmra.mxu0 %v127
    %v329 = vpop.f32.mrf.mxu0
    %v330 = vadd.f32 0.0, %v329
    %v331 = vpop.f32.mrf.mxu0
    %332 = vmatprep.mubr.f32.mxu0 0.0
    %333 = vmatmul.mubr.f32.gmra.mxu0 %v128
    %v334 = vpop.f32.mrf.mxu0
    %v335 = vadd.f32 0.0, %v334
    %v336 = vpop.f32.mrf.mxu0
    %337 = vmatprep.mubr.f32.mxu0 0.0
    %338 = vmatmul.mubr.f32.gmra.mxu0 %v129
    %v339 = vpop.f32.mrf.mxu0
    %v340 = vadd.f32 0.0, %v339
    %v341 = vpop.f32.mrf.mxu0
    %342 = vmatprep.mubr.f32.mxu0 0.0
    %343 = vmatmul.mubr.f32.gmra.mxu0 %v130
    %v344 = vpop.f32.mrf.mxu0
    %v345 = vadd.f32 0.0, %v344
    %v346 = vpop.f32.mrf.mxu0
    %347 = vmatprep.mubr.f32.mxu0 0.0
    %348 = vmatmul.mubr.f32.gmra.mxu0 %v131
    %v349 = vpop.f32.mrf.mxu0
    %v350 = vadd.f32 0.0, %v349
    %v351 = vpop.f32.mrf.mxu0
    %352 = vmatprep.mubr.f32.mxu0 0.0
    %353 = vmatmul.mubr.f32.gmra.mxu0 %v132
    %v354 = vpop.f32.mrf.mxu0
    %v355 = vadd.f32 0.0, %v354
    %v356 = vpop.f32.mrf.mxu0
    %357 = vmatprep.mubr.f32.mxu0 0.0
    %358 = vmatmul.mubr.f32.gmra.mxu0 %v133
    %v359 = vpop.f32.mrf.mxu0
    %v360 = vadd.f32 0.0, %v359
    %v361 = vpop.f32.mrf.mxu0
    %362 = vmatprep.mubr.f32.mxu0 0.0
    %363 = vmatmul.mubr.f32.gmra.mxu0 %v134
    %v364 = vpop.f32.mrf.mxu0
    %v365 = vadd.f32 0.0, %v364
    %v366 = vpop.f32.mrf.mxu0
    %367 = vmatprep.mubr.f32.mxu0 0.0
    %368 = vmatmul.mubr.f32.gmra.mxu0 %v135
    %v369 = vpop.f32.mrf.mxu0
    %v370 = vadd.f32 0.0, %v369
    %v371 = vpop.f32.mrf.mxu0
    %372 = vmatprep.mubr.f32.mxu0 0.0
    %373 = vmatmul.mubr.f32.gmra.mxu0 %v136
    %v374 = vpop.f32.mrf.mxu0
    %v375 = vadd.f32 0.0, %v374
    %v376 = vpop.f32.mrf.mxu0
    %377 = vmatprep.mubr.f32.mxu0 0.0
    %378 = vmatmul.mubr.f32.gmra.mxu0 %v137
    %v379 = vpop.f32.mrf.mxu0
    %v380 = vadd.f32 0.0, %v379
    %v381 = vpop.f32.mrf.mxu0
    %382 = vmatprep.mubr.f32.mxu0 0.0
    %383 = vmatmul.mubr.f32.gmra.mxu0 %v138
    %v384 = vpop.f32.mrf.mxu0
    %v385 = vadd.f32 0.0, %v384
    %v386 = vpop.f32.mrf.mxu0
    %387 = vmatprep.mubr.f32.mxu0 0.0
    %388 = vmatmul.mubr.f32.gmra.mxu0 %v139
    %v389 = vpop.f32.mrf.mxu0
    %v390 = vadd.f32 0.0, %v389
    %v391 = vpop.f32.mrf.mxu0
    %392 = vmatprep.mubr.f32.mxu0 0.0
    %393 = vmatmul.mubr.f32.gmra.mxu0 %v140
    %v394 = vpop.f32.mrf.mxu0
    %v395 = vadd.f32 0.0, %v394
    %v396 = vpop.f32.mrf.mxu0
    %397 = vmatprep.mubr.f32.mxu0 0.0
    %398 = vmatmul.mubr.f32.gmra.mxu0 %v141
    %v399 = vpop.f32.mrf.mxu0
    %v400 = vadd.f32 0.0, %v399
    %v401 = vpop.f32.mrf.mxu0
    %402 = vmatprep.mubr.f32.mxu0 0.0
    %403 = vmatmul.mubr.f32.gmra.mxu0 %v142
    %v404 = vpop.f32.mrf.mxu0
    %v405 = vadd.f32 0.0, %v404
    %v406 = vpop.f32.mrf.mxu0
    %407 = vmatprep.mubr.f32.mxu0 0.0
    %408 = vmatmul.mubr.f32.gmra.mxu0 %v143
    %v409 = vpop.f32.mrf.mxu0
    %v410 = vadd.f32 0.0, %v409
    %v411 = vpop.f32.mrf.mxu0
    %412 = vmatprep.mubr.f32.mxu0 0.0
    %413 = vmatmul.mubr.f32.gmra.mxu0 %v144
    %v414 = vpop.f32.mrf.mxu0
    %v415 = vadd.f32 0.0, %v414
    %v416 = vpop.f32.mrf.mxu0
    %417 = vmatprep.mubr.f32.mxu0 0.0
    %418 = vmatmul.mubr.f32.gmra.mxu0 %v145
    %v419 = vpop.f32.mrf.mxu0
    %v420 = vadd.f32 0.0, %v419
    %v421 = vpop.f32.mrf.mxu0
    %422 = vmatprep.mubr.f32.mxu0 0.0
    %423 = vmatmul.mubr.f32.gmra.mxu0 %v146
    %v424 = vpop.f32.mrf.mxu0
    %v425 = vadd.f32 0.0, %v424
    %v426 = vpop.f32.mrf.mxu0
    %427 = vmatprep.mubr.f32.mxu0 0.0
    %428 = vmatmul.mubr.f32.gmra.mxu0 %v147
    %v429 = vpop.f32.mrf.mxu0
    %v430 = vadd.f32 0.0, %v429
    %v431 = vpop.f32.mrf.mxu0
    %432 = vmatprep.mubr.f32.mxu0 0.0
    %433 = vmatmul.mubr.f32.gmra.mxu0 %v148
    %v434 = vpop.f32.mrf.mxu0
    %v435 = vadd.f32 0.0, %v434
    %v436 = vpop.f32.mrf.mxu0
    %437 = vmatprep.mubr.f32.mxu0 0.0
    %438 = vmatmul.mubr.f32.gmra.mxu0 %v149
    %v439 = vpop.f32.mrf.mxu0
    %v440 = vadd.f32 0.0, %v439
    %v441 = vpop.f32.mrf.mxu0
    %442 = vmatprep.mubr.f32.mxu0 0.0
    %443 = vmatmul.mubr.f32.gmra.mxu0 %v150
    %v444 = vpop.f32.mrf.mxu0
    %v445 = vadd.f32 0.0, %v444
    %v446 = vpop.f32.mrf.mxu0
    %447 = vmatprep.mubr.f32.mxu0 0.0
    %448 = vmatmul.mubr.f32.gmra.mxu0 %v151
    %v449 = vpop.f32.mrf.mxu0
    %v450 = vadd.f32 0.0, %v449
    %v451 = vpop.f32.mrf.mxu0
    %452 = vmatprep.mubr.f32.mxu0 0.0
    %453 = vmatmul.mubr.f32.gmra.mxu0 %v152
    %v454 = vpop.f32.mrf.mxu0
    %v455 = vadd.f32 0.0, %v454
    %v456 = vpop.f32.mrf.mxu0
    %457 = vmatprep.mubr.f32.mxu0 0.0
    %458 = vmatmul.mubr.f32.gmra.mxu0 %v153
    %v459 = vpop.f32.mrf.mxu0
    %v460 = vadd.f32 0.0, %v459
    %v461 = vpop.f32.mrf.mxu0
    %462 = vmatprep.mubr.f32.mxu0 0.0
    %463 = vmatmul.mubr.f32.gmra.mxu0 %v154
    %v464 = vpop.f32.mrf.mxu0
    %v465 = vadd.f32 0.0, %v464
    %v466 = vpop.f32.mrf.mxu0
    %467 = vmatprep.mubr.f32.mxu0 0.0
    %468 = vmatmul.mubr.f32.gmra.mxu0 %v155
    %v469 = vpop.f32.mrf.mxu0
    %v470 = vadd.f32 0.0, %v469
    %v471 = vpop.f32.mrf.mxu0
    %472 = vmatprep.mubr.f32.mxu0 0.0
    %473 = vmatmul.mubr.f32.gmra.mxu0 %v156
    %v474 = vpop.f32.mrf.mxu0
    %v475 = vadd.f32 0.0, %v474
    %v476 = vpop.f32.mrf.mxu0
    %477 = vmatprep.mubr.f32.mxu0 0.0
    %478 = vmatmul.mubr.f32.gmra.mxu0 %v157
    %v479 = vpop.f32.mrf.mxu0
    %v480 = vadd.f32 0.0, %v479
    %v481 = vpop.f32.mrf.mxu0
    %482 = vmatprep.mubr.f32.mxu0 0.0
    %483 = vmatmul.mubr.f32.gmra.mxu0 %v158
    %v484 = vpop.f32.mrf.mxu0
    %v485 = vadd.f32 0.0, %v484
    %v486 = vpop.f32.mrf.mxu0
    %487 = vmatprep.mubr.f32.mxu0 0.0
    %488 = vmatmul.mubr.f32.gmra.mxu0 %v159
    %v489 = vpop.f32.mrf.mxu0
    %v490 = vadd.f32 0.0, %v489
    %v491 = vpop.f32.mrf.mxu0
    %492 = vmatprep.mubr.f32.mxu0 0.0
    %493 = vmatmul.mubr.f32.gmra.mxu0 %v160
    %v494 = vpop.f32.mrf.mxu0
    %v495 = vadd.f32 0.0, %v494
    %v496 = vpop.f32.mrf.mxu0
    %497 = vmatprep.mubr.f32.mxu0 0.0
    %498 = vmatmul.mubr.f32.gmra.mxu0 %v161
    %v499 = vpop.f32.mrf.mxu0
    %v500 = vadd.f32 0.0, %v499
    %v501 = vpop.f32.mrf.mxu0
    %502 = vmatprep.mubr.f32.mxu0 0.0
    %503 = vmatmul.mubr.f32.gmra.mxu0 %v162
    %v504 = vpop.f32.mrf.mxu0
    %v505 = vadd.f32 0.0, %v504
    %v506 = vpop.f32.mrf.mxu0
    %507 = vmatprep.mubr.f32.mxu0 0.0
    %508 = vmatmul.mubr.f32.gmra.mxu0 %v163
    %v509 = vpop.f32.mrf.mxu0
    %v510 = vadd.f32 0.0, %v509
    %v511 = vpop.f32.mrf.mxu0
    %512 = vmatprep.mubr.f32.mxu0 0.0
    %513 = vmatmul.mubr.f32.gmra.mxu0 %v164
    %v514 = vpop.f32.mrf.mxu0
    %v515 = vadd.f32 0.0, %v514
    %v516 = vpop.f32.mrf.mxu0
    %517 = vmatprep.mubr.f32.mxu0 0.0
    %518 = vmatmul.mubr.f32.gmra.mxu0 %v165
    %v519 = vpop.f32.mrf.mxu0
    %v520 = vadd.f32 0.0, %v519
    %v521 = vpop.f32.mrf.mxu0
    %522 = vmatprep.mubr.f32.mxu0 0.0
    %523 = vmatmul.mubr.f32.gmra.mxu0 %v166
    %v524 = vpop.f32.mrf.mxu0
    %v525 = vadd.f32 0.0, %v524
    %v526 = vpop.f32.mrf.mxu0
    %527 = vmatprep.mubr.f32.mxu0 0.0
    %528 = vmatmul.mubr.f32.gmra.mxu0 %v167
    %v529 = vpop.f32.mrf.mxu0
    %v530 = vadd.f32 0.0, %v529
    %v531 = vpop.f32.mrf.mxu0
    %532 = vmatprep.mubr.f32.mxu0 0.0
    %533 = vmatmul.mubr.f32.gmra.mxu0 %v168
    %v534 = vpop.f32.mrf.mxu0
    %v535 = vadd.f32 0.0, %v534
    %v536 = vpop.f32.mrf.mxu0
    %537 = vmatprep.mubr.f32.mxu0 0.0
    %538 = vmatmul.mubr.f32.gmra.mxu0 %v169
    %v539 = vpop.f32.mrf.mxu0
    %v540 = vadd.f32 0.0, %v539
    %v541 = vpop.f32.mrf.mxu0
    %542 = vmatprep.mubr.f32.mxu0 0.0
    %543 = vmatmul.mubr.f32.gmra.mxu0 %v170
    %v544 = vpop.f32.mrf.mxu0
    %v545 = vadd.f32 0.0, %v544
    %v546 = vpop.f32.mrf.mxu0
    %547 = vmatprep.mubr.f32.mxu0 0.0
    %548 = vmatmul.mubr.f32.gmra.mxu0 %v171
    %v549 = vpop.f32.mrf.mxu0
    %v550 = vadd.f32 0.0, %v549
    %v551 = vpop.f32.mrf.mxu0
    %552 = vmatprep.mubr.f32.mxu0 0.0
    %553 = vmatmul.mubr.f32.gmra.mxu0 %v172
    %v554 = vpop.f32.mrf.mxu0
    %v555 = vadd.f32 0.0, %v554
    %v556 = vpop.f32.mrf.mxu0
    %557 = vmatprep.mubr.f32.mxu0 0.0
    %558 = vmatmul.mubr.f32.gmra.mxu0 %v173
    %v559 = vpop.f32.mrf.mxu0
    %v560 = vadd.f32 0.0, %v559
    %v561 = vpop.f32.mrf.mxu0
    %562 = vmatprep.mubr.f32.mxu0 0.0
    %563 = vmatmul.mubr.f32.gmra.mxu0 %v174
    %v564 = vpop.f32.mrf.mxu0
    %v565 = vadd.f32 0.0, %v564
    %v566 = vpop.f32.mrf.mxu0
    %567 = vmatprep.mubr.f32.mxu0 0.0
    %568 = vmatmul.mubr.f32.gmra.mxu0 %v175
    %v569 = vpop.f32.mrf.mxu0
    %v570 = vadd.f32 0.0, %v569
    %v571 = vpop.f32.mrf.mxu0
    %572 = vmatprep.mubr.f32.mxu0 0.0
    %573 = vmatmul.mubr.f32.gmra.mxu0 %v176
    %v574 = vpop.f32.mrf.mxu0
    %v575 = vadd.f32 0.0, %v574
    %v576 = vpop.f32.mrf.mxu0
    %577 = vdwg.mxu0
    %v578 = vld [vmem:[%s2] sm:$0x1]
    %v579 = vld [vmem:[%s3] sm:$0x1]
    %v580 = vadd.f32 %v260, %v265
    %v581 = vadd.f32 %v580, %v270
    %v582 = vadd.f32 %v581, %v275
    %v583 = vadd.f32 %v582, %v280
    %v584 = vadd.f32 %v583, %v285
    %v585 = vadd.f32 %v584, %v290
    %v586 = vadd.f32 %v585, %v295
    %v587 = vadd.f32 %v586, %v300
    %v588 = vadd.f32 %v587, %v305
    %v589 = vadd.f32 %v588, %v310
    %v590 = vadd.f32 %v589, %v315
    %v591 = vadd.f32 %v590, %v320
    %v592 = vadd.f32 %v591, %v325
    %v593 = vadd.f32 %v592, %v330
    %v594 = vadd.f32 %v593, %v335
    %v595 = vadd.f32 %v594, %v340
    %v596 = vadd.f32 %v595, %v345
    %v597 = vadd.f32 %v596, %v350
    %v598 = vadd.f32 %v597, %v355
    %v599 = vadd.f32 %v598, %v360
    %v600 = vadd.f32 %v599, %v365
    %v601 = vadd.f32 %v600, %v370
    %v602 = vadd.f32 %v601, %v375
    %v603 = vadd.f32 %v602, %v380
    %v604 = vadd.f32 %v603, %v385
    %v605 = vadd.f32 %v604, %v390
    %v606 = vadd.f32 %v605, %v395
    %v607 = vadd.f32 %v606, %v400
    %v608 = vadd.f32 %v607, %v405
    %v609 = vadd.f32 %v608, %v410
    %v610 = vadd.f32 %v609, %v415
    %v611 = vadd.f32 %v610, %v420
    %v612 = vadd.f32 %v611, %v425
    %v613 = vadd.f32 %v612, %v430
    %v614 = vadd.f32 %v613, %v435
    %v615 = vadd.f32 %v614, %v440
    %v616 = vadd.f32 %v615, %v445
    %v617 = vadd.f32 %v616, %v450
    %v618 = vadd.f32 %v617, %v455
    %v619 = vadd.f32 %v618, %v460
    %v620 = vadd.f32 %v619, %v465
    %v621 = vadd.f32 %v620, %v470
    %v622 = vadd.f32 %v621, %v475
    %v623 = vadd.f32 %v622, %v480
    %v624 = vadd.f32 %v623, %v485
    %v625 = vadd.f32 %v624, %v490
    %v626 = vadd.f32 %v625, %v495
    %v627 = vadd.f32 %v626, %v500
    %v628 = vadd.f32 %v627, %v505
    %v629 = vadd.f32 %v628, %v510
    %v630 = vadd.f32 %v629, %v515
    %v631 = vadd.f32 %v630, %v520
    %v632 = vadd.f32 %v631, %v525
    %v633 = vadd.f32 %v632, %v530
    %v634 = vadd.f32 %v633, %v535
    %v635 = vadd.f32 %v634, %v540
    %v636 = vadd.f32 %v635, %v545
    %v637 = vadd.f32 %v636, %v550
    %v638 = vadd.f32 %v637, %v555
    %v639 = vadd.f32 %v638, %v560
    %v640 = vadd.f32 %v639, %v565
    %v641 = vadd.f32 %v640, %v570
    %v642 = vadd.f32 %v641, %v575
    %v643 = vrot.slane %v642, 4
    %v644 = vadd.f32 %v642, %v643
    %v645 = vrot.slane %v644, 2
    %v646 = vadd.f32 %v644, %v645
    %v647 = vrot.slane %v646, 1
    %v648 = vadd.f32 %v646, %v647
    %v649 = vrcp.pop 512.0
    %v650 = vmul.f32 %v648, %v649
    %v651 = vmul.f32 %v260, %v260
    %v652 = vmul.f32 %v265, %v265
    %v653 = vmul.f32 %v270, %v270
    %v654 = vmul.f32 %v275, %v275
    %v655 = vmul.f32 %v280, %v280
    %v656 = vmul.f32 %v285, %v285
    %v657 = vmul.f32 %v290, %v290
    %v658 = vmul.f32 %v295, %v295
    %v659 = vmul.f32 %v300, %v300
    %v660 = vmul.f32 %v305, %v305
    %v661 = vmul.f32 %v310, %v310
    %v662 = vmul.f32 %v315, %v315
    %v663 = vmul.f32 %v320, %v320
    %v664 = vmul.f32 %v325, %v325
    %v665 = vmul.f32 %v330, %v330
    %v666 = vmul.f32 %v335, %v335
    %v667 = vmul.f32 %v340, %v340
    %v668 = vmul.f32 %v345, %v345
    %v669 = vmul.f32 %v350, %v350
    %v670 = vmul.f32 %v355, %v355
    %v671 = vmul.f32 %v360, %v360
    %v672 = vmul.f32 %v365, %v365
    %v673 = vmul.f32 %v370, %v370
    %v674 = vmul.f32 %v375, %v375
    %v675 = vmul.f32 %v380, %v380
    %v676 = vmul.f32 %v385, %v385
    %v677 = vmul.f32 %v390, %v390
    %v678 = vmul.f32 %v395, %v395
    %v679 = vmul.f32 %v400, %v400
    %v680 = vmul.f32 %v405, %v405
    %v681 = vmul.f32 %v410, %v410
    %v682 = vmul.f32 %v415, %v415
    %v683 = vmul.f32 %v420, %v420
    %v684 = vmul.f32 %v425, %v425
    %v685 = vmul.f32 %v430, %v430
    %v686 = vmul.f32 %v435, %v435
    %v687 = vmul.f32 %v440, %v440
    %v688 = vmul.f32 %v445, %v445
    %v689 = vmul.f32 %v450, %v450
    %v690 = vmul.f32 %v455, %v455
    %v691 = vmul.f32 %v460, %v460
    %v692 = vmul.f32 %v465, %v465
    %v693 = vmul.f32 %v470, %v470
    %v694 = vmul.f32 %v475, %v475
    %v695 = vmul.f32 %v480, %v480
    %v696 = vmul.f32 %v485, %v485
    %v697 = vmul.f32 %v490, %v490
    %v698 = vmul.f32 %v495, %v495
    %v699 = vmul.f32 %v500, %v500
    %v700 = vmul.f32 %v505, %v505
    %v701 = vmul.f32 %v510, %v510
    %v702 = vmul.f32 %v515, %v515
    %v703 = vmul.f32 %v520, %v520
    %v704 = vmul.f32 %v525, %v525
    %v705 = vmul.f32 %v530, %v530
    %v706 = vmul.f32 %v535, %v535
    %v707 = vmul.f32 %v540, %v540
    %v708 = vmul.f32 %v545, %v545
    %v709 = vmul.f32 %v550, %v550
    %v710 = vmul.f32 %v555, %v555
    %v711 = vmul.f32 %v560, %v560
    %v712 = vmul.f32 %v565, %v565
    %v713 = vmul.f32 %v570, %v570
    %v714 = vmul.f32 %v575, %v575
    %v715 = vadd.f32 %v651, %v652
    %v716 = vadd.f32 %v715, %v653
    %v717 = vadd.f32 %v716, %v654
    %v718 = vadd.f32 %v717, %v655
    %v719 = vadd.f32 %v718, %v656
    %v720 = vadd.f32 %v719, %v657
    %v721 = vadd.f32 %v720, %v658
    %v722 = vadd.f32 %v721, %v659
    %v723 = vadd.f32 %v722, %v660
    %v724 = vadd.f32 %v723, %v661
    %v725 = vadd.f32 %v724, %v662
    %v726 = vadd.f32 %v725, %v663
    %v727 = vadd.f32 %v726, %v664
    %v728 = vadd.f32 %v727, %v665
    %v729 = vadd.f32 %v728, %v666
    %v730 = vadd.f32 %v729, %v667
    %v731 = vadd.f32 %v730, %v668
    %v732 = vadd.f32 %v731, %v669
    %v733 = vadd.f32 %v732, %v670
    %v734 = vadd.f32 %v733, %v671
    %v735 = vadd.f32 %v734, %v672
    %v736 = vadd.f32 %v735, %v673
    %v737 = vadd.f32 %v736, %v674
    %v738 = vadd.f32 %v737, %v675
    %v739 = vadd.f32 %v738, %v676
    %v740 = vadd.f32 %v739, %v677
    %v741 = vadd.f32 %v740, %v678
    %v742 = vadd.f32 %v741, %v679
    %v743 = vadd.f32 %v742, %v680
    %v744 = vadd.f32 %v743, %v681
    %v745 = vadd.f32 %v744, %v682
    %v746 = vadd.f32 %v745, %v683
    %v747 = vadd.f32 %v746, %v684
    %v748 = vadd.f32 %v747, %v685
    %v749 = vadd.f32 %v748, %v686
    %v750 = vadd.f32 %v749, %v687
    %v751 = vadd.f32 %v750, %v688
    %v752 = vadd.f32 %v751, %v689
    %v753 = vadd.f32 %v752, %v690
    %v754 = vadd.f32 %v753, %v691
    %v755 = vadd.f32 %v754, %v692
    %v756 = vadd.f32 %v755, %v693
    %v757 = vadd.f32 %v756, %v694
    %v758 = vadd.f32 %v757, %v695
    %v759 = vadd.f32 %v758, %v696
    %v760 = vadd.f32 %v759, %v697
    %v761 = vadd.f32 %v760, %v698
    %v762 = vadd.f32 %v761, %v699
    %v763 = vadd.f32 %v762, %v700
    %v764 = vadd.f32 %v763, %v701
    %v765 = vadd.f32 %v764, %v702
    %v766 = vadd.f32 %v765, %v703
    %v767 = vadd.f32 %v766, %v704
    %v768 = vadd.f32 %v767, %v705
    %v769 = vadd.f32 %v768, %v706
    %v770 = vadd.f32 %v769, %v707
    %v771 = vadd.f32 %v770, %v708
    %v772 = vadd.f32 %v771, %v709
    %v773 = vadd.f32 %v772, %v710
    %v774 = vadd.f32 %v773, %v711
    %v775 = vadd.f32 %v774, %v712
    %v776 = vadd.f32 %v775, %v713
    %v777 = vadd.f32 %v776, %v714
    %v778 = vrot.slane %v777, 4
    %v779 = vadd.f32 %v777, %v778
    %v780 = vrot.slane %v779, 2
    %v781 = vadd.f32 %v779, %v780
    %v782 = vrot.slane %v781, 1
    %v783 = vadd.f32 %v781, %v782
    %v784 = vmul.f32 %v783, %v649
    %v785 = vmul.f32 %v650, %v650
    %v786 = vsub.f32 %v784, %v785
    %v787 = vsub.f32 %v260, %v650
    %v788 = vsub.f32 %v265, %v650
    %v789 = vsub.f32 %v270, %v650
    %v790 = vsub.f32 %v275, %v650
    %v791 = vsub.f32 %v280, %v650
    %v792 = vsub.f32 %v285, %v650
    %v793 = vsub.f32 %v290, %v650
    %v794 = vsub.f32 %v295, %v650
    %v795 = vsub.f32 %v300, %v650
    %v796 = vsub.f32 %v305, %v650
    %v797 = vsub.f32 %v310, %v650
    %v798 = vsub.f32 %v315, %v650
    %v799 = vsub.f32 %v320, %v650
    %v800 = vsub.f32 %v325, %v650
    %v801 = vsub.f32 %v330, %v650
    %v802 = vsub.f32 %v335, %v650
    %v803 = vsub.f32 %v340, %v650
    %v804 = vsub.f32 %v345, %v650
    %v805 = vsub.f32 %v350, %v650
    %v806 = vsub.f32 %v355, %v650
    %v807 = vsub.f32 %v360, %v650
    %v808 = vsub.f32 %v365, %v650
    %v809 = vsub.f32 %v370, %v650
    %v810 = vsub.f32 %v375, %v650
    %v811 = vsub.f32 %v380, %v650
    %v812 = vsub.f32 %v385, %v650
    %v813 = vsub.f32 %v390, %v650
    %v814 = vsub.f32 %v395, %v650
    %v815 = vsub.f32 %v400, %v650
    %v816 = vsub.f32 %v405, %v650
    %v817 = vsub.f32 %v410, %v650
    %v818 = vsub.f32 %v415, %v650
    %v819 = vsub.f32 %v420, %v650
    %v820 = vsub.f32 %v425, %v650
    %v821 = vsub.f32 %v430, %v650
    %v822 = vsub.f32 %v435, %v650
    %v823 = vsub.f32 %v440, %v650
    %v824 = vsub.f32 %v445, %v650
    %v825 = vsub.f32 %v450, %v650
    %v826 = vsub.f32 %v455, %v650
    %v827 = vsub.f32 %v460, %v650
    %v828 = vsub.f32 %v465, %v650
    %v829 = vsub.f32 %v470, %v650
    %v830 = vsub.f32 %v475, %v650
    %v831 = vsub.f32 %v480, %v650
    %v832 = vsub.f32 %v485, %v650
    %v833 = vsub.f32 %v490, %v650
    %v834 = vsub.f32 %v495, %v650
    %v835 = vsub.f32 %v500, %v650
    %v836 = vsub.f32 %v505, %v650
    %v837 = vsub.f32 %v510, %v650
    %v838 = vsub.f32 %v515, %v650
    %v839 = vsub.f32 %v520, %v650
    %v840 = vsub.f32 %v525, %v650
    %v841 = vsub.f32 %v530, %v650
    %v842 = vsub.f32 %v535, %v650
    %v843 = vsub.f32 %v540, %v650
    %v844 = vsub.f32 %v545, %v650
    %v845 = vsub.f32 %v550, %v650
    %v846 = vsub.f32 %v555, %v650
    %v847 = vsub.f32 %v560, %v650
    %v848 = vsub.f32 %v565, %v650
    %v849 = vsub.f32 %v570, %v650
    %v850 = vsub.f32 %v575, %v650
    %v851 = vadd.f32 %v786, 1e-05
    %v852 = vrsqrt.pop %v851
    %v853 = vmul.f32 %v787, %v852
    %v854 = vmul.f32 %v788, %v852
    %v855 = vmul.f32 %v789, %v852
    %v856 = vmul.f32 %v790, %v852
    %v857 = vmul.f32 %v791, %v852
    %v858 = vmul.f32 %v792, %v852
    %v859 = vmul.f32 %v793, %v852
    %v860 = vmul.f32 %v794, %v852
    %v861 = vmul.f32 %v795, %v852
    %v862 = vmul.f32 %v796, %v852
    %v863 = vmul.f32 %v797, %v852
    %v864 = vmul.f32 %v798, %v852
    %v865 = vmul.f32 %v799, %v852
    %v866 = vmul.f32 %v800, %v852
    %v867 = vmul.f32 %v801, %v852
    %v868 = vmul.f32 %v802, %v852
    %v869 = vmul.f32 %v803, %v852
    %v870 = vmul.f32 %v804, %v852
    %v871 = vmul.f32 %v805, %v852
    %v872 = vmul.f32 %v806, %v852
    %v873 = vmul.f32 %v807, %v852
    %v874 = vmul.f32 %v808, %v852
    %v875 = vmul.f32 %v809, %v852
    %v876 = vmul.f32 %v810, %v852
    %v877 = vmul.f32 %v811, %v852
    %v878 = vmul.f32 %v812, %v852
    %v879 = vmul.f32 %v813, %v852
    %v880 = vmul.f32 %v814, %v852
    %v881 = vmul.f32 %v815, %v852
    %v882 = vmul.f32 %v816, %v852
    %v883 = vmul.f32 %v817, %v852
    %v884 = vmul.f32 %v818, %v852
    %v885 = vmul.f32 %v819, %v852
    %v886 = vmul.f32 %v820, %v852
    %v887 = vmul.f32 %v821, %v852
    %v888 = vmul.f32 %v822, %v852
    %v889 = vmul.f32 %v823, %v852
    %v890 = vmul.f32 %v824, %v852
    %v891 = vmul.f32 %v825, %v852
    %v892 = vmul.f32 %v826, %v852
    %v893 = vmul.f32 %v827, %v852
    %v894 = vmul.f32 %v828, %v852
    %v895 = vmul.f32 %v829, %v852
    %v896 = vmul.f32 %v830, %v852
    %v897 = vmul.f32 %v831, %v852
    %v898 = vmul.f32 %v832, %v852
    %v899 = vmul.f32 %v833, %v852
    %v900 = vmul.f32 %v834, %v852
    %v901 = vmul.f32 %v835, %v852
    %v902 = vmul.f32 %v836, %v852
    %v903 = vmul.f32 %v837, %v852
    %v904 = vmul.f32 %v838, %v852
    %v905 = vmul.f32 %v839, %v852
    %v906 = vmul.f32 %v840, %v852
    %v907 = vmul.f32 %v841, %v852
    %v908 = vmul.f32 %v842, %v852
    %v909 = vmul.f32 %v843, %v852
    %v910 = vmul.f32 %v844, %v852
    %v911 = vmul.f32 %v845, %v852
    %v912 = vmul.f32 %v846, %v852
    %v913 = vmul.f32 %v847, %v852
    %v914 = vmul.f32 %v848, %v852
    %v915 = vmul.f32 %v849, %v852
    %v916 = vmul.f32 %v850, %v852
    %v918 = vlaneseq
    %v919 = vshrl.u32 %v918, 7
    %v920 = vsub.s32 0, %v919
    %v921 = vrot.slane %v578, %v920
    %v923 = vmul.f32 %v853, %v921
    %v924 = vmul.f32 %v854, %v921
    %v925 = vmul.f32 %v855, %v921
    %v926 = vmul.f32 %v856, %v921
    %v927 = vmul.f32 %v857, %v921
    %v928 = vmul.f32 %v858, %v921
    %v929 = vmul.f32 %v859, %v921
    %v930 = vmul.f32 %v860, %v921
    %v931 = vmul.f32 %v861, %v921
    %v932 = vmul.f32 %v862, %v921
    %v933 = vmul.f32 %v863, %v921
    %v934 = vmul.f32 %v864, %v921
    %v935 = vmul.f32 %v865, %v921
    %v936 = vmul.f32 %v866, %v921
    %v937 = vmul.f32 %v867, %v921
    %v938 = vmul.f32 %v868, %v921
    %v939 = vmul.f32 %v869, %v921
    %v940 = vmul.f32 %v870, %v921
    %v941 = vmul.f32 %v871, %v921
    %v942 = vmul.f32 %v872, %v921
    %v943 = vmul.f32 %v873, %v921
    %v944 = vmul.f32 %v874, %v921
    %v945 = vmul.f32 %v875, %v921
    %v946 = vmul.f32 %v876, %v921
    %v947 = vmul.f32 %v877, %v921
    %v948 = vmul.f32 %v878, %v921
    %v949 = vmul.f32 %v879, %v921
    %v950 = vmul.f32 %v880, %v921
    %v951 = vmul.f32 %v881, %v921
    %v952 = vmul.f32 %v882, %v921
    %v953 = vmul.f32 %v883, %v921
    %v954 = vmul.f32 %v884, %v921
    %v955 = vmul.f32 %v885, %v921
    %v956 = vmul.f32 %v886, %v921
    %v957 = vmul.f32 %v887, %v921
    %v958 = vmul.f32 %v888, %v921
    %v959 = vmul.f32 %v889, %v921
    %v960 = vmul.f32 %v890, %v921
    %v961 = vmul.f32 %v891, %v921
    %v962 = vmul.f32 %v892, %v921
    %v963 = vmul.f32 %v893, %v921
    %v964 = vmul.f32 %v894, %v921
    %v965 = vmul.f32 %v895, %v921
    %v966 = vmul.f32 %v896, %v921
    %v967 = vmul.f32 %v897, %v921
    %v968 = vmul.f32 %v898, %v921
    %v969 = vmul.f32 %v899, %v921
    %v970 = vmul.f32 %v900, %v921
    %v971 = vmul.f32 %v901, %v921
    %v972 = vmul.f32 %v902, %v921
    %v973 = vmul.f32 %v903, %v921
    %v974 = vmul.f32 %v904, %v921
    %v975 = vmul.f32 %v905, %v921
    %v976 = vmul.f32 %v906, %v921
    %v977 = vmul.f32 %v907, %v921
    %v978 = vmul.f32 %v908, %v921
    %v979 = vmul.f32 %v909, %v921
    %v980 = vmul.f32 %v910, %v921
    %v981 = vmul.f32 %v911, %v921
    %v982 = vmul.f32 %v912, %v921
    %v983 = vmul.f32 %v913, %v921
    %v984 = vmul.f32 %v914, %v921
    %v985 = vmul.f32 %v915, %v921
    %v986 = vmul.f32 %v916, %v921
    %v988 = vlaneseq
    %v989 = vshrl.u32 %v988, 7
    %v990 = vsub.s32 0, %v989
    %v991 = vrot.slane %v579, %v990
    %v993 = vadd.f32 %v923, %v991
    %v994 = vadd.f32 %v924, %v991
    %v995 = vadd.f32 %v925, %v991
    %v996 = vadd.f32 %v926, %v991
    %v997 = vadd.f32 %v927, %v991
    %v998 = vadd.f32 %v928, %v991
    %v999 = vadd.f32 %v929, %v991
    %v1000 = vadd.f32 %v930, %v991
    %v1001 = vadd.f32 %v931, %v991
    %v1002 = vadd.f32 %v932, %v991
    %v1003 = vadd.f32 %v933, %v991
    %v1004 = vadd.f32 %v934, %v991
    %v1005 = vadd.f32 %v935, %v991
    %v1006 = vadd.f32 %v936, %v991
    %v1007 = vadd.f32 %v937, %v991
    %v1008 = vadd.f32 %v938, %v991
    %v1009 = vadd.f32 %v939, %v991
    %v1010 = vadd.f32 %v940, %v991
    %v1011 = vadd.f32 %v941, %v991
    %v1012 = vadd.f32 %v942, %v991
    %v1013 = vadd.f32 %v943, %v991
    %v1014 = vadd.f32 %v944, %v991
    %v1015 = vadd.f32 %v945, %v991
    %v1016 = vadd.f32 %v946, %v991
    %v1017 = vadd.f32 %v947, %v991
    %v1018 = vadd.f32 %v948, %v991
    %v1019 = vadd.f32 %v949, %v991
    %v1020 = vadd.f32 %v950, %v991
    %v1021 = vadd.f32 %v951, %v991
    %v1022 = vadd.f32 %v952, %v991
    %v1023 = vadd.f32 %v953, %v991
    %v1024 = vadd.f32 %v954, %v991
    %v1025 = vadd.f32 %v955, %v991
    %v1026 = vadd.f32 %v956, %v991
    %v1027 = vadd.f32 %v957, %v991
    %v1028 = vadd.f32 %v958, %v991
    %v1029 = vadd.f32 %v959, %v991
    %v1030 = vadd.f32 %v960, %v991
    %v1031 = vadd.f32 %v961, %v991
    %v1032 = vadd.f32 %v962, %v991
    %v1033 = vadd.f32 %v963, %v991
    %v1034 = vadd.f32 %v964, %v991
    %v1035 = vadd.f32 %v965, %v991
    %v1036 = vadd.f32 %v966, %v991
    %v1037 = vadd.f32 %v967, %v991
    %v1038 = vadd.f32 %v968, %v991
    %v1039 = vadd.f32 %v969, %v991
    %v1040 = vadd.f32 %v970, %v991
    %v1041 = vadd.f32 %v971, %v991
    %v1042 = vadd.f32 %v972, %v991
    %v1043 = vadd.f32 %v973, %v991
    %v1044 = vadd.f32 %v974, %v991
    %v1045 = vadd.f32 %v975, %v991
    %v1046 = vadd.f32 %v976, %v991
    %v1047 = vadd.f32 %v977, %v991
    %v1048 = vadd.f32 %v978, %v991
    %v1049 = vadd.f32 %v979, %v991
    %v1050 = vadd.f32 %v980, %v991
    %v1051 = vadd.f32 %v981, %v991
    %v1052 = vadd.f32 %v982, %v991
    %v1053 = vadd.f32 %v983, %v991
    %v1054 = vadd.f32 %v984, %v991
    %v1055 = vadd.f32 %v985, %v991
    %v1056 = vadd.f32 %v986, %v991
    %v1057 = vmax.f32 %v993, 0.0
    %v1058 = vmax.f32 %v994, 0.0
    %v1059 = vmax.f32 %v995, 0.0
    %v1060 = vmax.f32 %v996, 0.0
    %v1061 = vmax.f32 %v997, 0.0
    %v1062 = vmax.f32 %v998, 0.0
    %v1063 = vmax.f32 %v999, 0.0
    %v1064 = vmax.f32 %v1000, 0.0
    %v1065 = vmax.f32 %v1001, 0.0
    %v1066 = vmax.f32 %v1002, 0.0
    %v1067 = vmax.f32 %v1003, 0.0
    %v1068 = vmax.f32 %v1004, 0.0
    %v1069 = vmax.f32 %v1005, 0.0
    %v1070 = vmax.f32 %v1006, 0.0
    %v1071 = vmax.f32 %v1007, 0.0
    %v1072 = vmax.f32 %v1008, 0.0
    %v1073 = vmax.f32 %v1009, 0.0
    %v1074 = vmax.f32 %v1010, 0.0
    %v1075 = vmax.f32 %v1011, 0.0
    %v1076 = vmax.f32 %v1012, 0.0
    %v1077 = vmax.f32 %v1013, 0.0
    %v1078 = vmax.f32 %v1014, 0.0
    %v1079 = vmax.f32 %v1015, 0.0
    %v1080 = vmax.f32 %v1016, 0.0
    %v1081 = vmax.f32 %v1017, 0.0
    %v1082 = vmax.f32 %v1018, 0.0
    %v1083 = vmax.f32 %v1019, 0.0
    %v1084 = vmax.f32 %v1020, 0.0
    %v1085 = vmax.f32 %v1021, 0.0
    %v1086 = vmax.f32 %v1022, 0.0
    %v1087 = vmax.f32 %v1023, 0.0
    %v1088 = vmax.f32 %v1024, 0.0
    %v1089 = vmax.f32 %v1025, 0.0
    %v1090 = vmax.f32 %v1026, 0.0
    %v1091 = vmax.f32 %v1027, 0.0
    %v1092 = vmax.f32 %v1028, 0.0
    %v1093 = vmax.f32 %v1029, 0.0
    %v1094 = vmax.f32 %v1030, 0.0
    %v1095 = vmax.f32 %v1031, 0.0
    %v1096 = vmax.f32 %v1032, 0.0
    %v1097 = vmax.f32 %v1033, 0.0
    %v1098 = vmax.f32 %v1034, 0.0
    %v1099 = vmax.f32 %v1035, 0.0
    %v1100 = vmax.f32 %v1036, 0.0
    %v1101 = vmax.f32 %v1037, 0.0
    %v1102 = vmax.f32 %v1038, 0.0
    %v1103 = vmax.f32 %v1039, 0.0
    %v1104 = vmax.f32 %v1040, 0.0
    %v1105 = vmax.f32 %v1041, 0.0
    %v1106 = vmax.f32 %v1042, 0.0
    %v1107 = vmax.f32 %v1043, 0.0
    %v1108 = vmax.f32 %v1044, 0.0
    %v1109 = vmax.f32 %v1045, 0.0
    %v1110 = vmax.f32 %v1046, 0.0
    %v1111 = vmax.f32 %v1047, 0.0
    %v1112 = vmax.f32 %v1048, 0.0
    %v1113 = vmax.f32 %v1049, 0.0
    %v1114 = vmax.f32 %v1050, 0.0
    %v1115 = vmax.f32 %v1051, 0.0
    %v1116 = vmax.f32 %v1052, 0.0
    %v1117 = vmax.f32 %v1053, 0.0
    %v1118 = vmax.f32 %v1054, 0.0
    %v1119 = vmax.f32 %v1055, 0.0
    %v1120 = vmax.f32 %v1056, 0.0
    %1121 = vst [vmem:[#allocation2] sm:$0xff] 0.0
    %1122 = vst [vmem:[#allocation2 + $0x8] sm:$0x3] 0.0
    %1123 = vst [vmem:[#allocation2 + $0xa0] sm:$0xff] 0.0
    %1124 = vst [vmem:[#allocation2 + $0xa8] sm:$0x3] 0.0
    %1125 = vst [vmem:[#allocation2 + $0x140] sm:$0xff] 0.0
    %1126 = vst [vmem:[#allocation2 + $0x148] sm:$0x3] 0.0
    %1127 = vst [vmem:[#allocation2 + $0x1e0] sm:$0xff] 0.0
    %1128 = vst [vmem:[#allocation2 + $0x1e8] sm:$0x3] 0.0
    %1129 = vst [vmem:[#allocation2 + $0x280] sm:$0xff] 0.0
    %1130 = vst [vmem:[#allocation2 + $0x288] sm:$0x3] 0.0
    %1131 = vst [vmem:[#allocation2 + $0x320] sm:$0xff] 0.0
    %1132 = vst [vmem:[#allocation2 + $0x328] sm:$0x3] 0.0
    %1133 = vst [vmem:[#allocation2 + $0x3c0] sm:$0xff] 0.0
    %1134 = vst [vmem:[#allocation2 + $0x3c8] sm:$0x3] 0.0
    %1135 = vst [vmem:[#allocation2 + $0x460] sm:$0xff] 0.0
    %1136 = vst [vmem:[#allocation2 + $0x468] sm:$0x3] 0.0
    %s1137 = scalar_lea.vmem [#allocation2], 144
    %1138 = vst [vmem:[%s1137] sm:$0xff] 0.0
    %1139 = vst [vmem:[%s1137 + $0x8] sm:$0x3] 0.0
    %1140 = vst [vmem:[%s1137 + $0xa0] sm:$0xff] 0.0
    %1141 = vst [vmem:[%s1137 + $0xa8] sm:$0x3] 0.0
    %1142 = vst [vmem:[%s1137 + $0x140] sm:$0xff] 0.0
    %1143 = vst [vmem:[%s1137 + $0x148] sm:$0x3] 0.0
    %1144 = vst [vmem:[%s1137 + $0x1e0] sm:$0xff] 0.0
    %1145 = vst [vmem:[%s1137 + $0x1e8] sm:$0x3] 0.0
    %1146 = vst [vmem:[%s1137 + $0x280] sm:$0xff] 0.0
    %1147 = vst [vmem:[%s1137 + $0x288] sm:$0x3] 0.0
    %1148 = vst [vmem:[%s1137 + $0x320] sm:$0xff] 0.0
    %1149 = vst [vmem:[%s1137 + $0x328] sm:$0x3] 0.0
    %1150 = vst [vmem:[%s1137 + $0x3c0] sm:$0xff] 0.0
    %1151 = vst [vmem:[%s1137 + $0x3c8] sm:$0x3] 0.0
    %1152 = vst [vmem:[%s1137 + $0x460] sm:$0xff] 0.0
    %1153 = vst [vmem:[%s1137 + $0x468] sm:$0x3] 0.0
    %1154 = vst [vmem:[#allocation2] sm:$0x1] 0.0
    %1155 = vst [vmem:[#allocation2 + $0x10] sm:$0x1] 0.0
    %1156 = vst [vmem:[#allocation2 + $0x20] sm:$0x1] 0.0
    %1157 = vst [vmem:[#allocation2 + $0x30] sm:$0x1] 0.0
    %1158 = vst [vmem:[#allocation2 + $0x40] sm:$0x1] 0.0
    %1159 = vst [vmem:[#allocation2 + $0x50] sm:$0x1] 0.0
    %1160 = vst [vmem:[#allocation2 + $0x60] sm:$0x1] 0.0
    %1161 = vst [vmem:[#allocation2 + $0x70] sm:$0x1] 0.0
    %1162 = vst [vmem:[#allocation2 + $0x80] sm:$0x1] 0.0
    %1163 = vst [vmem:[#allocation2 + $0x90] sm:$0x1] 0.0
    %1164 = vst [vmem:[#allocation2 + $0xa0] sm:$0x1] 0.0
    %1165 = vst [vmem:[#allocation2 + $0xb0] sm:$0x1] 0.0
    %1166 = vst [vmem:[#allocation2 + $0xc0] sm:$0x1] 0.0
    %1167 = vst [vmem:[#allocation2 + $0xd0] sm:$0x1] 0.0
    %1168 = vst [vmem:[#allocation2 + $0xe0] sm:$0x1] 0.0
    %1169 = vst [vmem:[#allocation2 + $0xf0] sm:$0x1] 0.0
    %1170 = vst [vmem:[#allocation2 + $0x100] sm:$0x1] 0.0
    %1171 = vst [vmem:[#allocation2 + $0x110] sm:$0x1] 0.0
    %1172 = vst [vmem:[#allocation2 + $0x120] sm:$0x1] 0.0
    %1173 = vst [vmem:[#allocation2 + $0x130] sm:$0x1] 0.0
    %1174 = vst [vmem:[#allocation2 + $0x140] sm:$0x1] 0.0
    %1175 = vst [vmem:[#allocation2 + $0x150] sm:$0x1] 0.0
    %1176 = vst [vmem:[#allocation2 + $0x160] sm:$0x1] 0.0
    %1177 = vst [vmem:[#allocation2 + $0x170] sm:$0x1] 0.0
    %1178 = vst [vmem:[#allocation2 + $0x180] sm:$0x1] 0.0
    %1179 = vst [vmem:[#allocation2 + $0x190] sm:$0x1] 0.0
    %1180 = vst [vmem:[#allocation2 + $0x1a0] sm:$0x1] 0.0
    %1181 = vst [vmem:[#allocation2 + $0x1b0] sm:$0x1] 0.0
    %1182 = vst [vmem:[#allocation2 + $0x1c0] sm:$0x1] 0.0
    %1183 = vst [vmem:[#allocation2 + $0x1d0] sm:$0x1] 0.0
    %1184 = vst [vmem:[#allocation2 + $0x1e0] sm:$0x1] 0.0
    %1185 = vst [vmem:[#allocation2 + $0x1f0] sm:$0x1] 0.0
    %1186 = vst [vmem:[#allocation2 + $0x200] sm:$0x1] 0.0
    %1187 = vst [vmem:[#allocation2 + $0x210] sm:$0x1] 0.0
    %1188 = vst [vmem:[#allocation2 + $0x220] sm:$0x1] 0.0
    %1189 = vst [vmem:[#allocation2 + $0x230] sm:$0x1] 0.0
    %1190 = vst [vmem:[#allocation2 + $0x240] sm:$0x1] 0.0
    %1191 = vst [vmem:[#allocation2 + $0x250] sm:$0x1] 0.0
    %1192 = vst [vmem:[#allocation2 + $0x260] sm:$0x1] 0.0
    %1193 = vst [vmem:[#allocation2 + $0x270] sm:$0x1] 0.0
    %1194 = vst [vmem:[#allocation2 + $0x280] sm:$0x1] 0.0
    %1195 = vst [vmem:[#allocation2 + $0x290] sm:$0x1] 0.0
    %1196 = vst [vmem:[#allocation2 + $0x2a0] sm:$0x1] 0.0
    %1197 = vst [vmem:[#allocation2 + $0x2b0] sm:$0x1] 0.0
    %1198 = vst [vmem:[#allocation2 + $0x2c0] sm:$0x1] 0.0
    %1199 = vst [vmem:[#allocation2 + $0x2d0] sm:$0x1] 0.0
    %1200 = vst [vmem:[#allocation2 + $0x2e0] sm:$0x1] 0.0
    %1201 = vst [vmem:[#allocation2 + $0x2f0] sm:$0x1] 0.0
    %1202 = vst [vmem:[#allocation2 + $0x300] sm:$0x1] 0.0
    %1203 = vst [vmem:[#allocation2 + $0x310] sm:$0x1] 0.0
    %1204 = vst [vmem:[#allocation2 + $0x320] sm:$0x1] 0.0
    %1205 = vst [vmem:[#allocation2 + $0x330] sm:$0x1] 0.0
    %1206 = vst [vmem:[#allocation2 + $0x340] sm:$0x1] 0.0
    %1207 = vst [vmem:[#allocation2 + $0x350] sm:$0x1] 0.0
    %1208 = vst [vmem:[#allocation2 + $0x360] sm:$0x1] 0.0
    %1209 = vst [vmem:[#allocation2 + $0x370] sm:$0x1] 0.0
    %1210 = vst [vmem:[#allocation2 + $0x380] sm:$0x1] 0.0
    %1211 = vst [vmem:[#allocation2 + $0x390] sm:$0x1] 0.0
    %1212 = vst [vmem:[#allocation2 + $0x3a0] sm:$0x1] 0.0
    %1213 = vst [vmem:[#allocation2 + $0x3b0] sm:$0x1] 0.0
    %1214 = vst [vmem:[#allocation2 + $0x3c0] sm:$0x1] 0.0
    %1215 = vst [vmem:[#allocation2 + $0x3d0] sm:$0x1] 0.0
    %1216 = vst [vmem:[#allocation2 + $0x3e0] sm:$0x1] 0.0
    %1217 = vst [vmem:[#allocation2 + $0x3f0] sm:$0x1] 0.0
    %1218 = vst [vmem:[#allocation2 + $0x400] sm:$0x1] 0.0
    %1219 = vst [vmem:[#allocation2 + $0x410] sm:$0x1] 0.0
    %1220 = vst [vmem:[#allocation2 + $0x420] sm:$0x1] 0.0
    %1221 = vst [vmem:[#allocation2 + $0x430] sm:$0x1] 0.0
    %1222 = vst [vmem:[#allocation2 + $0x440] sm:$0x1] 0.0
    %1223 = vst [vmem:[#allocation2 + $0x450] sm:$0x1] 0.0
    %1224 = vst [vmem:[#allocation2 + $0x460] sm:$0x1] 0.0
    %1225 = vst [vmem:[#allocation2 + $0x470] sm:$0x1] 0.0
    %1226 = vst [vmem:[#allocation2 + $0x480] sm:$0x1] 0.0
    %1227 = vst [vmem:[#allocation2 + $0x490] sm:$0x1] 0.0
    %1228 = vst [vmem:[#allocation2 + $0x4a0] sm:$0x1] 0.0
    %1229 = vst [vmem:[#allocation2 + $0x4b0] sm:$0x1] 0.0
    %1230 = vst [vmem:[#allocation2 + $0x4c0] sm:$0x1] 0.0
    %1231 = vst [vmem:[#allocation2 + $0x4d0] sm:$0x1] 0.0
    %1232 = vst [vmem:[#allocation2 + $0x4e0] sm:$0x1] 0.0
    %1233 = vst [vmem:[#allocation2 + $0x4f0] sm:$0x1] 0.0
    %1234 = vst [vmem:[#allocation2 + $0x9] sm:$0x1] 0.0
    %1235 = vst [vmem:[#allocation2 + $0x19] sm:$0x1] 0.0
    %1236 = vst [vmem:[#allocation2 + $0x29] sm:$0x1] 0.0
    %1237 = vst [vmem:[#allocation2 + $0x39] sm:$0x1] 0.0
    %1238 = vst [vmem:[#allocation2 + $0x49] sm:$0x1] 0.0
    %1239 = vst [vmem:[#allocation2 + $0x59] sm:$0x1] 0.0
    %1240 = vst [vmem:[#allocation2 + $0x69] sm:$0x1] 0.0
    %1241 = vst [vmem:[#allocation2 + $0x79] sm:$0x1] 0.0
    %1242 = vst [vmem:[#allocation2 + $0x89] sm:$0x1] 0.0
    %1243 = vst [vmem:[#allocation2 + $0x99] sm:$0x1] 0.0
    %1244 = vst [vmem:[#allocation2 + $0xa9] sm:$0x1] 0.0
    %1245 = vst [vmem:[#allocation2 + $0xb9] sm:$0x1] 0.0
    %1246 = vst [vmem:[#allocation2 + $0xc9] sm:$0x1] 0.0
    %1247 = vst [vmem:[#allocation2 + $0xd9] sm:$0x1] 0.0
    %1248 = vst [vmem:[#allocation2 + $0xe9] sm:$0x1] 0.0
    %1249 = vst [vmem:[#allocation2 + $0xf9] sm:$0x1] 0.0
    %1250 = vst [vmem:[#allocation2 + $0x109] sm:$0x1] 0.0
    %1251 = vst [vmem:[#allocation2 + $0x119] sm:$0x1] 0.0
    %1252 = vst [vmem:[#allocation2 + $0x129] sm:$0x1] 0.0
    %1253 = vst [vmem:[#allocation2 + $0x139] sm:$0x1] 0.0
    %1254 = vst [vmem:[#allocation2 + $0x149] sm:$0x1] 0.0
    %1255 = vst [vmem:[#allocation2 + $0x159] sm:$0x1] 0.0
    %1256 = vst [vmem:[#allocation2 + $0x169] sm:$0x1] 0.0
    %1257 = vst [vmem:[#allocation2 + $0x179] sm:$0x1] 0.0
    %1258 = vst [vmem:[#allocation2 + $0x189] sm:$0x1] 0.0
    %1259 = vst [vmem:[#allocation2 + $0x199] sm:$0x1] 0.0
    %1260 = vst [vmem:[#allocation2 + $0x1a9] sm:$0x1] 0.0
    %1261 = vst [vmem:[#allocation2 + $0x1b9] sm:$0x1] 0.0
    %1262 = vst [vmem:[#allocation2 + $0x1c9] sm:$0x1] 0.0
    %1263 = vst [vmem:[#allocation2 + $0x1d9] sm:$0x1] 0.0
    %1264 = vst [vmem:[#allocation2 + $0x1e9] sm:$0x1] 0.0
    %1265 = vst [vmem:[#allocation2 + $0x1f9] sm:$0x1] 0.0
    %1266 = vst [vmem:[#allocation2 + $0x209] sm:$0x1] 0.0
    %1267 = vst [vmem:[#allocation2 + $0x219] sm:$0x1] 0.0
    %1268 = vst [vmem:[#allocation2 + $0x229] sm:$0x1] 0.0
    %1269 = vst [vmem:[#allocation2 + $0x239] sm:$0x1] 0.0
    %1270 = vst [vmem:[#allocation2 + $0x249] sm:$0x1] 0.0
    %1271 = vst [vmem:[#allocation2 + $0x259] sm:$0x1] 0.0
    %1272 = vst [vmem:[#allocation2 + $0x269] sm:$0x1] 0.0
    %1273 = vst [vmem:[#allocation2 + $0x279] sm:$0x1] 0.0
    %1274 = vst [vmem:[#allocation2 + $0x289] sm:$0x1] 0.0
    %1275 = vst [vmem:[#allocation2 + $0x299] sm:$0x1] 0.0
    %1276 = vst [vmem:[#allocation2 + $0x2a9] sm:$0x1] 0.0
    %1277 = vst [vmem:[#allocation2 + $0x2b9] sm:$0x1] 0.0
    %1278 = vst [vmem:[#allocation2 + $0x2c9] sm:$0x1] 0.0
    %1279 = vst [vmem:[#allocation2 + $0x2d9] sm:$0x1] 0.0
    %1280 = vst [vmem:[#allocation2 + $0x2e9] sm:$0x1] 0.0
    %1281 = vst [vmem:[#allocation2 + $0x2f9] sm:$0x1] 0.0
    %1282 = vst [vmem:[#allocation2 + $0x309] sm:$0x1] 0.0
    %1283 = vst [vmem:[#allocation2 + $0x319] sm:$0x1] 0.0
    %1284 = vst [vmem:[#allocation2 + $0x329] sm:$0x1] 0.0
    %1285 = vst [vmem:[#allocation2 + $0x339] sm:$0x1] 0.0
    %1286 = vst [vmem:[#allocation2 + $0x349] sm:$0x1] 0.0
    %1287 = vst [vmem:[#allocation2 + $0x359] sm:$0x1] 0.0
    %1288 = vst [vmem:[#allocation2 + $0x369] sm:$0x1] 0.0
    %1289 = vst [vmem:[#allocation2 + $0x379] sm:$0x1] 0.0
    %1290 = vst [vmem:[#allocation2 + $0x389] sm:$0x1] 0.0
    %1291 = vst [vmem:[#allocation2 + $0x399] sm:$0x1] 0.0
    %1292 = vst [vmem:[#allocation2 + $0x3a9] sm:$0x1] 0.0
    %1293 = vst [vmem:[#allocation2 + $0x3b9] sm:$0x1] 0.0
    %1294 = vst [vmem:[#allocation2 + $0x3c9] sm:$0x1] 0.0
    %1295 = vst [vmem:[#allocation2 + $0x3d9] sm:$0x1] 0.0
    %1296 = vst [vmem:[#allocation2 + $0x3e9] sm:$0x1] 0.0
    %1297 = vst [vmem:[#allocation2 + $0x3f9] sm:$0x1] 0.0
    %1298 = vst [vmem:[#allocation2 + $0x409] sm:$0x1] 0.0
    %1299 = vst [vmem:[#allocation2 + $0x419] sm:$0x1] 0.0
    %1300 = vst [vmem:[#allocation2 + $0x429] sm:$0x1] 0.0
    %1301 = vst [vmem:[#allocation2 + $0x439] sm:$0x1] 0.0
    %1302 = vst [vmem:[#allocation2 + $0x449] sm:$0x1] 0.0
    %1303 = vst [vmem:[#allocation2 + $0x459] sm:$0x1] 0.0
    %1304 = vst [vmem:[#allocation2 + $0x469] sm:$0x1] 0.0
    %1305 = vst [vmem:[#allocation2 + $0x479] sm:$0x1] 0.0
    %1306 = vst [vmem:[#allocation2 + $0x489] sm:$0x1] 0.0
    %1307 = vst [vmem:[#allocation2 + $0x499] sm:$0x1] 0.0
    %1308 = vst [vmem:[#allocation2 + $0x4a9] sm:$0x1] 0.0
    %1309 = vst [vmem:[#allocation2 + $0x4b9] sm:$0x1] 0.0
    %1310 = vst [vmem:[#allocation2 + $0x4c9] sm:$0x1] 0.0
    %1311 = vst [vmem:[#allocation2 + $0x4d9] sm:$0x1] 0.0
    %1312 = vst [vmem:[#allocation2 + $0x4e9] sm:$0x1] 0.0
    %1313 = vst [vmem:[#allocation2 + $0x4f9] sm:$0x1] 0.0
    %s1314 = scalar_lea.vmem [#allocation2], 16
    %1315 = vst [vmem:[%s1314 + $0x1] sm:$0xff] %v1057
    %1316 = vst [vmem:[%s1314 + $0x11] sm:$0xff] %v1058
    %1317 = vst [vmem:[%s1314 + $0x21] sm:$0xff] %v1059
    %1318 = vst [vmem:[%s1314 + $0x31] sm:$0xff] %v1060
    %1319 = vst [vmem:[%s1314 + $0x41] sm:$0xff] %v1061
    %1320 = vst [vmem:[%s1314 + $0x51] sm:$0xff] %v1062
    %1321 = vst [vmem:[%s1314 + $0x61] sm:$0xff] %v1063
    %1322 = vst [vmem:[%s1314 + $0x71] sm:$0xff] %v1064
    %1323 = vst [vmem:[%s1314 + $0xa1] sm:$0xff] %v1065
    %1324 = vst [vmem:[%s1314 + $0xb1] sm:$0xff] %v1066
    %1325 = vst [vmem:[%s1314 + $0xc1] sm:$0xff] %v1067
    %1326 = vst [vmem:[%s1314 + $0xd1] sm:$0xff] %v1068
    %1327 = vst [vmem:[%s1314 + $0xe1] sm:$0xff] %v1069
    %1328 = vst [vmem:[%s1314 + $0xf1] sm:$0xff] %v1070
    %1329 = vst [vmem:[%s1314 + $0x101] sm:$0xff] %v1071
    %1330 = vst [vmem:[%s1314 + $0x111] sm:$0xff] %v1072
    %1331 = vst [vmem:[%s1314 + $0x141] sm:$0xff] %v1073
    %1332 = vst [vmem:[%s1314 + $0x151] sm:$0xff] %v1074
    %1333 = vst [vmem:[%s1314 + $0x161] sm:$0xff] %v1075
    %1334 = vst [vmem:[%s1314 + $0x171] sm:$0xff] %v1076
    %1335 = vst [vmem:[%s1314 + $0x181] sm:$0xff] %v1077
    %1336 = vst [vmem:[%s1314 + $0x191] sm:$0xff] %v1078
    %1337 = vst [vmem:[%s1314 + $0x1a1] sm:$0xff] %v1079
    %1338 = vst [vmem:[%s1314 + $0x1b1] sm:$0xff] %v1080
    %1339 = vst [vmem:[%s1314 + $0x1e1] sm:$0xff] %v1081
    %1340 = vst [vmem:[%s1314 + $0x1f1] sm:$0xff] %v1082
    %1341 = vst [vmem:[%s1314 + $0x201] sm:$0xff] %v1083
    %1342 = vst [vmem:[%s1314 + $0x211] sm:$0xff] %v1084
    %1343 = vst [vmem:[%s1314 + $0x221] sm:$0xff] %v1085
    %1344 = vst [vmem:[%s1314 + $0x231] sm:$0xff] %v1086
    %1345 = vst [vmem:[%s1314 + $0x241] sm:$0xff] %v1087
    %1346 = vst [vmem:[%s1314 + $0x251] sm:$0xff] %v1088
    %1347 = vst [vmem:[%s1314 + $0x281] sm:$0xff] %v1089
    %1348 = vst [vmem:[%s1314 + $0x291] sm:$0xff] %v1090
    %1349 = vst [vmem:[%s1314 + $0x2a1] sm:$0xff] %v1091
    %1350 = vst [vmem:[%s1314 + $0x2b1] sm:$0xff] %v1092
    %1351 = vst [vmem:[%s1314 + $0x2c1] sm:$0xff] %v1093
    %1352 = vst [vmem:[%s1314 + $0x2d1] sm:$0xff] %v1094
    %1353 = vst [vmem:[%s1314 + $0x2e1] sm:$0xff] %v1095
    %1354 = vst [vmem:[%s1314 + $0x2f1] sm:$0xff] %v1096
    %1355 = vst [vmem:[%s1314 + $0x321] sm:$0xff] %v1097
    %1356 = vst [vmem:[%s1314 + $0x331] sm:$0xff] %v1098
    %1357 = vst [vmem:[%s1314 + $0x341] sm:$0xff] %v1099
    %1358 = vst [vmem:[%s1314 + $0x351] sm:$0xff] %v1100
    %1359 = vst [vmem:[%s1314 + $0x361] sm:$0xff] %v1101
    %1360 = vst [vmem:[%s1314 + $0x371] sm:$0xff] %v1102
    %1361 = vst [vmem:[%s1314 + $0x381] sm:$0xff] %v1103
    %1362 = vst [vmem:[%s1314 + $0x391] sm:$0xff] %v1104
    %1363 = vst [vmem:[%s1314 + $0x3c1] sm:$0xff] %v1105
    %1364 = vst [vmem:[%s1314 + $0x3d1] sm:$0xff] %v1106
    %1365 = vst [vmem:[%s1314 + $0x3e1] sm:$0xff] %v1107
    %1366 = vst [vmem:[%s1314 + $0x3f1] sm:$0xff] %v1108
    %1367 = vst [vmem:[%s1314 + $0x401] sm:$0xff] %v1109
    %1368 = vst [vmem:[%s1314 + $0x411] sm:$0xff] %v1110
    %1369 = vst [vmem:[%s1314 + $0x421] sm:$0xff] %v1111
    %1370 = vst [vmem:[%s1314 + $0x431] sm:$0xff] %v1112
    %1371 = vst [vmem:[%s1314 + $0x461] sm:$0xff] %v1113
    %1372 = vst [vmem:[%s1314 + $0x471] sm:$0xff] %v1114
    %1373 = vst [vmem:[%s1314 + $0x481] sm:$0xff] %v1115
    %1374 = vst [vmem:[%s1314 + $0x491] sm:$0xff] %v1116
    %1375 = vst [vmem:[%s1314 + $0x4a1] sm:$0xff] %v1117
    %1376 = vst [vmem:[%s1314 + $0x4b1] sm:$0xff] %v1118
    %1377 = vst [vmem:[%s1314 + $0x4c1] sm:$0xff] %v1119
    %1378 = vst [vmem:[%s1314 + $0x4d1] sm:$0xff] %v1120
    %s1379 = scalar_lea.vmem [#allocation2], 960
    %v1380 = vld [vmem:[%s1379] sm:$0xff]
    %v1381 = vld [vmem:[%s1379 + $0x10] sm:$0xff]
    %v1382 = vld [vmem:[%s1379 + $0x20] sm:$0xff]
    %v1383 = vld [vmem:[%s1379 + $0x30] sm:$0xff]
    %v1384 = vld [vmem:[%s1379 + $0x40] sm:$0xff]
    %v1385 = vld [vmem:[%s1379 + $0x50] sm:$0xff]
    %v1386 = vld [vmem:[%s1379 + $0x60] sm:$0xff]
    %v1387 = vld [vmem:[%s1379 + $0x70] sm:$0xff]
    %v1388 = vld [vmem:[%s1379 + $0xa0] sm:$0xff]
    %v1389 = vld [vmem:[%s1379 + $0xb0] sm:$0xff]
    %v1390 = vld [vmem:[%s1379 + $0xc0] sm:$0xff]
    %v1391 = vld [vmem:[%s1379 + $0xd0] sm:$0xff]
    %v1392 = vld [vmem:[%s1379 + $0xe0] sm:$0xff]
    %v1393 = vld [vmem:[%s1379 + $0xf0] sm:$0xff]
    %v1394 = vld [vmem:[%s1379 + $0x100] sm:$0xff]
    %v1395 = vld [vmem:[%s1379 + $0x110] sm:$0xff]
    %v1396 = vld [vmem:[#allocation8] sm:$0xff]
    %v1397 = vld [vmem:[#allocation8 + $0x8] sm:$0xff]
    %v1398 = vld [vmem:[#allocation8 + $0x10] sm:$0xff]
    %v1399 = vld [vmem:[#allocation8 + $0x18] sm:$0xff]
    %v1400 = vld [vmem:[#allocation8 + $0x20] sm:$0xff]
    %v1401 = vld [vmem:[#allocation8 + $0x28] sm:$0xff]
    %v1402 = vld [vmem:[#allocation8 + $0x30] sm:$0xff]
    %v1403 = vld [vmem:[#allocation8 + $0x38] sm:$0xff]
    %v1404 = vld [vmem:[#allocation8 + $0x40] sm:$0xff]
    %v1405 = vld [vmem:[#allocation8 + $0x48] sm:$0xff]
    %v1406 = vld [vmem:[#allocation8 + $0x50] sm:$0xff]
    %v1407 = vld [vmem:[#allocation8 + $0x58] sm:$0xff]
    %v1408 = vld [vmem:[#allocation8 + $0x60] sm:$0xff]
    %v1409 = vld [vmem:[#allocation8 + $0x68] sm:$0xff]
    %v1410 = vld [vmem:[#allocation8 + $0x70] sm:$0xff]
    %v1411 = vld [vmem:[#allocation8 + $0x78] sm:$0xff]
    %s1412 = scalar_lea.vmem [#allocation2], 640
    %v1413 = vld [vmem:[%s1412 + $0x1] sm:$0xff]
    %v1414 = vld [vmem:[%s1412 + $0x11] sm:$0xff]
    %v1415 = vld [vmem:[%s1412 + $0x21] sm:$0xff]
    %v1416 = vld [vmem:[%s1412 + $0x31] sm:$0xff]
    %v1417 = vld [vmem:[%s1412 + $0x41] sm:$0xff]
    %v1418 = vld [vmem:[%s1412 + $0x51] sm:$0xff]
    %v1419 = vld [vmem:[%s1412 + $0x61] sm:$0xff]
    %v1420 = vld [vmem:[%s1412 + $0x71] sm:$0xff]
    %v1421 = vld [vmem:[%s1412 + $0xa1] sm:$0xff]
    %v1422 = vld [vmem:[%s1412 + $0xb1] sm:$0xff]
    %v1423 = vld [vmem:[%s1412 + $0xc1] sm:$0xff]
    %v1424 = vld [vmem:[%s1412 + $0xd1] sm:$0xff]
    %v1425 = vld [vmem:[%s1412 + $0xe1] sm:$0xff]
    %v1426 = vld [vmem:[%s1412 + $0xf1] sm:$0xff]
    %v1427 = vld [vmem:[%s1412 + $0x101] sm:$0xff]
    %v1428 = vld [vmem:[%s1412 + $0x111] sm:$0xff]
    %v1429 = vld [vmem:[#allocation8 + $0x80] sm:$0xff]
    %v1430 = vld [vmem:[#allocation8 + $0x88] sm:$0xff]
    %v1431 = vld [vmem:[#allocation8 + $0x90] sm:$0xff]
    %v1432 = vld [vmem:[#allocation8 + $0x98] sm:$0xff]
    %v1433 = vld [vmem:[#allocation8 + $0xa0] sm:$0xff]
    %v1434 = vld [vmem:[#allocation8 + $0xa8] sm:$0xff]
    %v1435 = vld [vmem:[#allocation8 + $0xb0] sm:$0xff]
    %v1436 = vld [vmem:[#allocation8 + $0xb8] sm:$0xff]
    %v1437 = vld [vmem:[#allocation8 + $0xc0] sm:$0xff]
    %v1438 = vld [vmem:[#allocation8 + $0xc8] sm:$0xff]
    %v1439 = vld [vmem:[#allocation8 + $0xd0] sm:$0xff]
    %v1440 = vld [vmem:[#allocation8 + $0xd8] sm:$0xff]
    %v1441 = vld [vmem:[#allocation8 + $0xe0] sm:$0xff]
    %v1442 = vld [vmem:[#allocation8 + $0xe8] sm:$0xff]
    %v1443 = vld [vmem:[#allocation8 + $0xf0] sm:$0xff]
    %v1444 = vld [vmem:[#allocation8 + $0xf8] sm:$0xff]
    %1445 = vmatprep.subr.mxu0 0.0
    %1446 = vmatpush1.msra.mxu0 %v1444
    %1447 = vmatprep.subr.mxu0 0.0
    %1448 = vmatpush1.msra.mxu0 %v1443
    %1449 = vmatprep.subr.mxu0 0.0
    %1450 = vmatpush1.msra.mxu0 %v1442
    %1451 = vmatprep.subr.mxu0 0.0
    %1452 = vmatpush1.msra.mxu0 %v1441
    %1453 = vmatprep.subr.mxu0 0.0
    %1454 = vmatpush1.msra.mxu0 %v1440
    %1455 = vmatprep.subr.mxu0 0.0
    %1456 = vmatpush1.msra.mxu0 %v1439
    %1457 = vmatprep.subr.mxu0 0.0
    %1458 = vmatpush1.msra.mxu0 %v1438
    %1459 = vmatprep.subr.mxu0 0.0
    %1460 = vmatpush1.msra.mxu0 %v1437
    %1461 = vmatprep.subr.mxu0 0.0
    %1462 = vmatpush1.msra.mxu0 %v1436
    %1463 = vmatprep.subr.mxu0 0.0
    %1464 = vmatpush1.msra.mxu0 %v1435
    %1465 = vmatprep.subr.mxu0 0.0
    %1466 = vmatpush1.msra.mxu0 %v1434
    %1467 = vmatprep.subr.mxu0 0.0
    %1468 = vmatpush1.msra.mxu0 %v1433
    %1469 = vmatprep.subr.mxu0 0.0
    %1470 = vmatpush1.msra.mxu0 %v1432
    %1471 = vmatprep.subr.mxu0 0.0
    %1472 = vmatpush1.msra.mxu0 %v1431
    %1473 = vmatprep.subr.mxu0 0.0
    %1474 = vmatpush1.msra.mxu0 %v1430
    %1475 = vmatprep.subr.mxu0 0.0
    %1476 = vmatpush1.msra.mxu0 %v1429
    %1477 = vmatprep.subr.mxu0 0.0
    %1478 = vmatpush2.msra.mxu0 0.0
    %1479 = vmatprep.subr.mxu0 0.0
    %1480 = vmatpush2.msra.mxu0 0.0
    %1481 = vmatprep.subr.mxu0 0.0
    %1482 = vmatpush2.msra.mxu0 0.0
    %1483 = vmatprep.subr.mxu0 0.0
    %1484 = vmatpush2.msra.mxu0 0.0
    %1485 = vmatprep.subr.mxu0 0.0
    %1486 = vmatpush2.msra.mxu0 0.0
    %1487 = vmatprep.subr.mxu0 0.0
    %1488 = vmatpush2.msra.mxu0 0.0
    %1489 = vmatprep.subr.mxu0 0.0
    %1490 = vmatpush2.msra.mxu0 0.0
    %1491 = vmatprep.subr.mxu0 0.0
    %1492 = vmatpush2.msra.mxu0 0.0
    %1493 = vmatprep.subr.mxu0 0.0
    %1494 = vmatpush2.msra.mxu0 0.0
    %1495 = vmatprep.subr.mxu0 0.0
    %1496 = vmatpush2.msra.mxu0 0.0
    %1497 = vmatprep.subr.mxu0 0.0
    %1498 = vmatpush2.msra.mxu0 0.0
    %1499 = vmatprep.subr.mxu0 0.0
    %1500 = vmatpush2.msra.mxu0 0.0
    %1501 = vmatprep.subr.mxu0 0.0
    %1502 = vmatpush2.msra.mxu0 0.0
    %1503 = vmatprep.subr.mxu0 0.0
    %1504 = vmatpush2.msra.mxu0 0.0
    %1505 = vmatprep.subr.mxu0 0.0
    %1506 = vmatpush2.msra.mxu0 0.0
    %1507 = vmatprep.subr.mxu0 0.0
    %1508 = vmatpush2.msra.mxu0 0.0
    %1509 = vmatprep.mubr.f32.mxu0 0.0
    %1510 = vmatmul.mubr.f32.gmra.mxu0 %v1413
    %v1511 = vpop.f32.mrf.mxu0
    %v1512 = vadd.f32 0.0, %v1511
    %v1513 = vpop.f32.mrf.mxu0
    %1514 = vmatprep.mubr.f32.mxu0 0.0
    %1515 = vmatmul.mubr.f32.gmra.mxu0 %v1414
    %v1516 = vpop.f32.mrf.mxu0
    %v1517 = vadd.f32 0.0, %v1516
    %v1518 = vpop.f32.mrf.mxu0
    %1519 = vmatprep.mubr.f32.mxu0 0.0
    %1520 = vmatmul.mubr.f32.gmra.mxu0 %v1415
    %v1521 = vpop.f32.mrf.mxu0
    %v1522 = vadd.f32 0.0, %v1521
    %v1523 = vpop.f32.mrf.mxu0
    %1524 = vmatprep.mubr.f32.mxu0 0.0
    %1525 = vmatmul.mubr.f32.gmra.mxu0 %v1416
    %v1526 = vpop.f32.mrf.mxu0
    %v1527 = vadd.f32 0.0, %v1526
    %v1528 = vpop.f32.mrf.mxu0
    %1529 = vmatprep.mubr.f32.mxu0 0.0
    %1530 = vmatmul.mubr.f32.gmra.mxu0 %v1417
    %v1531 = vpop.f32.mrf.mxu0
    %v1532 = vadd.f32 0.0, %v1531
    %v1533 = vpop.f32.mrf.mxu0
    %1534 = vmatprep.mubr.f32.mxu0 0.0
    %1535 = vmatmul.mubr.f32.gmra.mxu0 %v1418
    %v1536 = vpop.f32.mrf.mxu0
    %v1537 = vadd.f32 0.0, %v1536
    %v1538 = vpop.f32.mrf.mxu0
    %1539 = vmatprep.mubr.f32.mxu0 0.0
    %1540 = vmatmul.mubr.f32.gmra.mxu0 %v1419
    %v1541 = vpop.f32.mrf.mxu0
    %v1542 = vadd.f32 0.0, %v1541
    %v1543 = vpop.f32.mrf.mxu0
    %1544 = vmatprep.mubr.f32.mxu0 0.0
    %1545 = vmatmul.mubr.f32.gmra.mxu0 %v1420
    %v1546 = vpop.f32.mrf.mxu0
    %v1547 = vadd.f32 0.0, %v1546
    %v1548 = vpop.f32.mrf.mxu0
    %1549 = vmatprep.mubr.f32.mxu0 0.0
    %1550 = vmatmul.mubr.f32.gmra.mxu0 %v1421
    %v1551 = vpop.f32.mrf.mxu0
    %v1552 = vadd.f32 0.0, %v1551
    %v1553 = vpop.f32.mrf.mxu0
    %1554 = vmatprep.mubr.f32.mxu0 0.0
    %1555 = vmatmul.mubr.f32.gmra.mxu0 %v1422
    %v1556 = vpop.f32.mrf.mxu0
    %v1557 = vadd.f32 0.0, %v1556
    %v1558 = vpop.f32.mrf.mxu0
    %1559 = vmatprep.mubr.f32.mxu0 0.0
    %1560 = vmatmul.mubr.f32.gmra.mxu0 %v1423
    %v1561 = vpop.f32.mrf.mxu0
    %v1562 = vadd.f32 0.0, %v1561
    %v1563 = vpop.f32.mrf.mxu0
    %1564 = vmatprep.mubr.f32.mxu0 0.0
    %1565 = vmatmul.mubr.f32.gmra.mxu0 %v1424
    %v1566 = vpop.f32.mrf.mxu0
    %v1567 = vadd.f32 0.0, %v1566
    %v1568 = vpop.f32.mrf.mxu0
    %1569 = vmatprep.mubr.f32.mxu0 0.0
    %1570 = vmatmul.mubr.f32.gmra.mxu0 %v1425
    %v1571 = vpop.f32.mrf.mxu0
    %v1572 = vadd.f32 0.0, %v1571
    %v1573 = vpop.f32.mrf.mxu0
    %1574 = vmatprep.mubr.f32.mxu0 0.0
    %1575 = vmatmul.mubr.f32.gmra.mxu0 %v1426
    %v1576 = vpop.f32.mrf.mxu0
    %v1577 = vadd.f32 0.0, %v1576
    %v1578 = vpop.f32.mrf.mxu0
    %1579 = vmatprep.mubr.f32.mxu0 0.0
    %1580 = vmatmul.mubr.f32.gmra.mxu0 %v1427
    %v1581 = vpop.f32.mrf.mxu0
    %v1582 = vadd.f32 0.0, %v1581
    %v1583 = vpop.f32.mrf.mxu0
    %1584 = vmatprep.mubr.f32.mxu0 0.0
    %1585 = vmatmul.mubr.f32.gmra.mxu0 %v1428
    %v1586 = vpop.f32.mrf.mxu0
    %v1587 = vadd.f32 0.0, %v1586
    %v1588 = vpop.f32.mrf.mxu0
    %1589 = vdwg.mxu0
    %1590 = vmatprep.subr.mxu0 0.0
    %1591 = vmatpush1.msra.mxu0 %v1411
    %1592 = vmatprep.subr.mxu0 0.0
    %1593 = vmatpush1.msra.mxu0 %v1410
    %1594 = vmatprep.subr.mxu0 0.0
    %1595 = vmatpush1.msra.mxu0 %v1409
    %1596 = vmatprep.subr.mxu0 0.0
    %1597 = vmatpush1.msra.mxu0 %v1408
    %1598 = vmatprep.subr.mxu0 0.0
    %1599 = vmatpush1.msra.mxu0 %v1407
    %1600 = vmatprep.subr.mxu0 0.0
    %1601 = vmatpush1.msra.mxu0 %v1406
    %1602 = vmatprep.subr.mxu0 0.0
    %1603 = vmatpush1.msra.mxu0 %v1405
    %1604 = vmatprep.subr.mxu0 0.0
    %1605 = vmatpush1.msra.mxu0 %v1404
    %1606 = vmatprep.subr.mxu0 0.0
    %1607 = vmatpush1.msra.mxu0 %v1403
    %1608 = vmatprep.subr.mxu0 0.0
    %1609 = vmatpush1.msra.mxu0 %v1402
    %1610 = vmatprep.subr.mxu0 0.0
    %1611 = vmatpush1.msra.mxu0 %v1401
    %1612 = vmatprep.subr.mxu0 0.0
    %1613 = vmatpush1.msra.mxu0 %v1400
    %1614 = vmatprep.subr.mxu0 0.0
    %1615 = vmatpush1.msra.mxu0 %v1399
    %1616 = vmatprep.subr.mxu0 0.0
    %1617 = vmatpush1.msra.mxu0 %v1398
    %1618 = vmatprep.subr.mxu0 0.0
    %1619 = vmatpush1.msra.mxu0 %v1397
    %1620 = vmatprep.subr.mxu0 0.0
    %1621 = vmatpush1.msra.mxu0 %v1396
    %1622 = vmatprep.subr.mxu0 0.0
    %1623 = vmatpush2.msra.mxu0 0.0
    %1624 = vmatprep.subr.mxu0 0.0
    %1625 = vmatpush2.msra.mxu0 0.0
    %1626 = vmatprep.subr.mxu0 0.0
    %1627 = vmatpush2.msra.mxu0 0.0
    %1628 = vmatprep.subr.mxu0 0.0
    %1629 = vmatpush2.msra.mxu0 0.0
    %1630 = vmatprep.subr.mxu0 0.0
    %1631 = vmatpush2.msra.mxu0 0.0
    %1632 = vmatprep.subr.mxu0 0.0
    %1633 = vmatpush2.msra.mxu0 0.0
    %1634 = vmatprep.subr.mxu0 0.0
    %1635 = vmatpush2.msra.mxu0 0.0
    %1636 = vmatprep.subr.mxu0 0.0
    %1637 = vmatpush2.msra.mxu0 0.0
    %1638 = vmatprep.subr.mxu0 0.0
    %1639 = vmatpush2.msra.mxu0 0.0
    %1640 = vmatprep.subr.mxu0 0.0
    %1641 = vmatpush2.msra.mxu0 0.0
    %1642 = vmatprep.subr.mxu0 0.0
    %1643 = vmatpush2.msra.mxu0 0.0
    %1644 = vmatprep.subr.mxu0 0.0
    %1645 = vmatpush2.msra.mxu0 0.0
    %1646 = vmatprep.subr.mxu0 0.0
    %1647 = vmatpush2.msra.mxu0 0.0
    %1648 = vmatprep.subr.mxu0 0.0
    %1649 = vmatpush2.msra.mxu0 0.0
    %1650 = vmatprep.subr.mxu0 0.0
    %1651 = vmatpush2.msra.mxu0 0.0
    %1652 = vmatprep.subr.mxu0 0.0
    %1653 = vmatpush2.msra.mxu0 0.0
    %1654 = vmatprep.mubr.f32.mxu0 0.0
    %1655 = vmatmul.mubr.f32.gmra.mxu0 %v1380
    %v1656 = vpop.f32.mrf.mxu0
    %v1657 = vadd.f32 %v1512, %v1656
    %v1658 = vpop.f32.mrf.mxu0
    %1659 = vmatprep.mubr.f32.mxu0 0.0
    %1660 = vmatmul.mubr.f32.gmra.mxu0 %v1381
    %v1661 = vpop.f32.mrf.mxu0
    %v1662 = vadd.f32 %v1517, %v1661
    %v1663 = vpop.f32.mrf.mxu0
    %1664 = vmatprep.mubr.f32.mxu0 0.0
    %1665 = vmatmul.mubr.f32.gmra.mxu0 %v1382
    %v1666 = vpop.f32.mrf.mxu0
    %v1667 = vadd.f32 %v1522, %v1666
    %v1668 = vpop.f32.mrf.mxu0
    %1669 = vmatprep.mubr.f32.mxu0 0.0
    %1670 = vmatmul.mubr.f32.gmra.mxu0 %v1383
    %v1671 = vpop.f32.mrf.mxu0
    %v1672 = vadd.f32 %v1527, %v1671
    %v1673 = vpop.f32.mrf.mxu0
    %1674 = vmatprep.mubr.f32.mxu0 0.0
    %1675 = vmatmul.mubr.f32.gmra.mxu0 %v1384
    %v1676 = vpop.f32.mrf.mxu0
    %v1677 = vadd.f32 %v1532, %v1676
    %v1678 = vpop.f32.mrf.mxu0
    %1679 = vmatprep.mubr.f32.mxu0 0.0
    %1680 = vmatmul.mubr.f32.gmra.mxu0 %v1385
    %v1681 = vpop.f32.mrf.mxu0
    %v1682 = vadd.f32 %v1537, %v1681
    %v1683 = vpop.f32.mrf.mxu0
    %1684 = vmatprep.mubr.f32.mxu0 0.0
    %1685 = vmatmul.mubr.f32.gmra.mxu0 %v1386
    %v1686 = vpop.f32.mrf.mxu0
    %v1687 = vadd.f32 %v1542, %v1686
    %v1688 = vpop.f32.mrf.mxu0
    %1689 = vmatprep.mubr.f32.mxu0 0.0
    %1690 = vmatmul.mubr.f32.gmra.mxu0 %v1387
    %v1691 = vpop.f32.mrf.mxu0
    %v1692 = vadd.f32 %v1547, %v1691
    %v1693 = vpop.f32.mrf.mxu0
    %1694 = vmatprep.mubr.f32.mxu0 0.0
    %1695 = vmatmul.mubr.f32.gmra.mxu0 %v1388
    %v1696 = vpop.f32.mrf.mxu0
    %v1697 = vadd.f32 %v1552, %v1696
    %v1698 = vpop.f32.mrf.mxu0
    %1699 = vmatprep.mubr.f32.mxu0 0.0
    %1700 = vmatmul.mubr.f32.gmra.mxu0 %v1389
    %v1701 = vpop.f32.mrf.mxu0
    %v1702 = vadd.f32 %v1557, %v1701
    %v1703 = vpop.f32.mrf.mxu0
    %1704 = vmatprep.mubr.f32.mxu0 0.0
    %1705 = vmatmul.mubr.f32.gmra.mxu0 %v1390
    %v1706 = vpop.f32.mrf.mxu0
    %v1707 = vadd.f32 %v1562, %v1706
    %v1708 = vpop.f32.mrf.mxu0
    %1709 = vmatprep.mubr.f32.mxu0 0.0
    %1710 = vmatmul.mubr.f32.gmra.mxu0 %v1391
    %v1711 = vpop.f32.mrf.mxu0
    %v1712 = vadd.f32 %v1567, %v1711
    %v1713 = vpop.f32.mrf.mxu0
    %1714 = vmatprep.mubr.f32.mxu0 0.0
    %1715 = vmatmul.mubr.f32.gmra.mxu0 %v1392
    %v1716 = vpop.f32.mrf.mxu0
    %v1717 = vadd.f32 %v1572, %v1716
    %v1718 = vpop.f32.mrf.mxu0
    %1719 = vmatprep.mubr.f32.mxu0 0.0
    %1720 = vmatmul.mubr.f32.gmra.mxu0 %v1393
    %v1721 = vpop.f32.mrf.mxu0
    %v1722 = vadd.f32 %v1577, %v1721
    %v1723 = vpop.f32.mrf.mxu0
    %1724 = vmatprep.mubr.f32.mxu0 0.0
    %1725 = vmatmul.mubr.f32.gmra.mxu0 %v1394
    %v1726 = vpop.f32.mrf.mxu0
    %v1727 = vadd.f32 %v1582, %v1726
    %v1728 = vpop.f32.mrf.mxu0
    %1729 = vmatprep.mubr.f32.mxu0 0.0
    %1730 = vmatmul.mubr.f32.gmra.mxu0 %v1395
    %v1731 = vpop.f32.mrf.mxu0
    %v1732 = vadd.f32 %v1587, %v1731
    %v1733 = vpop.f32.mrf.mxu0
    %1734 = vdwg.mxu0
    %v1735 = vld [vmem:[%s1379 + $0x1] sm:$0xff]
    %v1736 = vld [vmem:[%s1379 + $0x11] sm:$0xff]
    %v1737 = vld [vmem:[%s1379 + $0x21] sm:$0xff]
    %v1738 = vld [vmem:[%s1379 + $0x31] sm:$0xff]
    %v1739 = vld [vmem:[%s1379 + $0x41] sm:$0xff]
    %v1740 = vld [vmem:[%s1379 + $0x51] sm:$0xff]
    %v1741 = vld [vmem:[%s1379 + $0x61] sm:$0xff]
    %v1742 = vld [vmem:[%s1379 + $0x71] sm:$0xff]
    %v1743 = vld [vmem:[%s1379 + $0xa1] sm:$0xff]
    %v1744 = vld [vmem:[%s1379 + $0xb1] sm:$0xff]
    %v1745 = vld [vmem:[%s1379 + $0xc1] sm:$0xff]
    %v1746 = vld [vmem:[%s1379 + $0xd1] sm:$0xff]
    %v1747 = vld [vmem:[%s1379 + $0xe1] sm:$0xff]
    %v1748 = vld [vmem:[%s1379 + $0xf1] sm:$0xff]
    %v1749 = vld [vmem:[%s1379 + $0x101] sm:$0xff]
    %v1750 = vld [vmem:[%s1379 + $0x111] sm:$0xff]
    %v1751 = vld [vmem:[#allocation8 + $0x100] sm:$0xff]
    %v1752 = vld [vmem:[#allocation8 + $0x108] sm:$0xff]
    %v1753 = vld [vmem:[#allocation8 + $0x110] sm:$0xff]
    %v1754 = vld [vmem:[#allocation8 + $0x118] sm:$0xff]
    %v1755 = vld [vmem:[#allocation8 + $0x120] sm:$0xff]
    %v1756 = vld [vmem:[#allocation8 + $0x128] sm:$0xff]
    %v1757 = vld [vmem:[#allocation8 + $0x130] sm:$0xff]
    %v1758 = vld [vmem:[#allocation8 + $0x138] sm:$0xff]
    %v1759 = vld [vmem:[#allocation8 + $0x140] sm:$0xff]
    %v1760 = vld [vmem:[#allocation8 + $0x148] sm:$0xff]
    %v1761 = vld [vmem:[#allocation8 + $0x150] sm:$0xff]
    %v1762 = vld [vmem:[#allocation8 + $0x158] sm:$0xff]
    %v1763 = vld [vmem:[#allocation8 + $0x160] sm:$0xff]
    %v1764 = vld [vmem:[#allocation8 + $0x168] sm:$0xff]
    %v1765 = vld [vmem:[#allocation8 + $0x170] sm:$0xff]
    %v1766 = vld [vmem:[#allocation8 + $0x178] sm:$0xff]
    %1767 = vmatprep.subr.mxu0 0.0
    %1768 = vmatpush1.msra.mxu0 %v1766
    %1769 = vmatprep.subr.mxu0 0.0
    %1770 = vmatpush1.msra.mxu0 %v1765
    %1771 = vmatprep.subr.mxu0 0.0
    %1772 = vmatpush1.msra.mxu0 %v1764
    %1773 = vmatprep.subr.mxu0 0.0
    %1774 = vmatpush1.msra.mxu0 %v1763
    %1775 = vmatprep.subr.mxu0 0.0
    %1776 = vmatpush1.msra.mxu0 %v1762
    %1777 = vmatprep.subr.mxu0 0.0
    %1778 = vmatpush1.msra.mxu0 %v1761
    %1779 = vmatprep.subr.mxu0 0.0
    %1780 = vmatpush1.msra.mxu0 %v1760
    %1781 = vmatprep.subr.mxu0 0.0
    %1782 = vmatpush1.msra.mxu0 %v1759
    %1783 = vmatprep.subr.mxu0 0.0
    %1784 = vmatpush1.msra.mxu0 %v1758
    %1785 = vmatprep.subr.mxu0 0.0
    %1786 = vmatpush1.msra.mxu0 %v1757
    %1787 = vmatprep.subr.mxu0 0.0
    %1788 = vmatpush1.msra.mxu0 %v1756
    %1789 = vmatprep.subr.mxu0 0.0
    %1790 = vmatpush1.msra.mxu0 %v1755
    %1791 = vmatprep.subr.mxu0 0.0
    %1792 = vmatpush1.msra.mxu0 %v1754
    %1793 = vmatprep.subr.mxu0 0.0
    %1794 = vmatpush1.msra.mxu0 %v1753
    %1795 = vmatprep.subr.mxu0 0.0
    %1796 = vmatpush1.msra.mxu0 %v1752
    %1797 = vmatprep.subr.mxu0 0.0
    %1798 = vmatpush1.msra.mxu0 %v1751
    %1799 = vmatprep.subr.mxu0 0.0
    %1800 = vmatpush2.msra.mxu0 0.0
    %1801 = vmatprep.subr.mxu0 0.0
    %1802 = vmatpush2.msra.mxu0 0.0
    %1803 = vmatprep.subr.mxu0 0.0
    %1804 = vmatpush2.msra.mxu0 0.0
    %1805 = vmatprep.subr.mxu0 0.0
    %1806 = vmatpush2.msra.mxu0 0.0
    %1807 = vmatprep.subr.mxu0 0.0
    %1808 = vmatpush2.msra.mxu0 0.0
    %1809 = vmatprep.subr.mxu0 0.0
    %1810 = vmatpush2.msra.mxu0 0.0
    %1811 = vmatprep.subr.mxu0 0.0
    %1812 = vmatpush2.msra.mxu0 0.0
    %1813 = vmatprep.subr.mxu0 0.0
    %1814 = vmatpush2.msra.mxu0 0.0
    %1815 = vmatprep.subr.mxu0 0.0
    %1816 = vmatpush2.msra.mxu0 0.0
    %1817 = vmatprep.subr.mxu0 0.0
    %1818 = vmatpush2.msra.mxu0 0.0
    %1819 = vmatprep.subr.mxu0 0.0
    %1820 = vmatpush2.msra.mxu0 0.0
    %1821 = vmatprep.subr.mxu0 0.0
    %1822 = vmatpush2.msra.mxu0 0.0
    %1823 = vmatprep.subr.mxu0 0.0
    %1824 = vmatpush2.msra.mxu0 0.0
    %1825 = vmatprep.subr.mxu0 0.0
    %1826 = vmatpush2.msra.mxu0 0.0
    %1827 = vmatprep.subr.mxu0 0.0
    %1828 = vmatpush2.msra.mxu0 0.0
    %1829 = vmatprep.subr.mxu0 0.0
    %1830 = vmatpush2.msra.mxu0 0.0
    %1831 = vmatprep.mubr.f32.mxu0 0.0
    %1832 = vmatmul.mubr.f32.gmra.mxu0 %v1735
    %v1833 = vpop.f32.mrf.mxu0
    %v1834 = vadd.f32 0.0, %v1833
    %v1835 = vpop.f32.mrf.mxu0
    %1836 = vmatprep.mubr.f32.mxu0 0.0
    %1837 = vmatmul.mubr.f32.gmra.mxu0 %v1736
    %v1838 = vpop.f32.mrf.mxu0
    %v1839 = vadd.f32 0.0, %v1838
    %v1840 = vpop.f32.mrf.mxu0
    %1841 = vmatprep.mubr.f32.mxu0 0.0
    %1842 = vmatmul.mubr.f32.gmra.mxu0 %v1737
    %v1843 = vpop.f32.mrf.mxu0
    %v1844 = vadd.f32 0.0, %v1843
    %v1845 = vpop.f32.mrf.mxu0
    %1846 = vmatprep.mubr.f32.mxu0 0.0
    %1847 = vmatmul.mubr.f32.gmra.mxu0 %v1738
    %v1848 = vpop.f32.mrf.mxu0
    %v1849 = vadd.f32 0.0, %v1848
    %v1850 = vpop.f32.mrf.mxu0
    %1851 = vmatprep.mubr.f32.mxu0 0.0
    %1852 = vmatmul.mubr.f32.gmra.mxu0 %v1739
    %v1853 = vpop.f32.mrf.mxu0
    %v1854 = vadd.f32 0.0, %v1853
    %v1855 = vpop.f32.mrf.mxu0
    %1856 = vmatprep.mubr.f32.mxu0 0.0
    %1857 = vmatmul.mubr.f32.gmra.mxu0 %v1740
    %v1858 = vpop.f32.mrf.mxu0
    %v1859 = vadd.f32 0.0, %v1858
    %v1860 = vpop.f32.mrf.mxu0
    %1861 = vmatprep.mubr.f32.mxu0 0.0
    %1862 = vmatmul.mubr.f32.gmra.mxu0 %v1741
    %v1863 = vpop.f32.mrf.mxu0
    %v1864 = vadd.f32 0.0, %v1863
    %v1865 = vpop.f32.mrf.mxu0
    %1866 = vmatprep.mubr.f32.mxu0 0.0
    %1867 = vmatmul.mubr.f32.gmra.mxu0 %v1742
    %v1868 = vpop.f32.mrf.mxu0
    %v1869 = vadd.f32 0.0, %v1868
    %v1870 = vpop.f32.mrf.mxu0
    %1871 = vmatprep.mubr.f32.mxu0 0.0
    %1872 = vmatmul.mubr.f32.gmra.mxu0 %v1743
    %v1873 = vpop.f32.mrf.mxu0
    %v1874 = vadd.f32 0.0, %v1873
    %v1875 = vpop.f32.mrf.mxu0
    %1876 = vmatprep.mubr.f32.mxu0 0.0
    %1877 = vmatmul.mubr.f32.gmra.mxu0 %v1744
    %v1878 = vpop.f32.mrf.mxu0
    %v1879 = vadd.f32 0.0, %v1878
    %v1880 = vpop.f32.mrf.mxu0
    %1881 = vmatprep.mubr.f32.mxu0 0.0
    %1882 = vmatmul.mubr.f32.gmra.mxu0 %v1745
    %v1883 = vpop.f32.mrf.mxu0
    %v1884 = vadd.f32 0.0, %v1883
    %v1885 = vpop.f32.mrf.mxu0
    %1886 = vmatprep.mubr.f32.mxu0 0.0
    %1887 = vmatmul.mubr.f32.gmra.mxu0 %v1746
    %v1888 = vpop.f32.mrf.mxu0
    %v1889 = vadd.f32 0.0, %v1888
    %v1890 = vpop.f32.mrf.mxu0
    %1891 = vmatprep.mubr.f32.mxu0 0.0
    %1892 = vmatmul.mubr.f32.gmra.mxu0 %v1747
    %v1893 = vpop.f32.mrf.mxu0
    %v1894 = vadd.f32 0.0, %v1893
    %v1895 = vpop.f32.mrf.mxu0
    %1896 = vmatprep.mubr.f32.mxu0 0.0
    %1897 = vmatmul.mubr.f32.gmra.mxu0 %v1748
    %v1898 = vpop.f32.mrf.mxu0
    %v1899 = vadd.f32 0.0, %v1898
    %v1900 = vpop.f32.mrf.mxu0
    %1901 = vmatprep.mubr.f32.mxu0 0.0
    %1902 = vmatmul.mubr.f32.gmra.mxu0 %v1749
    %v1903 = vpop.f32.mrf.mxu0
    %v1904 = vadd.f32 0.0, %v1903
    %v1905 = vpop.f32.mrf.mxu0
    %1906 = vmatprep.mubr.f32.mxu0 0.0
    %1907 = vmatmul.mubr.f32.gmra.mxu0 %v1750
    %v1908 = vpop.f32.mrf.mxu0
    %v1909 = vadd.f32 0.0, %v1908
    %v1910 = vpop.f32.mrf.mxu0
    %1911 = vdwg.mxu0
    %v1912 = vadd.f32 %v1657, %v1834
    %v1913 = vadd.f32 %v1662, %v1839
    %v1914 = vadd.f32 %v1667, %v1844
    %v1915 = vadd.f32 %v1672, %v1849
    %v1916 = vadd.f32 %v1677, %v1854
    %v1917 = vadd.f32 %v1682, %v1859
    %v1918 = vadd.f32 %v1687, %v1864
    %v1919 = vadd.f32 %v1692, %v1869
    %v1920 = vadd.f32 %v1697, %v1874
    %v1921 = vadd.f32 %v1702, %v1879
    %v1922 = vadd.f32 %v1707, %v1884
    %v1923 = vadd.f32 %v1712, %v1889
    %v1924 = vadd.f32 %v1717, %v1894
    %v1925 = vadd.f32 %v1722, %v1899
    %v1926 = vadd.f32 %v1727, %v1904
    %v1927 = vadd.f32 %v1732, %v1909
    %s1928 = scalar_lea.vmem [#allocation2], 336
    %v1929 = vld [vmem:[%s1928] sm:$0xff]
    %v1930 = vld [vmem:[%s1928 + $0x10] sm:$0xff]
    %v1931 = vld [vmem:[%s1928 + $0x20] sm:$0xff]
    %v1932 = vld [vmem:[%s1928 + $0x30] sm:$0xff]
    %v1933 = vld [vmem:[%s1928 + $0x40] sm:$0xff]
    %v1934 = vld [vmem:[%s1928 + $0x50] sm:$0xff]
    %v1935 = vld [vmem:[%s1928 + $0x60] sm:$0xff]
    %v1936 = vld [vmem:[%s1928 + $0x70] sm:$0xff]
    %v1937 = vld [vmem:[%s1928 + $0xa0] sm:$0xff]
    %v1938 = vld [vmem:[%s1928 + $0xb0] sm:$0xff]
    %v1939 = vld [vmem:[%s1928 + $0xc0] sm:$0xff]
    %v1940 = vld [vmem:[%s1928 + $0xd0] sm:$0xff]
    %v1941 = vld [vmem:[%s1928 + $0xe0] sm:$0xff]
    %v1942 = vld [vmem:[%s1928 + $0xf0] sm:$0xff]
    %v1943 = vld [vmem:[%s1928 + $0x100] sm:$0xff]
    %v1944 = vld [vmem:[%s1928 + $0x110] sm:$0xff]
    %v1945 = vld [vmem:[#allocation8 + $0x180] sm:$0xff]
    %v1946 = vld [vmem:[#allocation8 + $0x188] sm:$0xff]
    %v1947 = vld [vmem:[#allocation8 + $0x190] sm:$0xff]
    %v1948 = vld [vmem:[#allocation8 + $0x198] sm:$0xff]
    %v1949 = vld [vmem:[#allocation8 + $0x1a0] sm:$0xff]
    %v1950 = vld [vmem:[#allocation8 + $0x1a8] sm:$0xff]
    %v1951 = vld [vmem:[#allocation8 + $0x1b0] sm:$0xff]
    %v1952 = vld [vmem:[#allocation8 + $0x1b8] sm:$0xff]
    %v1953 = vld [vmem:[#allocation8 + $0x1c0] sm:$0xff]
    %v1954 = vld [vmem:[#allocation8 + $0x1c8] sm:$0xff]
    %v1955 = vld [vmem:[#allocation8 + $0x1d0] sm:$0xff]
    %v1956 = vld [vmem:[#allocation8 + $0x1d8] sm:$0xff]
    %v1957 = vld [vmem:[#allocation8 + $0x1e0] sm:$0xff]
    %v1958 = vld [vmem:[#allocation8 + $0x1e8] sm:$0xff]
    %v1959 = vld [vmem:[#allocation8 + $0x1f0] sm:$0xff]
    %v1960 = vld [vmem:[#allocation8 + $0x1f8] sm:$0xff]
    %1961 = vmatprep.subr.mxu0 0.0
    %1962 = vmatpush1.msra.mxu0 %v1960
    %1963 = vmatprep.subr.mxu0 0.0
    %1964 = vmatpush1.msra.mxu0 %v1959
    %1965 = vmatprep.subr.mxu0 0.0
    %1966 = vmatpush1.msra.mxu0 %v1958
    %1967 = vmatprep.subr.mxu0 0.0
    %1968 = vmatpush1.msra.mxu0 %v1957
    %1969 = vmatprep.subr.mxu0 0.0
    %1970 = vmatpush1.msra.mxu0 %v1956
    %1971 = vmatprep.subr.mxu0 0.0
    %1972 = vmatpush1.msra.mxu0 %v1955
    %1973 = vmatprep.subr.mxu0 0.0
    %1974 = vmatpush1.msra.mxu0 %v1954
    %1975 = vmatprep.subr.mxu0 0.0
    %1976 = vmatpush1.msra.mxu0 %v1953
    %1977 = vmatprep.subr.mxu0 0.0
    %1978 = vmatpush1.msra.mxu0 %v1952
    %1979 = vmatprep.subr.mxu0 0.0
    %1980 = vmatpush1.msra.mxu0 %v1951
    %1981 = vmatprep.subr.mxu0 0.0
    %1982 = vmatpush1.msra.mxu0 %v1950
    %1983 = vmatprep.subr.mxu0 0.0
    %1984 = vmatpush1.msra.mxu0 %v1949
    %1985 = vmatprep.subr.mxu0 0.0
    %1986 = vmatpush1.msra.mxu0 %v1948
    %1987 = vmatprep.subr.mxu0 0.0
    %1988 = vmatpush1.msra.mxu0 %v1947
    %1989 = vmatprep.subr.mxu0 0.0
    %1990 = vmatpush1.msra.mxu0 %v1946
    %1991 = vmatprep.subr.mxu0 0.0
    %1992 = vmatpush1.msra.mxu0 %v1945
    %1993 = vmatprep.subr.mxu0 0.0
    %1994 = vmatpush2.msra.mxu0 0.0
    %1995 = vmatprep.subr.mxu0 0.0
    %1996 = vmatpush2.msra.mxu0 0.0
    %1997 = vmatprep.subr.mxu0 0.0
    %1998 = vmatpush2.msra.mxu0 0.0
    %1999 = vmatprep.subr.mxu0 0.0
    %2000 = vmatpush2.msra.mxu0 0.0
    %2001 = vmatprep.subr.mxu0 0.0
    %2002 = vmatpush2.msra.mxu0 0.0
    %2003 = vmatprep.subr.mxu0 0.0
    %2004 = vmatpush2.msra.mxu0 0.0
    %2005 = vmatprep.subr.mxu0 0.0
    %2006 = vmatpush2.msra.mxu0 0.0
    %2007 = vmatprep.subr.mxu0 0.0
    %2008 = vmatpush2.msra.mxu0 0.0
    %2009 = vmatprep.subr.mxu0 0.0
    %2010 = vmatpush2.msra.mxu0 0.0
    %2011 = vmatprep.subr.mxu0 0.0
    %2012 = vmatpush2.msra.mxu0 0.0
    %2013 = vmatprep.subr.mxu0 0.0
    %2014 = vmatpush2.msra.mxu0 0.0
    %2015 = vmatprep.subr.mxu0 0.0
    %2016 = vmatpush2.msra.mxu0 0.0
    %2017 = vmatprep.subr.mxu0 0.0
    %2018 = vmatpush2.msra.mxu0 0.0
    %2019 = vmatprep.subr.mxu0 0.0
    %2020 = vmatpush2.msra.mxu0 0.0
    %2021 = vmatprep.subr.mxu0 0.0
    %2022 = vmatpush2.msra.mxu0 0.0
    %2023 = vmatprep.subr.mxu0 0.0
    %2024 = vmatpush2.msra.mxu0 0.0
    %2025 = vmatprep.mubr.f32.mxu0 0.0
    %2026 = vmatmul.mubr.f32.gmra.mxu0 %v1929
    %v2027 = vpop.f32.mrf.mxu0
    %v2028 = vadd.f32 0.0, %v2027
    %v2029 = vpop.f32.mrf.mxu0
    %2030 = vmatprep.mubr.f32.mxu0 0.0
    %2031 = vmatmul.mubr.f32.gmra.mxu0 %v1930
    %v2032 = vpop.f32.mrf.mxu0
    %v2033 = vadd.f32 0.0, %v2032
    %v2034 = vpop.f32.mrf.mxu0
    %2035 = vmatprep.mubr.f32.mxu0 0.0
    %2036 = vmatmul.mubr.f32.gmra.mxu0 %v1931
    %v2037 = vpop.f32.mrf.mxu0
    %v2038 = vadd.f32 0.0, %v2037
    %v2039 = vpop.f32.mrf.mxu0
    %2040 = vmatprep.mubr.f32.mxu0 0.0
    %2041 = vmatmul.mubr.f32.gmra.mxu0 %v1932
    %v2042 = vpop.f32.mrf.mxu0
    %v2043 = vadd.f32 0.0, %v2042
    %v2044 = vpop.f32.mrf.mxu0
    %2045 = vmatprep.mubr.f32.mxu0 0.0
    %2046 = vmatmul.mubr.f32.gmra.mxu0 %v1933
    %v2047 = vpop.f32.mrf.mxu0
    %v2048 = vadd.f32 0.0, %v2047
    %v2049 = vpop.f32.mrf.mxu0
    %2050 = vmatprep.mubr.f32.mxu0 0.0
    %2051 = vmatmul.mubr.f32.gmra.mxu0 %v1934
    %v2052 = vpop.f32.mrf.mxu0
    %v2053 = vadd.f32 0.0, %v2052
    %v2054 = vpop.f32.mrf.mxu0
    %2055 = vmatprep.mubr.f32.mxu0 0.0
    %2056 = vmatmul.mubr.f32.gmra.mxu0 %v1935
    %v2057 = vpop.f32.mrf.mxu0
    %v2058 = vadd.f32 0.0, %v2057
    %v2059 = vpop.f32.mrf.mxu0
    %2060 = vmatprep.mubr.f32.mxu0 0.0
    %2061 = vmatmul.mubr.f32.gmra.mxu0 %v1936
    %v2062 = vpop.f32.mrf.mxu0
    %v2063 = vadd.f32 0.0, %v2062
    %v2064 = vpop.f32.mrf.mxu0
    %2065 = vmatprep.mubr.f32.mxu0 0.0
    %2066 = vmatmul.mubr.f32.gmra.mxu0 %v1937
    %v2067 = vpop.f32.mrf.mxu0
    %v2068 = vadd.f32 0.0, %v2067
    %v2069 = vpop.f32.mrf.mxu0
    %2070 = vmatprep.mubr.f32.mxu0 0.0
    %2071 = vmatmul.mubr.f32.gmra.mxu0 %v1938
    %v2072 = vpop.f32.mrf.mxu0
    %v2073 = vadd.f32 0.0, %v2072
    %v2074 = vpop.f32.mrf.mxu0
    %2075 = vmatprep.mubr.f32.mxu0 0.0
    %2076 = vmatmul.mubr.f32.gmra.mxu0 %v1939
    %v2077 = vpop.f32.mrf.mxu0
    %v2078 = vadd.f32 0.0, %v2077
    %v2079 = vpop.f32.mrf.mxu0
    %2080 = vmatprep.mubr.f32.mxu0 0.0
    %2081 = vmatmul.mubr.f32.gmra.mxu0 %v1940
    %v2082 = vpop.f32.mrf.mxu0
    %v2083 = vadd.f32 0.0, %v2082
    %v2084 = vpop.f32.mrf.mxu0
    %2085 = vmatprep.mubr.f32.mxu0 0.0
    %2086 = vmatmul.mubr.f32.gmra.mxu0 %v1941
    %v2087 = vpop.f32.mrf.mxu0
    %v2088 = vadd.f32 0.0, %v2087
    %v2089 = vpop.f32.mrf.mxu0
    %2090 = vmatprep.mubr.f32.mxu0 0.0
    %2091 = vmatmul.mubr.f32.gmra.mxu0 %v1942
    %v2092 = vpop.f32.mrf.mxu0
    %v2093 = vadd.f32 0.0, %v2092
    %v2094 = vpop.f32.mrf.mxu0
    %2095 = vmatprep.mubr.f32.mxu0 0.0
    %2096 = vmatmul.mubr.f32.gmra.mxu0 %v1943
    %v2097 = vpop.f32.mrf.mxu0
    %v2098 = vadd.f32 0.0, %v2097
    %v2099 = vpop.f32.mrf.mxu0
    %2100 = vmatprep.mubr.f32.mxu0 0.0
    %2101 = vmatmul.mubr.f32.gmra.mxu0 %v1944
    %v2102 = vpop.f32.mrf.mxu0
    %v2103 = vadd.f32 0.0, %v2102
    %v2104 = vpop.f32.mrf.mxu0
    %2105 = vdwg.mxu0
    %v2106 = vadd.f32 %v1912, %v2028
    %v2107 = vadd.f32 %v1913, %v2033
    %v2108 = vadd.f32 %v1914, %v2038
    %v2109 = vadd.f32 %v1915, %v2043
    %v2110 = vadd.f32 %v1916, %v2048
    %v2111 = vadd.f32 %v1917, %v2053
    %v2112 = vadd.f32 %v1918, %v2058
    %v2113 = vadd.f32 %v1919, %v2063
    %v2114 = vadd.f32 %v1920, %v2068
    %v2115 = vadd.f32 %v1921, %v2073
    %v2116 = vadd.f32 %v1922, %v2078
    %v2117 = vadd.f32 %v1923, %v2083
    %v2118 = vadd.f32 %v1924, %v2088
    %v2119 = vadd.f32 %v1925, %v2093
    %v2120 = vadd.f32 %v1926, %v2098
    %v2121 = vadd.f32 %v1927, %v2103
    %v2122 = vld [vmem:[%s1314 + $0x1] sm:$0xff]
    %v2123 = vld [vmem:[%s1314 + $0x11] sm:$0xff]
    %v2124 = vld [vmem:[%s1314 + $0x21] sm:$0xff]
    %v2125 = vld [vmem:[%s1314 + $0x31] sm:$0xff]
    %v2126 = vld [vmem:[%s1314 + $0x41] sm:$0xff]
    %v2127 = vld [vmem:[%s1314 + $0x51] sm:$0xff]
    %v2128 = vld [vmem:[%s1314 + $0x61] sm:$0xff]
    %v2129 = vld [vmem:[%s1314 + $0x71] sm:$0xff]
    %v2130 = vld [vmem:[%s1314 + $0xa1] sm:$0xff]
    %v2131 = vld [vmem:[%s1314 + $0xb1] sm:$0xff]
    %v2132 = vld [vmem:[%s1314 + $0xc1] sm:$0xff]
    %v2133 = vld [vmem:[%s1314 + $0xd1] sm:$0xff]
    %v2134 = vld [vmem:[%s1314 + $0xe1] sm:$0xff]
    %v2135 = vld [vmem:[%s1314 + $0xf1] sm:$0xff]
    %v2136 = vld [vmem:[%s1314 + $0x101] sm:$0xff]
    %v2137 = vld [vmem:[%s1314 + $0x111] sm:$0xff]
    %v2138 = vld [vmem:[#allocation8 + $0x200] sm:$0xff]
    %v2139 = vld [vmem:[#allocation8 + $0x208] sm:$0xff]
    %v2140 = vld [vmem:[#allocation8 + $0x210] sm:$0xff]
    %v2141 = vld [vmem:[#allocation8 + $0x218] sm:$0xff]
    %v2142 = vld [vmem:[#allocation8 + $0x220] sm:$0xff]
    %v2143 = vld [vmem:[#allocation8 + $0x228] sm:$0xff]
    %v2144 = vld [vmem:[#allocation8 + $0x230] sm:$0xff]
    %v2145 = vld [vmem:[#allocation8 + $0x238] sm:$0xff]
    %v2146 = vld [vmem:[#allocation8 + $0x240] sm:$0xff]
    %v2147 = vld [vmem:[#allocation8 + $0x248] sm:$0xff]
    %v2148 = vld [vmem:[#allocation8 + $0x250] sm:$0xff]
    %v2149 = vld [vmem:[#allocation8 + $0x258] sm:$0xff]
    %v2150 = vld [vmem:[#allocation8 + $0x260] sm:$0xff]
    %v2151 = vld [vmem:[#allocation8 + $0x268] sm:$0xff]
    %v2152 = vld [vmem:[#allocation8 + $0x270] sm:$0xff]
    %v2153 = vld [vmem:[#allocation8 + $0x278] sm:$0xff]
    %2154 = vmatprep.subr.mxu0 0.0
    %2155 = vmatpush1.msra.mxu0 %v2153
    %2156 = vmatprep.subr.mxu0 0.0
    %2157 = vmatpush1.msra.mxu0 %v2152
    %2158 = vmatprep.subr.mxu0 0.0
    %2159 = vmatpush1.msra.mxu0 %v2151
    %2160 = vmatprep.subr.mxu0 0.0
    %2161 = vmatpush1.msra.mxu0 %v2150
    %2162 = vmatprep.subr.mxu0 0.0
    %2163 = vmatpush1.msra.mxu0 %v2149
    %2164 = vmatprep.subr.mxu0 0.0
    %2165 = vmatpush1.msra.mxu0 %v2148
    %2166 = vmatprep.subr.mxu0 0.0
    %2167 = vmatpush1.msra.mxu0 %v2147
    %2168 = vmatprep.subr.mxu0 0.0
    %2169 = vmatpush1.msra.mxu0 %v2146
    %2170 = vmatprep.subr.mxu0 0.0
    %2171 = vmatpush1.msra.mxu0 %v2145
    %2172 = vmatprep.subr.mxu0 0.0
    %2173 = vmatpush1.msra.mxu0 %v2144
    %2174 = vmatprep.subr.mxu0 0.0
    %2175 = vmatpush1.msra.mxu0 %v2143
    %2176 = vmatprep.subr.mxu0 0.0
    %2177 = vmatpush1.msra.mxu0 %v2142
    %2178 = vmatprep.subr.mxu0 0.0
    %2179 = vmatpush1.msra.mxu0 %v2141
    %2180 = vmatprep.subr.mxu0 0.0
    %2181 = vmatpush1.msra.mxu0 %v2140
    %2182 = vmatprep.subr.mxu0 0.0
    %2183 = vmatpush1.msra.mxu0 %v2139
    %2184 = vmatprep.subr.mxu0 0.0
    %2185 = vmatpush1.msra.mxu0 %v2138
    %2186 = vmatprep.subr.mxu0 0.0
    %2187 = vmatpush2.msra.mxu0 0.0
    %2188 = vmatprep.subr.mxu0 0.0
    %2189 = vmatpush2.msra.mxu0 0.0
    %2190 = vmatprep.subr.mxu0 0.0
    %2191 = vmatpush2.msra.mxu0 0.0
    %2192 = vmatprep.subr.mxu0 0.0
    %2193 = vmatpush2.msra.mxu0 0.0
    %2194 = vmatprep.subr.mxu0 0.0
    %2195 = vmatpush2.msra.mxu0 0.0
    %2196 = vmatprep.subr.mxu0 0.0
    %2197 = vmatpush2.msra.mxu0 0.0
    %2198 = vmatprep.subr.mxu0 0.0
    %2199 = vmatpush2.msra.mxu0 0.0
    %2200 = vmatprep.subr.mxu0 0.0
    %2201 = vmatpush2.msra.mxu0 0.0
    %2202 = vmatprep.subr.mxu0 0.0
    %2203 = vmatpush2.msra.mxu0 0.0
    %2204 = vmatprep.subr.mxu0 0.0
    %2205 = vmatpush2.msra.mxu0 0.0
    %2206 = vmatprep.subr.mxu0 0.0
    %2207 = vmatpush2.msra.mxu0 0.0
    %2208 = vmatprep.subr.mxu0 0.0
    %2209 = vmatpush2.msra.mxu0 0.0
    %2210 = vmatprep.subr.mxu0 0.0
    %2211 = vmatpush2.msra.mxu0 0.0
    %2212 = vmatprep.subr.mxu0 0.0
    %2213 = vmatpush2.msra.mxu0 0.0
    %2214 = vmatprep.subr.mxu0 0.0
    %2215 = vmatpush2.msra.mxu0 0.0
    %2216 = vmatprep.subr.mxu0 0.0
    %2217 = vmatpush2.msra.mxu0 0.0
    %2218 = vmatprep.mubr.f32.mxu0 0.0
    %2219 = vmatmul.mubr.f32.gmra.mxu0 %v2122
    %v2220 = vpop.f32.mrf.mxu0
    %v2221 = vadd.f32 0.0, %v2220
    %v2222 = vpop.f32.mrf.mxu0
    %2223 = vmatprep.mubr.f32.mxu0 0.0
    %2224 = vmatmul.mubr.f32.gmra.mxu0 %v2123
    %v2225 = vpop.f32.mrf.mxu0
    %v2226 = vadd.f32 0.0, %v2225
    %v2227 = vpop.f32.mrf.mxu0
    %2228 = vmatprep.mubr.f32.mxu0 0.0
    %2229 = vmatmul.mubr.f32.gmra.mxu0 %v2124
    %v2230 = vpop.f32.mrf.mxu0
    %v2231 = vadd.f32 0.0, %v2230
    %v2232 = vpop.f32.mrf.mxu0
    %2233 = vmatprep.mubr.f32.mxu0 0.0
    %2234 = vmatmul.mubr.f32.gmra.mxu0 %v2125
    %v2235 = vpop.f32.mrf.mxu0
    %v2236 = vadd.f32 0.0, %v2235
    %v2237 = vpop.f32.mrf.mxu0
    %2238 = vmatprep.mubr.f32.mxu0 0.0
    %2239 = vmatmul.mubr.f32.gmra.mxu0 %v2126
    %v2240 = vpop.f32.mrf.mxu0
    %v2241 = vadd.f32 0.0, %v2240
    %v2242 = vpop.f32.mrf.mxu0
    %2243 = vmatprep.mubr.f32.mxu0 0.0
    %2244 = vmatmul.mubr.f32.gmra.mxu0 %v2127
    %v2245 = vpop.f32.mrf.mxu0
    %v2246 = vadd.f32 0.0, %v2245
    %v2247 = vpop.f32.mrf.mxu0
    %2248 = vmatprep.mubr.f32.mxu0 0.0
    %2249 = vmatmul.mubr.f32.gmra.mxu0 %v2128
    %v2250 = vpop.f32.mrf.mxu0
    %v2251 = vadd.f32 0.0, %v2250
    %v2252 = vpop.f32.mrf.mxu0
    %2253 = vmatprep.mubr.f32.mxu0 0.0
    %2254 = vmatmul.mubr.f32.gmra.mxu0 %v2129
    %v2255 = vpop.f32.mrf.mxu0
    %v2256 = vadd.f32 0.0, %v2255
    %v2257 = vpop.f32.mrf.mxu0
    %2258 = vmatprep.mubr.f32.mxu0 0.0
    %2259 = vmatmul.mubr.f32.gmra.mxu0 %v2130
    %v2260 = vpop.f32.mrf.mxu0
    %v2261 = vadd.f32 0.0, %v2260
    %v2262 = vpop.f32.mrf.mxu0
    %2263 = vmatprep.mubr.f32.mxu0 0.0
    %2264 = vmatmul.mubr.f32.gmra.mxu0 %v2131
    %v2265 = vpop.f32.mrf.mxu0
    %v2266 = vadd.f32 0.0, %v2265
    %v2267 = vpop.f32.mrf.mxu0
    %2268 = vmatprep.mubr.f32.mxu0 0.0
    %2269 = vmatmul.mubr.f32.gmra.mxu0 %v2132
    %v2270 = vpop.f32.mrf.mxu0
    %v2271 = vadd.f32 0.0, %v2270
    %v2272 = vpop.f32.mrf.mxu0
    %2273 = vmatprep.mubr.f32.mxu0 0.0
    %2274 = vmatmul.mubr.f32.gmra.mxu0 %v2133
    %v2275 = vpop.f32.mrf.mxu0
    %v2276 = vadd.f32 0.0, %v2275
    %v2277 = vpop.f32.mrf.mxu0
    %2278 = vmatprep.mubr.f32.mxu0 0.0
    %2279 = vmatmul.mubr.f32.gmra.mxu0 %v2134
    %v2280 = vpop.f32.mrf.mxu0
    %v2281 = vadd.f32 0.0, %v2280
    %v2282 = vpop.f32.mrf.mxu0
    %2283 = vmatprep.mubr.f32.mxu0 0.0
    %2284 = vmatmul.mubr.f32.gmra.mxu0 %v2135
    %v2285 = vpop.f32.mrf.mxu0
    %v2286 = vadd.f32 0.0, %v2285
    %v2287 = vpop.f32.mrf.mxu0
    %2288 = vmatprep.mubr.f32.mxu0 0.0
    %2289 = vmatmul.mubr.f32.gmra.mxu0 %v2136
    %v2290 = vpop.f32.mrf.mxu0
    %v2291 = vadd.f32 0.0, %v2290
    %v2292 = vpop.f32.mrf.mxu0
    %2293 = vmatprep.mubr.f32.mxu0 0.0
    %2294 = vmatmul.mubr.f32.gmra.mxu0 %v2137
    %v2295 = vpop.f32.mrf.mxu0
    %v2296 = vadd.f32 0.0, %v2295
    %v2297 = vpop.f32.mrf.mxu0
    %2298 = vdwg.mxu0
    %v2299 = vadd.f32 %v2106, %v2221
    %v2300 = vadd.f32 %v2107, %v2226
    %v2301 = vadd.f32 %v2108, %v2231
    %v2302 = vadd.f32 %v2109, %v2236
    %v2303 = vadd.f32 %v2110, %v2241
    %v2304 = vadd.f32 %v2111, %v2246
    %v2305 = vadd.f32 %v2112, %v2251
    %v2306 = vadd.f32 %v2113, %v2256
    %v2307 = vadd.f32 %v2114, %v2261
    %v2308 = vadd.f32 %v2115, %v2266
    %v2309 = vadd.f32 %v2116, %v2271
    %v2310 = vadd.f32 %v2117, %v2276
    %v2311 = vadd.f32 %v2118, %v2281
    %v2312 = vadd.f32 %v2119, %v2286
    %v2313 = vadd.f32 %v2120, %v2291
    %v2314 = vadd.f32 %v2121, %v2296
    %v2315 = vld [vmem:[%s1928 + $0x1] sm:$0xff]
    %v2316 = vld [vmem:[%s1928 + $0x11] sm:$0xff]
    %v2317 = vld [vmem:[%s1928 + $0x21] sm:$0xff]
    %v2318 = vld [vmem:[%s1928 + $0x31] sm:$0xff]
    %v2319 = vld [vmem:[%s1928 + $0x41] sm:$0xff]
    %v2320 = vld [vmem:[%s1928 + $0x51] sm:$0xff]
    %v2321 = vld [vmem:[%s1928 + $0x61] sm:$0xff]
    %v2322 = vld [vmem:[%s1928 + $0x71] sm:$0xff]
    %v2323 = vld [vmem:[%s1928 + $0xa1] sm:$0xff]
    %v2324 = vld [vmem:[%s1928 + $0xb1] sm:$0xff]
    %v2325 = vld [vmem:[%s1928 + $0xc1] sm:$0xff]
    %v2326 = vld [vmem:[%s1928 + $0xd1] sm:$0xff]
    %v2327 = vld [vmem:[%s1928 + $0xe1] sm:$0xff]
    %v2328 = vld [vmem:[%s1928 + $0xf1] sm:$0xff]
    %v2329 = vld [vmem:[%s1928 + $0x101] sm:$0xff]
    %v2330 = vld [vmem:[%s1928 + $0x111] sm:$0xff]
    %v2331 = vld [vmem:[#allocation8 + $0x280] sm:$0xff]
    %v2332 = vld [vmem:[#allocation8 + $0x288] sm:$0xff]
    %v2333 = vld [vmem:[#allocation8 + $0x290] sm:$0xff]
    %v2334 = vld [vmem:[#allocation8 + $0x298] sm:$0xff]
    %v2335 = vld [vmem:[#allocation8 + $0x2a0] sm:$0xff]
    %v2336 = vld [vmem:[#allocation8 + $0x2a8] sm:$0xff]
    %v2337 = vld [vmem:[#allocation8 + $0x2b0] sm:$0xff]
    %v2338 = vld [vmem:[#allocation8 + $0x2b8] sm:$0xff]
    %v2339 = vld [vmem:[#allocation8 + $0x2c0] sm:$0xff]
    %v2340 = vld [vmem:[#allocation8 + $0x2c8] sm:$0xff]
    %v2341 = vld [vmem:[#allocation8 + $0x2d0] sm:$0xff]
    %v2342 = vld [vmem:[#allocation8 + $0x2d8] sm:$0xff]
    %v2343 = vld [vmem:[#allocation8 + $0x2e0] sm:$0xff]
    %v2344 = vld [vmem:[#allocation8 + $0x2e8] sm:$0xff]
    %v2345 = vld [vmem:[#allocation8 + $0x2f0] sm:$0xff]
    %v2346 = vld [vmem:[#allocation8 + $0x2f8] sm:$0xff]
    %2347 = vmatprep.subr.mxu0 0.0
    %2348 = vmatpush1.msra.mxu0 %v2346
    %2349 = vmatprep.subr.mxu0 0.0
    %2350 = vmatpush1.msra.mxu0 %v2345
    %2351 = vmatprep.subr.mxu0 0.0
    %2352 = vmatpush1.msra.mxu0 %v2344
    %2353 = vmatprep.subr.mxu0 0.0
    %2354 = vmatpush1.msra.mxu0 %v2343
    %2355 = vmatprep.subr.mxu0 0.0
    %2356 = vmatpush1.msra.mxu0 %v2342
    %2357 = vmatprep.subr.mxu0 0.0
    %2358 = vmatpush1.msra.mxu0 %v2341
    %2359 = vmatprep.subr.mxu0 0.0
    %2360 = vmatpush1.msra.mxu0 %v2340
    %2361 = vmatprep.subr.mxu0 0.0
    %2362 = vmatpush1.msra.mxu0 %v2339
    %2363 = vmatprep.subr.mxu0 0.0
    %2364 = vmatpush1.msra.mxu0 %v2338
    %2365 = vmatprep.subr.mxu0 0.0
    %2366 = vmatpush1.msra.mxu0 %v2337
    %2367 = vmatprep.subr.mxu0 0.0
    %2368 = vmatpush1.msra.mxu0 %v2336
    %2369 = vmatprep.subr.mxu0 0.0
    %2370 = vmatpush1.msra.mxu0 %v2335
    %2371 = vmatprep.subr.mxu0 0.0
    %2372 = vmatpush1.msra.mxu0 %v2334
    %2373 = vmatprep.subr.mxu0 0.0
    %2374 = vmatpush1.msra.mxu0 %v2333
    %2375 = vmatprep.subr.mxu0 0.0
    %2376 = vmatpush1.msra.mxu0 %v2332
    %2377 = vmatprep.subr.mxu0 0.0
    %2378 = vmatpush1.msra.mxu0 %v2331
    %2379 = vmatprep.subr.mxu0 0.0
    %2380 = vmatpush2.msra.mxu0 0.0
    %2381 = vmatprep.subr.mxu0 0.0
    %2382 = vmatpush2.msra.mxu0 0.0
    %2383 = vmatprep.subr.mxu0 0.0
    %2384 = vmatpush2.msra.mxu0 0.0
    %2385 = vmatprep.subr.mxu0 0.0
    %2386 = vmatpush2.msra.mxu0 0.0
    %2387 = vmatprep.subr.mxu0 0.0
    %2388 = vmatpush2.msra.mxu0 0.0
    %2389 = vmatprep.subr.mxu0 0.0
    %2390 = vmatpush2.msra.mxu0 0.0
    %2391 = vmatprep.subr.mxu0 0.0
    %2392 = vmatpush2.msra.mxu0 0.0
    %2393 = vmatprep.subr.mxu0 0.0
    %2394 = vmatpush2.msra.mxu0 0.0
    %2395 = vmatprep.subr.mxu0 0.0
    %2396 = vmatpush2.msra.mxu0 0.0
    %2397 = vmatprep.subr.mxu0 0.0
    %2398 = vmatpush2.msra.mxu0 0.0
    %2399 = vmatprep.subr.mxu0 0.0
    %2400 = vmatpush2.msra.mxu0 0.0
    %2401 = vmatprep.subr.mxu0 0.0
    %2402 = vmatpush2.msra.mxu0 0.0
    %2403 = vmatprep.subr.mxu0 0.0
    %2404 = vmatpush2.msra.mxu0 0.0
    %2405 = vmatprep.subr.mxu0 0.0
    %2406 = vmatpush2.msra.mxu0 0.0
    %2407 = vmatprep.subr.mxu0 0.0
    %2408 = vmatpush2.msra.mxu0 0.0
    %2409 = vmatprep.subr.mxu0 0.0
    %2410 = vmatpush2.msra.mxu0 0.0
    %2411 = vmatprep.mubr.f32.mxu0 0.0
    %2412 = vmatmul.mubr.f32.gmra.mxu0 %v2315
    %v2413 = vpop.f32.mrf.mxu0
    %v2414 = vadd.f32 0.0, %v2413
    %v2415 = vpop.f32.mrf.mxu0
    %2416 = vmatprep.mubr.f32.mxu0 0.0
    %2417 = vmatmul.mubr.f32.gmra.mxu0 %v2316
    %v2418 = vpop.f32.mrf.mxu0
    %v2419 = vadd.f32 0.0, %v2418
    %v2420 = vpop.f32.mrf.mxu0
    %2421 = vmatprep.mubr.f32.mxu0 0.0
    %2422 = vmatmul.mubr.f32.gmra.mxu0 %v2317
    %v2423 = vpop.f32.mrf.mxu0
    %v2424 = vadd.f32 0.0, %v2423
    %v2425 = vpop.f32.mrf.mxu0
    %2426 = vmatprep.mubr.f32.mxu0 0.0
    %2427 = vmatmul.mubr.f32.gmra.mxu0 %v2318
    %v2428 = vpop.f32.mrf.mxu0
    %v2429 = vadd.f32 0.0, %v2428
    %v2430 = vpop.f32.mrf.mxu0
    %2431 = vmatprep.mubr.f32.mxu0 0.0
    %2432 = vmatmul.mubr.f32.gmra.mxu0 %v2319
    %v2433 = vpop.f32.mrf.mxu0
    %v2434 = vadd.f32 0.0, %v2433
    %v2435 = vpop.f32.mrf.mxu0
    %2436 = vmatprep.mubr.f32.mxu0 0.0
    %2437 = vmatmul.mubr.f32.gmra.mxu0 %v2320
    %v2438 = vpop.f32.mrf.mxu0
    %v2439 = vadd.f32 0.0, %v2438
    %v2440 = vpop.f32.mrf.mxu0
    %2441 = vmatprep.mubr.f32.mxu0 0.0
    %2442 = vmatmul.mubr.f32.gmra.mxu0 %v2321
    %v2443 = vpop.f32.mrf.mxu0
    %v2444 = vadd.f32 0.0, %v2443
    %v2445 = vpop.f32.mrf.mxu0
    %2446 = vmatprep.mubr.f32.mxu0 0.0
    %2447 = vmatmul.mubr.f32.gmra.mxu0 %v2322
    %v2448 = vpop.f32.mrf.mxu0
    %v2449 = vadd.f32 0.0, %v2448
    %v2450 = vpop.f32.mrf.mxu0
    %2451 = vmatprep.mubr.f32.mxu0 0.0
    %2452 = vmatmul.mubr.f32.gmra.mxu0 %v2323
    %v2453 = vpop.f32.mrf.mxu0
    %v2454 = vadd.f32 0.0, %v2453
    %v2455 = vpop.f32.mrf.mxu0
    %2456 = vmatprep.mubr.f32.mxu0 0.0
    %2457 = vmatmul.mubr.f32.gmra.mxu0 %v2324
    %v2458 = vpop.f32.mrf.mxu0
    %v2459 = vadd.f32 0.0, %v2458
    %v2460 = vpop.f32.mrf.mxu0
    %2461 = vmatprep.mubr.f32.mxu0 0.0
    %2462 = vmatmul.mubr.f32.gmra.mxu0 %v2325
    %v2463 = vpop.f32.mrf.mxu0
    %v2464 = vadd.f32 0.0, %v2463
    %v2465 = vpop.f32.mrf.mxu0
    %2466 = vmatprep.mubr.f32.mxu0 0.0
    %2467 = vmatmul.mubr.f32.gmra.mxu0 %v2326
    %v2468 = vpop.f32.mrf.mxu0
    %v2469 = vadd.f32 0.0, %v2468
    %v2470 = vpop.f32.mrf.mxu0
    %2471 = vmatprep.mubr.f32.mxu0 0.0
    %2472 = vmatmul.mubr.f32.gmra.mxu0 %v2327
    %v2473 = vpop.f32.mrf.mxu0
    %v2474 = vadd.f32 0.0, %v2473
    %v2475 = vpop.f32.mrf.mxu0
    %2476 = vmatprep.mubr.f32.mxu0 0.0
    %2477 = vmatmul.mubr.f32.gmra.mxu0 %v2328
    %v2478 = vpop.f32.mrf.mxu0
    %v2479 = vadd.f32 0.0, %v2478
    %v2480 = vpop.f32.mrf.mxu0
    %2481 = vmatprep.mubr.f32.mxu0 0.0
    %2482 = vmatmul.mubr.f32.gmra.mxu0 %v2329
    %v2483 = vpop.f32.mrf.mxu0
    %v2484 = vadd.f32 0.0, %v2483
    %v2485 = vpop.f32.mrf.mxu0
    %2486 = vmatprep.mubr.f32.mxu0 0.0
    %2487 = vmatmul.mubr.f32.gmra.mxu0 %v2330
    %v2488 = vpop.f32.mrf.mxu0
    %v2489 = vadd.f32 0.0, %v2488
    %v2490 = vpop.f32.mrf.mxu0
    %2491 = vdwg.mxu0
    %v2492 = vadd.f32 %v2299, %v2414
    %v2493 = vadd.f32 %v2300, %v2419
    %v2494 = vadd.f32 %v2301, %v2424
    %v2495 = vadd.f32 %v2302, %v2429
    %v2496 = vadd.f32 %v2303, %v2434
    %v2497 = vadd.f32 %v2304, %v2439
    %v2498 = vadd.f32 %v2305, %v2444
    %v2499 = vadd.f32 %v2306, %v2449
    %v2500 = vadd.f32 %v2307, %v2454
    %v2501 = vadd.f32 %v2308, %v2459
    %v2502 = vadd.f32 %v2309, %v2464
    %v2503 = vadd.f32 %v2310, %v2469
    %v2504 = vadd.f32 %v2311, %v2474
    %v2505 = vadd.f32 %v2312, %v2479
    %v2506 = vadd.f32 %v2313, %v2484
    %v2507 = vadd.f32 %v2314, %v2489
    %s2508 = scalar_lea.vmem [#allocation2], 976
    %v2509 = vld [vmem:[%s2508] sm:$0xff]
    %v2510 = vld [vmem:[%s2508 + $0x10] sm:$0xff]
    %v2511 = vld [vmem:[%s2508 + $0x20] sm:$0xff]
    %v2512 = vld [vmem:[%s2508 + $0x30] sm:$0xff]
    %v2513 = vld [vmem:[%s2508 + $0x40] sm:$0xff]
    %v2514 = vld [vmem:[%s2508 + $0x50] sm:$0xff]
    %v2515 = vld [vmem:[%s2508 + $0x60] sm:$0xff]
    %v2516 = vld [vmem:[%s2508 + $0x70] sm:$0xff]
    %v2517 = vld [vmem:[%s2508 + $0xa0] sm:$0xff]
    %v2518 = vld [vmem:[%s2508 + $0xb0] sm:$0xff]
    %v2519 = vld [vmem:[%s2508 + $0xc0] sm:$0xff]
    %v2520 = vld [vmem:[%s2508 + $0xd0] sm:$0xff]
    %v2521 = vld [vmem:[%s2508 + $0xe0] sm:$0xff]
    %v2522 = vld [vmem:[%s2508 + $0xf0] sm:$0xff]
    %v2523 = vld [vmem:[%s2508 + $0x100] sm:$0xff]
    %v2524 = vld [vmem:[%s2508 + $0x110] sm:$0xff]
    %v2525 = vld [vmem:[#allocation8 + $0x300] sm:$0xff]
    %v2526 = vld [vmem:[#allocation8 + $0x308] sm:$0xff]
    %v2527 = vld [vmem:[#allocation8 + $0x310] sm:$0xff]
    %v2528 = vld [vmem:[#allocation8 + $0x318] sm:$0xff]
    %v2529 = vld [vmem:[#allocation8 + $0x320] sm:$0xff]
    %v2530 = vld [vmem:[#allocation8 + $0x328] sm:$0xff]
    %v2531 = vld [vmem:[#allocation8 + $0x330] sm:$0xff]
    %v2532 = vld [vmem:[#allocation8 + $0x338] sm:$0xff]
    %v2533 = vld [vmem:[#allocation8 + $0x340] sm:$0xff]
    %v2534 = vld [vmem:[#allocation8 + $0x348] sm:$0xff]
    %v2535 = vld [vmem:[#allocation8 + $0x350] sm:$0xff]
    %v2536 = vld [vmem:[#allocation8 + $0x358] sm:$0xff]
    %v2537 = vld [vmem:[#allocation8 + $0x360] sm:$0xff]
    %v2538 = vld [vmem:[#allocation8 + $0x368] sm:$0xff]
    %v2539 = vld [vmem:[#allocation8 + $0x370] sm:$0xff]
    %v2540 = vld [vmem:[#allocation8 + $0x378] sm:$0xff]
    %2541 = vmatprep.subr.mxu0 0.0
    %2542 = vmatpush1.msra.mxu0 %v2540
    %2543 = vmatprep.subr.mxu0 0.0
    %2544 = vmatpush1.msra.mxu0 %v2539
    %2545 = vmatprep.subr.mxu0 0.0
    %2546 = vmatpush1.msra.mxu0 %v2538
    %2547 = vmatprep.subr.mxu0 0.0
    %2548 = vmatpush1.msra.mxu0 %v2537
    %2549 = vmatprep.subr.mxu0 0.0
    %2550 = vmatpush1.msra.mxu0 %v2536
    %2551 = vmatprep.subr.mxu0 0.0
    %2552 = vmatpush1.msra.mxu0 %v2535
    %2553 = vmatprep.subr.mxu0 0.0
    %2554 = vmatpush1.msra.mxu0 %v2534
    %2555 = vmatprep.subr.mxu0 0.0
    %2556 = vmatpush1.msra.mxu0 %v2533
    %2557 = vmatprep.subr.mxu0 0.0
    %2558 = vmatpush1.msra.mxu0 %v2532
    %2559 = vmatprep.subr.mxu0 0.0
    %2560 = vmatpush1.msra.mxu0 %v2531
    %2561 = vmatprep.subr.mxu0 0.0
    %2562 = vmatpush1.msra.mxu0 %v2530
    %2563 = vmatprep.subr.mxu0 0.0
    %2564 = vmatpush1.msra.mxu0 %v2529
    %2565 = vmatprep.subr.mxu0 0.0
    %2566 = vmatpush1.msra.mxu0 %v2528
    %2567 = vmatprep.subr.mxu0 0.0
    %2568 = vmatpush1.msra.mxu0 %v2527
    %2569 = vmatprep.subr.mxu0 0.0
    %2570 = vmatpush1.msra.mxu0 %v2526
    %2571 = vmatprep.subr.mxu0 0.0
    %2572 = vmatpush1.msra.mxu0 %v2525
    %2573 = vmatprep.subr.mxu0 0.0
    %2574 = vmatpush2.msra.mxu0 0.0
    %2575 = vmatprep.subr.mxu0 0.0
    %2576 = vmatpush2.msra.mxu0 0.0
    %2577 = vmatprep.subr.mxu0 0.0
    %2578 = vmatpush2.msra.mxu0 0.0
    %2579 = vmatprep.subr.mxu0 0.0
    %2580 = vmatpush2.msra.mxu0 0.0
    %2581 = vmatprep.subr.mxu0 0.0
    %2582 = vmatpush2.msra.mxu0 0.0
    %2583 = vmatprep.subr.mxu0 0.0
    %2584 = vmatpush2.msra.mxu0 0.0
    %2585 = vmatprep.subr.mxu0 0.0
    %2586 = vmatpush2.msra.mxu0 0.0
    %2587 = vmatprep.subr.mxu0 0.0
    %2588 = vmatpush2.msra.mxu0 0.0
    %2589 = vmatprep.subr.mxu0 0.0
    %2590 = vmatpush2.msra.mxu0 0.0
    %2591 = vmatprep.subr.mxu0 0.0
    %2592 = vmatpush2.msra.mxu0 0.0
    %2593 = vmatprep.subr.mxu0 0.0
    %2594 = vmatpush2.msra.mxu0 0.0
    %2595 = vmatprep.subr.mxu0 0.0
    %2596 = vmatpush2.msra.mxu0 0.0
    %2597 = vmatprep.subr.mxu0 0.0
    %2598 = vmatpush2.msra.mxu0 0.0
    %2599 = vmatprep.subr.mxu0 0.0
    %2600 = vmatpush2.msra.mxu0 0.0
    %2601 = vmatprep.subr.mxu0 0.0
    %2602 = vmatpush2.msra.mxu0 0.0
    %2603 = vmatprep.subr.mxu0 0.0
    %2604 = vmatpush2.msra.mxu0 0.0
    %2605 = vmatprep.mubr.f32.mxu0 0.0
    %2606 = vmatmul.mubr.f32.gmra.mxu0 %v2509
    %v2607 = vpop.f32.mrf.mxu0
    %v2608 = vadd.f32 0.0, %v2607
    %v2609 = vpop.f32.mrf.mxu0
    %2610 = vmatprep.mubr.f32.mxu0 0.0
    %2611 = vmatmul.mubr.f32.gmra.mxu0 %v2510
    %v2612 = vpop.f32.mrf.mxu0
    %v2613 = vadd.f32 0.0, %v2612
    %v2614 = vpop.f32.mrf.mxu0
    %2615 = vmatprep.mubr.f32.mxu0 0.0
    %2616 = vmatmul.mubr.f32.gmra.mxu0 %v2511
    %v2617 = vpop.f32.mrf.mxu0
    %v2618 = vadd.f32 0.0, %v2617
    %v2619 = vpop.f32.mrf.mxu0
    %2620 = vmatprep.mubr.f32.mxu0 0.0
    %2621 = vmatmul.mubr.f32.gmra.mxu0 %v2512
    %v2622 = vpop.f32.mrf.mxu0
    %v2623 = vadd.f32 0.0, %v2622
    %v2624 = vpop.f32.mrf.mxu0
    %2625 = vmatprep.mubr.f32.mxu0 0.0
    %2626 = vmatmul.mubr.f32.gmra.mxu0 %v2513
    %v2627 = vpop.f32.mrf.mxu0
    %v2628 = vadd.f32 0.0, %v2627
    %v2629 = vpop.f32.mrf.mxu0
    %2630 = vmatprep.mubr.f32.mxu0 0.0
    %2631 = vmatmul.mubr.f32.gmra.mxu0 %v2514
    %v2632 = vpop.f32.mrf.mxu0
    %v2633 = vadd.f32 0.0, %v2632
    %v2634 = vpop.f32.mrf.mxu0
    %2635 = vmatprep.mubr.f32.mxu0 0.0
    %2636 = vmatmul.mubr.f32.gmra.mxu0 %v2515
    %v2637 = vpop.f32.mrf.mxu0
    %v2638 = vadd.f32 0.0, %v2637
    %v2639 = vpop.f32.mrf.mxu0
    %2640 = vmatprep.mubr.f32.mxu0 0.0
    %2641 = vmatmul.mubr.f32.gmra.mxu0 %v2516
    %v2642 = vpop.f32.mrf.mxu0
    %v2643 = vadd.f32 0.0, %v2642
    %v2644 = vpop.f32.mrf.mxu0
    %2645 = vmatprep.mubr.f32.mxu0 0.0
    %2646 = vmatmul.mubr.f32.gmra.mxu0 %v2517
    %v2647 = vpop.f32.mrf.mxu0
    %v2648 = vadd.f32 0.0, %v2647
    %v2649 = vpop.f32.mrf.mxu0
    %2650 = vmatprep.mubr.f32.mxu0 0.0
    %2651 = vmatmul.mubr.f32.gmra.mxu0 %v2518
    %v2652 = vpop.f32.mrf.mxu0
    %v2653 = vadd.f32 0.0, %v2652
    %v2654 = vpop.f32.mrf.mxu0
    %2655 = vmatprep.mubr.f32.mxu0 0.0
    %2656 = vmatmul.mubr.f32.gmra.mxu0 %v2519
    %v2657 = vpop.f32.mrf.mxu0
    %v2658 = vadd.f32 0.0, %v2657
    %v2659 = vpop.f32.mrf.mxu0
    %2660 = vmatprep.mubr.f32.mxu0 0.0
    %2661 = vmatmul.mubr.f32.gmra.mxu0 %v2520
    %v2662 = vpop.f32.mrf.mxu0
    %v2663 = vadd.f32 0.0, %v2662
    %v2664 = vpop.f32.mrf.mxu0
    %2665 = vmatprep.mubr.f32.mxu0 0.0
    %2666 = vmatmul.mubr.f32.gmra.mxu0 %v2521
    %v2667 = vpop.f32.mrf.mxu0
    %v2668 = vadd.f32 0.0, %v2667
    %v2669 = vpop.f32.mrf.mxu0
    %2670 = vmatprep.mubr.f32.mxu0 0.0
    %2671 = vmatmul.mubr.f32.gmra.mxu0 %v2522
    %v2672 = vpop.f32.mrf.mxu0
    %v2673 = vadd.f32 0.0, %v2672
    %v2674 = vpop.f32.mrf.mxu0
    %2675 = vmatprep.mubr.f32.mxu0 0.0
    %2676 = vmatmul.mubr.f32.gmra.mxu0 %v2523
    %v2677 = vpop.f32.mrf.mxu0
    %v2678 = vadd.f32 0.0, %v2677
    %v2679 = vpop.f32.mrf.mxu0
    %2680 = vmatprep.mubr.f32.mxu0 0.0
    %2681 = vmatmul.mubr.f32.gmra.mxu0 %v2524
    %v2682 = vpop.f32.mrf.mxu0
    %v2683 = vadd.f32 0.0, %v2682
    %v2684 = vpop.f32.mrf.mxu0
    %2685 = vdwg.mxu0
    %v2686 = vadd.f32 %v2492, %v2608
    %v2687 = vadd.f32 %v2493, %v2613
    %v2688 = vadd.f32 %v2494, %v2618
    %v2689 = vadd.f32 %v2495, %v2623
    %v2690 = vadd.f32 %v2496, %v2628
    %v2691 = vadd.f32 %v2497, %v2633
    %v2692 = vadd.f32 %v2498, %v2638
    %v2693 = vadd.f32 %v2499, %v2643
    %v2694 = vadd.f32 %v2500, %v2648
    %v2695 = vadd.f32 %v2501, %v2653
    %v2696 = vadd.f32 %v2502, %v2658
    %v2697 = vadd.f32 %v2503, %v2663
    %v2698 = vadd.f32 %v2504, %v2668
    %v2699 = vadd.f32 %v2505, %v2673
    %v2700 = vadd.f32 %v2506, %v2678
    %v2701 = vadd.f32 %v2507, %v2683
    %s2702 = scalar_lea.vmem [#allocation2], 656
    %v2703 = vld [vmem:[%s2702 + $0x1] sm:$0xff]
    %v2704 = vld [vmem:[%s2702 + $0x11] sm:$0xff]
    %v2705 = vld [vmem:[%s2702 + $0x21] sm:$0xff]
    %v2706 = vld [vmem:[%s2702 + $0x31] sm:$0xff]
    %v2707 = vld [vmem:[%s2702 + $0x41] sm:$0xff]
    %v2708 = vld [vmem:[%s2702 + $0x51] sm:$0xff]
    %v2709 = vld [vmem:[%s2702 + $0x61] sm:$0xff]
    %v2710 = vld [vmem:[%s2702 + $0x71] sm:$0xff]
    %v2711 = vld [vmem:[%s2702 + $0xa1] sm:$0xff]
    %v2712 = vld [vmem:[%s2702 + $0xb1] sm:$0xff]
    %v2713 = vld [vmem:[%s2702 + $0xc1] sm:$0xff]
    %v2714 = vld [vmem:[%s2702 + $0xd1] sm:$0xff]
    %v2715 = vld [vmem:[%s2702 + $0xe1] sm:$0xff]
    %v2716 = vld [vmem:[%s2702 + $0xf1] sm:$0xff]
    %v2717 = vld [vmem:[%s2702 + $0x101] sm:$0xff]
    %v2718 = vld [vmem:[%s2702 + $0x111] sm:$0xff]
    %v2719 = vld [vmem:[#allocation8 + $0x380] sm:$0xff]
    %v2720 = vld [vmem:[#allocation8 + $0x388] sm:$0xff]
    %v2721 = vld [vmem:[#allocation8 + $0x390] sm:$0xff]
    %v2722 = vld [vmem:[#allocation8 + $0x398] sm:$0xff]
    %v2723 = vld [vmem:[#allocation8 + $0x3a0] sm:$0xff]
    %v2724 = vld [vmem:[#allocation8 + $0x3a8] sm:$0xff]
    %v2725 = vld [vmem:[#allocation8 + $0x3b0] sm:$0xff]
    %v2726 = vld [vmem:[#allocation8 + $0x3b8] sm:$0xff]
    %v2727 = vld [vmem:[#allocation8 + $0x3c0] sm:$0xff]
    %v2728 = vld [vmem:[#allocation8 + $0x3c8] sm:$0xff]
    %v2729 = vld [vmem:[#allocation8 + $0x3d0] sm:$0xff]
    %v2730 = vld [vmem:[#allocation8 + $0x3d8] sm:$0xff]
    %v2731 = vld [vmem:[#allocation8 + $0x3e0] sm:$0xff]
    %v2732 = vld [vmem:[#allocation8 + $0x3e8] sm:$0xff]
    %v2733 = vld [vmem:[#allocation8 + $0x3f0] sm:$0xff]
    %v2734 = vld [vmem:[#allocation8 + $0x3f8] sm:$0xff]
    %2735 = vmatprep.subr.mxu0 0.0
    %2736 = vmatpush1.msra.mxu0 %v2734
    %2737 = vmatprep.subr.mxu0 0.0
    %2738 = vmatpush1.msra.mxu0 %v2733
    %2739 = vmatprep.subr.mxu0 0.0
    %2740 = vmatpush1.msra.mxu0 %v2732
    %2741 = vmatprep.subr.mxu0 0.0
    %2742 = vmatpush1.msra.mxu0 %v2731
    %2743 = vmatprep.subr.mxu0 0.0
    %2744 = vmatpush1.msra.mxu0 %v2730
    %2745 = vmatprep.subr.mxu0 0.0
    %2746 = vmatpush1.msra.mxu0 %v2729
    %2747 = vmatprep.subr.mxu0 0.0
    %2748 = vmatpush1.msra.mxu0 %v2728
    %2749 = vmatprep.subr.mxu0 0.0
    %2750 = vmatpush1.msra.mxu0 %v2727
    %2751 = vmatprep.subr.mxu0 0.0
    %2752 = vmatpush1.msra.mxu0 %v2726
    %2753 = vmatprep.subr.mxu0 0.0
    %2754 = vmatpush1.msra.mxu0 %v2725
    %2755 = vmatprep.subr.mxu0 0.0
    %2756 = vmatpush1.msra.mxu0 %v2724
    %2757 = vmatprep.subr.mxu0 0.0
    %2758 = vmatpush1.msra.mxu0 %v2723
    %2759 = vmatprep.subr.mxu0 0.0
    %2760 = vmatpush1.msra.mxu0 %v2722
    %2761 = vmatprep.subr.mxu0 0.0
    %2762 = vmatpush1.msra.mxu0 %v2721
    %2763 = vmatprep.subr.mxu0 0.0
    %2764 = vmatpush1.msra.mxu0 %v2720
    %2765 = vmatprep.subr.mxu0 0.0
    %2766 = vmatpush1.msra.mxu0 %v2719
    %2767 = vmatprep.subr.mxu0 0.0
    %2768 = vmatpush2.msra.mxu0 0.0
    %2769 = vmatprep.subr.mxu0 0.0
    %2770 = vmatpush2.msra.mxu0 0.0
    %2771 = vmatprep.subr.mxu0 0.0
    %2772 = vmatpush2.msra.mxu0 0.0
    %2773 = vmatprep.subr.mxu0 0.0
    %2774 = vmatpush2.msra.mxu0 0.0
    %2775 = vmatprep.subr.mxu0 0.0
    %2776 = vmatpush2.msra.mxu0 0.0
    %2777 = vmatprep.subr.mxu0 0.0
    %2778 = vmatpush2.msra.mxu0 0.0
    %2779 = vmatprep.subr.mxu0 0.0
    %2780 = vmatpush2.msra.mxu0 0.0
    %2781 = vmatprep.subr.mxu0 0.0
    %2782 = vmatpush2.msra.mxu0 0.0
    %2783 = vmatprep.subr.mxu0 0.0
    %2784 = vmatpush2.msra.mxu0 0.0
    %2785 = vmatprep.subr.mxu0 0.0
    %2786 = vmatpush2.msra.mxu0 0.0
    %2787 = vmatprep.subr.mxu0 0.0
    %2788 = vmatpush2.msra.mxu0 0.0
    %2789 = vmatprep.subr.mxu0 0.0
    %2790 = vmatpush2.msra.mxu0 0.0
    %2791 = vmatprep.subr.mxu0 0.0
    %2792 = vmatpush2.msra.mxu0 0.0
    %2793 = vmatprep.subr.mxu0 0.0
    %2794 = vmatpush2.msra.mxu0 0.0
    %2795 = vmatprep.subr.mxu0 0.0
    %2796 = vmatpush2.msra.mxu0 0.0
    %2797 = vmatprep.subr.mxu0 0.0
    %2798 = vmatpush2.msra.mxu0 0.0
    %2799 = vmatprep.mubr.f32.mxu0 0.0
    %2800 = vmatmul.mubr.f32.gmra.mxu0 %v2703
    %v2801 = vpop.f32.mrf.mxu0
    %v2802 = vadd.f32 0.0, %v2801
    %v2803 = vpop.f32.mrf.mxu0
    %2804 = vmatprep.mubr.f32.mxu0 0.0
    %2805 = vmatmul.mubr.f32.gmra.mxu0 %v2704
    %v2806 = vpop.f32.mrf.mxu0
    %v2807 = vadd.f32 0.0, %v2806
    %v2808 = vpop.f32.mrf.mxu0
    %2809 = vmatprep.mubr.f32.mxu0 0.0
    %2810 = vmatmul.mubr.f32.gmra.mxu0 %v2705
    %v2811 = vpop.f32.mrf.mxu0
    %v2812 = vadd.f32 0.0, %v2811
    %v2813 = vpop.f32.mrf.mxu0
    %2814 = vmatprep.mubr.f32.mxu0 0.0
    %2815 = vmatmul.mubr.f32.gmra.mxu0 %v2706
    %v2816 = vpop.f32.mrf.mxu0
    %v2817 = vadd.f32 0.0, %v2816
    %v2818 = vpop.f32.mrf.mxu0
    %2819 = vmatprep.mubr.f32.mxu0 0.0
    %2820 = vmatmul.mubr.f32.gmra.mxu0 %v2707
    %v2821 = vpop.f32.mrf.mxu0
    %v2822 = vadd.f32 0.0, %v2821
    %v2823 = vpop.f32.mrf.mxu0
    %2824 = vmatprep.mubr.f32.mxu0 0.0
    %2825 = vmatmul.mubr.f32.gmra.mxu0 %v2708
    %v2826 = vpop.f32.mrf.mxu0
    %v2827 = vadd.f32 0.0, %v2826
    %v2828 = vpop.f32.mrf.mxu0
    %2829 = vmatprep.mubr.f32.mxu0 0.0
    %2830 = vmatmul.mubr.f32.gmra.mxu0 %v2709
    %v2831 = vpop.f32.mrf.mxu0
    %v2832 = vadd.f32 0.0, %v2831
    %v2833 = vpop.f32.mrf.mxu0
    %2834 = vmatprep.mubr.f32.mxu0 0.0
    %2835 = vmatmul.mubr.f32.gmra.mxu0 %v2710
    %v2836 = vpop.f32.mrf.mxu0
    %v2837 = vadd.f32 0.0, %v2836
    %v2838 = vpop.f32.mrf.mxu0
    %2839 = vmatprep.mubr.f32.mxu0 0.0
    %2840 = vmatmul.mubr.f32.gmra.mxu0 %v2711
    %v2841 = vpop.f32.mrf.mxu0
    %v2842 = vadd.f32 0.0, %v2841
    %v2843 = vpop.f32.mrf.mxu0
    %2844 = vmatprep.mubr.f32.mxu0 0.0
    %2845 = vmatmul.mubr.f32.gmra.mxu0 %v2712
    %v2846 = vpop.f32.mrf.mxu0
    %v2847 = vadd.f32 0.0, %v2846
    %v2848 = vpop.f32.mrf.mxu0
    %2849 = vmatprep.mubr.f32.mxu0 0.0
    %2850 = vmatmul.mubr.f32.gmra.mxu0 %v2713
    %v2851 = vpop.f32.mrf.mxu0
    %v2852 = vadd.f32 0.0, %v2851
    %v2853 = vpop.f32.mrf.mxu0
    %2854 = vmatprep.mubr.f32.mxu0 0.0
    %2855 = vmatmul.mubr.f32.gmra.mxu0 %v2714
    %v2856 = vpop.f32.mrf.mxu0
    %v2857 = vadd.f32 0.0, %v2856
    %v2858 = vpop.f32.mrf.mxu0
    %2859 = vmatprep.mubr.f32.mxu0 0.0
    %2860 = vmatmul.mubr.f32.gmra.mxu0 %v2715
    %v2861 = vpop.f32.mrf.mxu0
    %v2862 = vadd.f32 0.0, %v2861
    %v2863 = vpop.f32.mrf.mxu0
    %2864 = vmatprep.mubr.f32.mxu0 0.0
    %2865 = vmatmul.mubr.f32.gmra.mxu0 %v2716
    %v2866 = vpop.f32.mrf.mxu0
    %v2867 = vadd.f32 0.0, %v2866
    %v2868 = vpop.f32.mrf.mxu0
    %2869 = vmatprep.mubr.f32.mxu0 0.0
    %2870 = vmatmul.mubr.f32.gmra.mxu0 %v2717
    %v2871 = vpop.f32.mrf.mxu0
    %v2872 = vadd.f32 0.0, %v2871
    %v2873 = vpop.f32.mrf.mxu0
    %2874 = vmatprep.mubr.f32.mxu0 0.0
    %2875 = vmatmul.mubr.f32.gmra.mxu0 %v2718
    %v2876 = vpop.f32.mrf.mxu0
    %v2877 = vadd.f32 0.0, %v2876
    %v2878 = vpop.f32.mrf.mxu0
    %2879 = vdwg.mxu0
    %v2880 = vadd.f32 %v2686, %v2802
    %v2881 = vadd.f32 %v2687, %v2807
    %v2882 = vadd.f32 %v2688, %v2812
    %v2883 = vadd.f32 %v2689, %v2817
    %v2884 = vadd.f32 %v2690, %v2822
    %v2885 = vadd.f32 %v2691, %v2827
    %v2886 = vadd.f32 %v2692, %v2832
    %v2887 = vadd.f32 %v2693, %v2837
    %v2888 = vadd.f32 %v2694, %v2842
    %v2889 = vadd.f32 %v2695, %v2847
    %v2890 = vadd.f32 %v2696, %v2852
    %v2891 = vadd.f32 %v2697, %v2857
    %v2892 = vadd.f32 %v2698, %v2862
    %v2893 = vadd.f32 %v2699, %v2867
    %v2894 = vadd.f32 %v2700, %v2872
    %v2895 = vadd.f32 %v2701, %v2877
    %v2896 = vld [vmem:[%s2508 + $0x1] sm:$0xff]
    %v2897 = vld [vmem:[%s2508 + $0x11] sm:$0xff]
    %v2898 = vld [vmem:[%s2508 + $0x21] sm:$0xff]
    %v2899 = vld [vmem:[%s2508 + $0x31] sm:$0xff]
    %v2900 = vld [vmem:[%s2508 + $0x41] sm:$0xff]
    %v2901 = vld [vmem:[%s2508 + $0x51] sm:$0xff]
    %v2902 = vld [vmem:[%s2508 + $0x61] sm:$0xff]
    %v2903 = vld [vmem:[%s2508 + $0x71] sm:$0xff]
    %v2904 = vld [vmem:[%s2508 + $0xa1] sm:$0xff]
    %v2905 = vld [vmem:[%s2508 + $0xb1] sm:$0xff]
    %v2906 = vld [vmem:[%s2508 + $0xc1] sm:$0xff]
    %v2907 = vld [vmem:[%s2508 + $0xd1] sm:$0xff]
    %v2908 = vld [vmem:[%s2508 + $0xe1] sm:$0xff]
    %v2909 = vld [vmem:[%s2508 + $0xf1] sm:$0xff]
    %v2910 = vld [vmem:[%s2508 + $0x101] sm:$0xff]
    %v2911 = vld [vmem:[%s2508 + $0x111] sm:$0xff]
    %v2912 = vld [vmem:[#allocation8 + $0x400] sm:$0xff]
    %v2913 = vld [vmem:[#allocation8 + $0x408] sm:$0xff]
    %v2914 = vld [vmem:[#allocation8 + $0x410] sm:$0xff]
    %v2915 = vld [vmem:[#allocation8 + $0x418] sm:$0xff]
    %v2916 = vld [vmem:[#allocation8 + $0x420] sm:$0xff]
    %v2917 = vld [vmem:[#allocation8 + $0x428] sm:$0xff]
    %v2918 = vld [vmem:[#allocation8 + $0x430] sm:$0xff]
    %v2919 = vld [vmem:[#allocation8 + $0x438] sm:$0xff]
    %v2920 = vld [vmem:[#allocation8 + $0x440] sm:$0xff]
    %v2921 = vld [vmem:[#allocation8 + $0x448] sm:$0xff]
    %v2922 = vld [vmem:[#allocation8 + $0x450] sm:$0xff]
    %v2923 = vld [vmem:[#allocation8 + $0x458] sm:$0xff]
    %v2924 = vld [vmem:[#allocation8 + $0x460] sm:$0xff]
    %v2925 = vld [vmem:[#allocation8 + $0x468] sm:$0xff]
    %v2926 = vld [vmem:[#allocation8 + $0x470] sm:$0xff]
    %v2927 = vld [vmem:[#allocation8 + $0x478] sm:$0xff]
    %2928 = vmatprep.subr.mxu0 0.0
    %2929 = vmatpush1.msra.mxu0 %v2927
    %2930 = vmatprep.subr.mxu0 0.0
    %2931 = vmatpush1.msra.mxu0 %v2926
    %2932 = vmatprep.subr.mxu0 0.0
    %2933 = vmatpush1.msra.mxu0 %v2925
    %2934 = vmatprep.subr.mxu0 0.0
    %2935 = vmatpush1.msra.mxu0 %v2924
    %2936 = vmatprep.subr.mxu0 0.0
    %2937 = vmatpush1.msra.mxu0 %v2923
    %2938 = vmatprep.subr.mxu0 0.0
    %2939 = vmatpush1.msra.mxu0 %v2922
    %2940 = vmatprep.subr.mxu0 0.0
    %2941 = vmatpush1.msra.mxu0 %v2921
    %2942 = vmatprep.subr.mxu0 0.0
    %2943 = vmatpush1.msra.mxu0 %v2920
    %2944 = vmatprep.subr.mxu0 0.0
    %2945 = vmatpush1.msra.mxu0 %v2919
    %2946 = vmatprep.subr.mxu0 0.0
    %2947 = vmatpush1.msra.mxu0 %v2918
    %2948 = vmatprep.subr.mxu0 0.0
    %2949 = vmatpush1.msra.mxu0 %v2917
    %2950 = vmatprep.subr.mxu0 0.0
    %2951 = vmatpush1.msra.mxu0 %v2916
    %2952 = vmatprep.subr.mxu0 0.0
    %2953 = vmatpush1.msra.mxu0 %v2915
    %2954 = vmatprep.subr.mxu0 0.0
    %2955 = vmatpush1.msra.mxu0 %v2914
    %2956 = vmatprep.subr.mxu0 0.0
    %2957 = vmatpush1.msra.mxu0 %v2913
    %2958 = vmatprep.subr.mxu0 0.0
    %2959 = vmatpush1.msra.mxu0 %v2912
    %2960 = vmatprep.subr.mxu0 0.0
    %2961 = vmatpush2.msra.mxu0 0.0
    %2962 = vmatprep.subr.mxu0 0.0
    %2963 = vmatpush2.msra.mxu0 0.0
    %2964 = vmatprep.subr.mxu0 0.0
    %2965 = vmatpush2.msra.mxu0 0.0
    %2966 = vmatprep.subr.mxu0 0.0
    %2967 = vmatpush2.msra.mxu0 0.0
    %2968 = vmatprep.subr.mxu0 0.0
    %2969 = vmatpush2.msra.mxu0 0.0
    %2970 = vmatprep.subr.mxu0 0.0
    %2971 = vmatpush2.msra.mxu0 0.0
    %2972 = vmatprep.subr.mxu0 0.0
    %2973 = vmatpush2.msra.mxu0 0.0
    %2974 = vmatprep.subr.mxu0 0.0
    %2975 = vmatpush2.msra.mxu0 0.0
    %2976 = vmatprep.subr.mxu0 0.0
    %2977 = vmatpush2.msra.mxu0 0.0
    %2978 = vmatprep.subr.mxu0 0.0
    %2979 = vmatpush2.msra.mxu0 0.0
    %2980 = vmatprep.subr.mxu0 0.0
    %2981 = vmatpush2.msra.mxu0 0.0
    %2982 = vmatprep.subr.mxu0 0.0
    %2983 = vmatpush2.msra.mxu0 0.0
    %2984 = vmatprep.subr.mxu0 0.0
    %2985 = vmatpush2.msra.mxu0 0.0
    %2986 = vmatprep.subr.mxu0 0.0
    %2987 = vmatpush2.msra.mxu0 0.0
    %2988 = vmatprep.subr.mxu0 0.0
    %2989 = vmatpush2.msra.mxu0 0.0
    %2990 = vmatprep.subr.mxu0 0.0
    %2991 = vmatpush2.msra.mxu0 0.0
    %2992 = vmatprep.mubr.f32.mxu0 0.0
    %2993 = vmatmul.mubr.f32.gmra.mxu0 %v2896
    %v2994 = vpop.f32.mrf.mxu0
    %v2995 = vadd.f32 0.0, %v2994
    %v2996 = vpop.f32.mrf.mxu0
    %2997 = vmatprep.mubr.f32.mxu0 0.0
    %2998 = vmatmul.mubr.f32.gmra.mxu0 %v2897
    %v2999 = vpop.f32.mrf.mxu0
    %v3000 = vadd.f32 0.0, %v2999
    %v3001 = vpop.f32.mrf.mxu0
    %3002 = vmatprep.mubr.f32.mxu0 0.0
    %3003 = vmatmul.mubr.f32.gmra.mxu0 %v2898
    %v3004 = vpop.f32.mrf.mxu0
    %v3005 = vadd.f32 0.0, %v3004
    %v3006 = vpop.f32.mrf.mxu0
    %3007 = vmatprep.mubr.f32.mxu0 0.0
    %3008 = vmatmul.mubr.f32.gmra.mxu0 %v2899
    %v3009 = vpop.f32.mrf.mxu0
    %v3010 = vadd.f32 0.0, %v3009
    %v3011 = vpop.f32.mrf.mxu0
    %3012 = vmatprep.mubr.f32.mxu0 0.0
    %3013 = vmatmul.mubr.f32.gmra.mxu0 %v2900
    %v3014 = vpop.f32.mrf.mxu0
    %v3015 = vadd.f32 0.0, %v3014
    %v3016 = vpop.f32.mrf.mxu0
    %3017 = vmatprep.mubr.f32.mxu0 0.0
    %3018 = vmatmul.mubr.f32.gmra.mxu0 %v2901
    %v3019 = vpop.f32.mrf.mxu0
    %v3020 = vadd.f32 0.0, %v3019
    %v3021 = vpop.f32.mrf.mxu0
    %3022 = vmatprep.mubr.f32.mxu0 0.0
    %3023 = vmatmul.mubr.f32.gmra.mxu0 %v2902
    %v3024 = vpop.f32.mrf.mxu0
    %v3025 = vadd.f32 0.0, %v3024
    %v3026 = vpop.f32.mrf.mxu0
    %3027 = vmatprep.mubr.f32.mxu0 0.0
    %3028 = vmatmul.mubr.f32.gmra.mxu0 %v2903
    %v3029 = vpop.f32.mrf.mxu0
    %v3030 = vadd.f32 0.0, %v3029
    %v3031 = vpop.f32.mrf.mxu0
    %3032 = vmatprep.mubr.f32.mxu0 0.0
    %3033 = vmatmul.mubr.f32.gmra.mxu0 %v2904
    %v3034 = vpop.f32.mrf.mxu0
    %v3035 = vadd.f32 0.0, %v3034
    %v3036 = vpop.f32.mrf.mxu0
    %3037 = vmatprep.mubr.f32.mxu0 0.0
    %3038 = vmatmul.mubr.f32.gmra.mxu0 %v2905
    %v3039 = vpop.f32.mrf.mxu0
    %v3040 = vadd.f32 0.0, %v3039
    %v3041 = vpop.f32.mrf.mxu0
    %3042 = vmatprep.mubr.f32.mxu0 0.0
    %3043 = vmatmul.mubr.f32.gmra.mxu0 %v2906
    %v3044 = vpop.f32.mrf.mxu0
    %v3045 = vadd.f32 0.0, %v3044
    %v3046 = vpop.f32.mrf.mxu0
    %3047 = vmatprep.mubr.f32.mxu0 0.0
    %3048 = vmatmul.mubr.f32.gmra.mxu0 %v2907
    %v3049 = vpop.f32.mrf.mxu0
    %v3050 = vadd.f32 0.0, %v3049
    %v3051 = vpop.f32.mrf.mxu0
    %3052 = vmatprep.mubr.f32.mxu0 0.0
    %3053 = vmatmul.mubr.f32.gmra.mxu0 %v2908
    %v3054 = vpop.f32.mrf.mxu0
    %v3055 = vadd.f32 0.0, %v3054
    %v3056 = vpop.f32.mrf.mxu0
    %3057 = vmatprep.mubr.f32.mxu0 0.0
    %3058 = vmatmul.mubr.f32.gmra.mxu0 %v2909
    %v3059 = vpop.f32.mrf.mxu0
    %v3060 = vadd.f32 0.0, %v3059
    %v3061 = vpop.f32.mrf.mxu0
    %3062 = vmatprep.mubr.f32.mxu0 0.0
    %3063 = vmatmul.mubr.f32.gmra.mxu0 %v2910
    %v3064 = vpop.f32.mrf.mxu0
    %v3065 = vadd.f32 0.0, %v3064
    %v3066 = vpop.f32.mrf.mxu0
    %3067 = vmatprep.mubr.f32.mxu0 0.0
    %3068 = vmatmul.mubr.f32.gmra.mxu0 %v2911
    %v3069 = vpop.f32.mrf.mxu0
    %v3070 = vadd.f32 0.0, %v3069
    %v3071 = vpop.f32.mrf.mxu0
    %3072 = vdwg.mxu0
    %v3073 = vadd.f32 %v2880, %v2995
    %v3074 = vadd.f32 %v2881, %v3000
    %v3075 = vadd.f32 %v2882, %v3005
    %v3076 = vadd.f32 %v2883, %v3010
    %v3077 = vadd.f32 %v2884, %v3015
    %v3078 = vadd.f32 %v2885, %v3020
    %v3079 = vadd.f32 %v2886, %v3025
    %v3080 = vadd.f32 %v2887, %v3030
    %v3081 = vadd.f32 %v2888, %v3035
    %v3082 = vadd.f32 %v2889, %v3040
    %v3083 = vadd.f32 %v2890, %v3045
    %v3084 = vadd.f32 %v2891, %v3050
    %v3085 = vadd.f32 %v2892, %v3055
    %v3086 = vadd.f32 %v2893, %v3060
    %v3087 = vadd.f32 %v2894, %v3065
    %v3088 = vadd.f32 %v2895, %v3070
    %v3089 = vld [vmem:[%s5] sm:$0x1]
    %v3090 = vld [vmem:[%s6] sm:$0x1]
    %v3091 = vadd.f32 %v3073, %v3074
    %v3092 = vadd.f32 %v3091, %v3075
    %v3093 = vadd.f32 %v3092, %v3076
    %v3094 = vadd.f32 %v3093, %v3077
    %v3095 = vadd.f32 %v3094, %v3078
    %v3096 = vadd.f32 %v3095, %v3079
    %v3097 = vadd.f32 %v3096, %v3080
    %v3098 = vadd.f32 %v3097, %v3081
    %v3099 = vadd.f32 %v3098, %v3082
    %v3100 = vadd.f32 %v3099, %v3083
    %v3101 = vadd.f32 %v3100, %v3084
    %v3102 = vadd.f32 %v3101, %v3085
    %v3103 = vadd.f32 %v3102, %v3086
    %v3104 = vadd.f32 %v3103, %v3087
    %v3105 = vadd.f32 %v3104, %v3088
    %v3106 = vrot.slane %v3105, 4
    %v3107 = vadd.f32 %v3105, %v3106
    %v3108 = vrot.slane %v3107, 2
    %v3109 = vadd.f32 %v3107, %v3108
    %v3110 = vrot.slane %v3109, 1
    %v3111 = vadd.f32 %v3109, %v3110
    %v3112 = vrcp.pop 128.0
    %v3113 = vmul.f32 %v3111, %v3112
    %v3114 = vmul.f32 %v3073, %v3073
    %v3115 = vmul.f32 %v3074, %v3074
    %v3116 = vmul.f32 %v3075, %v3075
    %v3117 = vmul.f32 %v3076, %v3076
    %v3118 = vmul.f32 %v3077, %v3077
    %v3119 = vmul.f32 %v3078, %v3078
    %v3120 = vmul.f32 %v3079, %v3079
    %v3121 = vmul.f32 %v3080, %v3080
    %v3122 = vmul.f32 %v3081, %v3081
    %v3123 = vmul.f32 %v3082, %v3082
    %v3124 = vmul.f32 %v3083, %v3083
    %v3125 = vmul.f32 %v3084, %v3084
    %v3126 = vmul.f32 %v3085, %v3085
    %v3127 = vmul.f32 %v3086, %v3086
    %v3128 = vmul.f32 %v3087, %v3087
    %v3129 = vmul.f32 %v3088, %v3088
    %v3130 = vadd.f32 %v3114, %v3115
    %v3131 = vadd.f32 %v3130, %v3116
    %v3132 = vadd.f32 %v3131, %v3117
    %v3133 = vadd.f32 %v3132, %v3118
    %v3134 = vadd.f32 %v3133, %v3119
    %v3135 = vadd.f32 %v3134, %v3120
    %v3136 = vadd.f32 %v3135, %v3121
    %v3137 = vadd.f32 %v3136, %v3122
    %v3138 = vadd.f32 %v3137, %v3123
    %v3139 = vadd.f32 %v3138, %v3124
    %v3140 = vadd.f32 %v3139, %v3125
    %v3141 = vadd.f32 %v3140, %v3126
    %v3142 = vadd.f32 %v3141, %v3127
    %v3143 = vadd.f32 %v3142, %v3128
    %v3144 = vadd.f32 %v3143, %v3129
    %v3145 = vrot.slane %v3144, 4
    %v3146 = vadd.f32 %v3144, %v3145
    %v3147 = vrot.slane %v3146, 2
    %v3148 = vadd.f32 %v3146, %v3147
    %v3149 = vrot.slane %v3148, 1
    %v3150 = vadd.f32 %v3148, %v3149
    %v3151 = vmul.f32 %v3150, %v3112
    %v3152 = vmul.f32 %v3113, %v3113
    %v3153 = vsub.f32 %v3151, %v3152
    %v3154 = vsub.f32 %v3073, %v3113
    %v3155 = vsub.f32 %v3074, %v3113
    %v3156 = vsub.f32 %v3075, %v3113
    %v3157 = vsub.f32 %v3076, %v3113
    %v3158 = vsub.f32 %v3077, %v3113
    %v3159 = vsub.f32 %v3078, %v3113
    %v3160 = vsub.f32 %v3079, %v3113
    %v3161 = vsub.f32 %v3080, %v3113
    %v3162 = vsub.f32 %v3081, %v3113
    %v3163 = vsub.f32 %v3082, %v3113
    %v3164 = vsub.f32 %v3083, %v3113
    %v3165 = vsub.f32 %v3084, %v3113
    %v3166 = vsub.f32 %v3085, %v3113
    %v3167 = vsub.f32 %v3086, %v3113
    %v3168 = vsub.f32 %v3087, %v3113
    %v3169 = vsub.f32 %v3088, %v3113
    %v3170 = vadd.f32 %v3153, 1e-05
    %v3171 = vrsqrt.pop %v3170
    %v3172 = vmul.f32 %v3154, %v3171
    %v3173 = vmul.f32 %v3155, %v3171
    %v3174 = vmul.f32 %v3156, %v3171
    %v3175 = vmul.f32 %v3157, %v3171
    %v3176 = vmul.f32 %v3158, %v3171
    %v3177 = vmul.f32 %v3159, %v3171
    %v3178 = vmul.f32 %v3160, %v3171
    %v3179 = vmul.f32 %v3161, %v3171
    %v3180 = vmul.f32 %v3162, %v3171
    %v3181 = vmul.f32 %v3163, %v3171
    %v3182 = vmul.f32 %v3164, %v3171
    %v3183 = vmul.f32 %v3165, %v3171
    %v3184 = vmul.f32 %v3166, %v3171
    %v3185 = vmul.f32 %v3167, %v3171
    %v3186 = vmul.f32 %v3168, %v3171
    %v3187 = vmul.f32 %v3169, %v3171
    %v3189 = vlaneseq
    %v3190 = vshrl.u32 %v3189, 7
    %v3191 = vsub.s32 0, %v3190
    %v3192 = vrot.slane %v3089, %v3191
    %v3194 = vmul.f32 %v3172, %v3192
    %v3195 = vmul.f32 %v3173, %v3192
    %v3196 = vmul.f32 %v3174, %v3192
    %v3197 = vmul.f32 %v3175, %v3192
    %v3198 = vmul.f32 %v3176, %v3192
    %v3199 = vmul.f32 %v3177, %v3192
    %v3200 = vmul.f32 %v3178, %v3192
    %v3201 = vmul.f32 %v3179, %v3192
    %v3202 = vmul.f32 %v3180, %v3192
    %v3203 = vmul.f32 %v3181, %v3192
    %v3204 = vmul.f32 %v3182, %v3192
    %v3205 = vmul.f32 %v3183, %v3192
    %v3206 = vmul.f32 %v3184, %v3192
    %v3207 = vmul.f32 %v3185, %v3192
    %v3208 = vmul.f32 %v3186, %v3192
    %v3209 = vmul.f32 %v3187, %v3192
    %v3211 = vlaneseq
    %v3212 = vshrl.u32 %v3211, 7
    %v3213 = vsub.s32 0, %v3212
    %v3214 = vrot.slane %v3090, %v3213
    %v3216 = vadd.f32 %v3194, %v3214
    %v3217 = vadd.f32 %v3195, %v3214
    %v3218 = vadd.f32 %v3196, %v3214
    %v3219 = vadd.f32 %v3197, %v3214
    %v3220 = vadd.f32 %v3198, %v3214
    %v3221 = vadd.f32 %v3199, %v3214
    %v3222 = vadd.f32 %v3200, %v3214
    %v3223 = vadd.f32 %v3201, %v3214
    %v3224 = vadd.f32 %v3202, %v3214
    %v3225 = vadd.f32 %v3203, %v3214
    %v3226 = vadd.f32 %v3204, %v3214
    %v3227 = vadd.f32 %v3205, %v3214
    %v3228 = vadd.f32 %v3206, %v3214
    %v3229 = vadd.f32 %v3207, %v3214
    %v3230 = vadd.f32 %v3208, %v3214
    %v3231 = vadd.f32 %v3209, %v3214
    %v3232 = vmax.f32 %v3216, 0.0
    %v3233 = vmax.f32 %v3217, 0.0
    %v3234 = vmax.f32 %v3218, 0.0
    %v3235 = vmax.f32 %v3219, 0.0
    %v3236 = vmax.f32 %v3220, 0.0
    %v3237 = vmax.f32 %v3221, 0.0
    %v3238 = vmax.f32 %v3222, 0.0
    %v3239 = vmax.f32 %v3223, 0.0
    %v3240 = vmax.f32 %v3224, 0.0
    %v3241 = vmax.f32 %v3225, 0.0
    %v3242 = vmax.f32 %v3226, 0.0
    %v3243 = vmax.f32 %v3227, 0.0
    %v3244 = vmax.f32 %v3228, 0.0
    %v3245 = vmax.f32 %v3229, 0.0
    %v3246 = vmax.f32 %v3230, 0.0
    %v3247 = vmax.f32 %v3231, 0.0
    %v3248 = vld [vmem:[#allocation3] sm:$0xff]
    %v3249 = vld [vmem:[#allocation3 + $0x8] sm:$0xff]
    %v3250 = vld [vmem:[#allocation3 + $0x10] sm:$0xff]
    %v3251 = vld [vmem:[#allocation3 + $0x18] sm:$0xff]
    %v3252 = vld [vmem:[#allocation3 + $0x20] sm:$0xff]
    %v3253 = vld [vmem:[#allocation3 + $0x28] sm:$0xff]
    %v3254 = vld [vmem:[#allocation3 + $0x30] sm:$0xff]
    %v3255 = vld [vmem:[#allocation3 + $0x38] sm:$0xff]
    %v3256 = vld [vmem:[#allocation3 + $0x40] sm:$0xff]
    %v3257 = vld [vmem:[#allocation3 + $0x48] sm:$0xff]
    %v3258 = vld [vmem:[#allocation3 + $0x50] sm:$0xff]
    %v3259 = vld [vmem:[#allocation3 + $0x58] sm:$0xff]
    %v3260 = vld [vmem:[#allocation3 + $0x60] sm:$0xff]
    %v3261 = vld [vmem:[#allocation3 + $0x68] sm:$0xff]
    %v3262 = vld [vmem:[#allocation3 + $0x70] sm:$0xff]
    %v3263 = vld [vmem:[#allocation3 + $0x78] sm:$0xff]
    %v3264 = vld [vmem:[#allocation11] sm:$0xff]
    %v3265 = vld [vmem:[#allocation11 + $0x8] sm:$0xff]
    %v3266 = vld [vmem:[#allocation11 + $0x10] sm:$0xff]
    %v3267 = vld [vmem:[#allocation11 + $0x18] sm:$0xff]
    %v3268 = vld [vmem:[#allocation11 + $0x20] sm:$0xff]
    %v3269 = vld [vmem:[#allocation11 + $0x28] sm:$0xff]
    %v3270 = vld [vmem:[#allocation11 + $0x30] sm:$0xff]
    %v3271 = vld [vmem:[#allocation11 + $0x38] sm:$0xff]
    %v3272 = vld [vmem:[#allocation11 + $0x40] sm:$0xff]
    %v3273 = vld [vmem:[#allocation11 + $0x48] sm:$0xff]
    %v3274 = vld [vmem:[#allocation11 + $0x50] sm:$0xff]
    %v3275 = vld [vmem:[#allocation11 + $0x58] sm:$0xff]
    %v3276 = vld [vmem:[#allocation11 + $0x60] sm:$0xff]
    %v3277 = vld [vmem:[#allocation11 + $0x68] sm:$0xff]
    %v3278 = vld [vmem:[#allocation11 + $0x70] sm:$0xff]
    %v3279 = vld [vmem:[#allocation11 + $0x78] sm:$0xff]
    %3280 = vmatprep.subr.mxu0 0.0
    %3281 = vmatpush1.msra.mxu0 %v3279
    %3282 = vmatprep.subr.mxu0 0.0
    %3283 = vmatpush1.msra.mxu0 %v3278
    %3284 = vmatprep.subr.mxu0 0.0
    %3285 = vmatpush1.msra.mxu0 %v3277
    %3286 = vmatprep.subr.mxu0 0.0
    %3287 = vmatpush1.msra.mxu0 %v3276
    %3288 = vmatprep.subr.mxu0 0.0
    %3289 = vmatpush1.msra.mxu0 %v3275
    %3290 = vmatprep.subr.mxu0 0.0
    %3291 = vmatpush1.msra.mxu0 %v3274
    %3292 = vmatprep.subr.mxu0 0.0
    %3293 = vmatpush1.msra.mxu0 %v3273
    %3294 = vmatprep.subr.mxu0 0.0
    %3295 = vmatpush1.msra.mxu0 %v3272
    %3296 = vmatprep.subr.mxu0 0.0
    %3297 = vmatpush1.msra.mxu0 %v3271
    %3298 = vmatprep.subr.mxu0 0.0
    %3299 = vmatpush1.msra.mxu0 %v3270
    %3300 = vmatprep.subr.mxu0 0.0
    %3301 = vmatpush1.msra.mxu0 %v3269
    %3302 = vmatprep.subr.mxu0 0.0
    %3303 = vmatpush1.msra.mxu0 %v3268
    %3304 = vmatprep.subr.mxu0 0.0
    %3305 = vmatpush1.msra.mxu0 %v3267
    %3306 = vmatprep.subr.mxu0 0.0
    %3307 = vmatpush1.msra.mxu0 %v3266
    %3308 = vmatprep.subr.mxu0 0.0
    %3309 = vmatpush1.msra.mxu0 %v3265
    %3310 = vmatprep.subr.mxu0 0.0
    %3311 = vmatpush1.msra.mxu0 %v3264
    %3312 = vmatprep.subr.mxu0 0.0
    %3313 = vmatpush2.msra.mxu0 0.0
    %3314 = vmatprep.subr.mxu0 0.0
    %3315 = vmatpush2.msra.mxu0 0.0
    %3316 = vmatprep.subr.mxu0 0.0
    %3317 = vmatpush2.msra.mxu0 0.0
    %3318 = vmatprep.subr.mxu0 0.0
    %3319 = vmatpush2.msra.mxu0 0.0
    %3320 = vmatprep.subr.mxu0 0.0
    %3321 = vmatpush2.msra.mxu0 0.0
    %3322 = vmatprep.subr.mxu0 0.0
    %3323 = vmatpush2.msra.mxu0 0.0
    %3324 = vmatprep.subr.mxu0 0.0
    %3325 = vmatpush2.msra.mxu0 0.0
    %3326 = vmatprep.subr.mxu0 0.0
    %3327 = vmatpush2.msra.mxu0 0.0
    %3328 = vmatprep.subr.mxu0 0.0
    %3329 = vmatpush2.msra.mxu0 0.0
    %3330 = vmatprep.subr.mxu0 0.0
    %3331 = vmatpush2.msra.mxu0 0.0
    %3332 = vmatprep.subr.mxu0 0.0
    %3333 = vmatpush2.msra.mxu0 0.0
    %3334 = vmatprep.subr.mxu0 0.0
    %3335 = vmatpush2.msra.mxu0 0.0
    %3336 = vmatprep.subr.mxu0 0.0
    %3337 = vmatpush2.msra.mxu0 0.0
    %3338 = vmatprep.subr.mxu0 0.0
    %3339 = vmatpush2.msra.mxu0 0.0
    %3340 = vmatprep.subr.mxu0 0.0
    %3341 = vmatpush2.msra.mxu0 0.0
    %3342 = vmatprep.subr.mxu0 0.0
    %3343 = vmatpush2.msra.mxu0 0.0
    %3344 = vmatprep.mubr.f32.mxu0 0.0
    %3345 = vmatmul.mubr.f32.gmra.mxu0 %v3248
    %v3346 = vpop.f32.mrf.mxu0
    %v3347 = vadd.f32 0.0, %v3346
    %v3348 = vpop.f32.mrf.mxu0
    %3349 = vmatprep.mubr.f32.mxu0 0.0
    %3350 = vmatmul.mubr.f32.gmra.mxu0 %v3249
    %v3351 = vpop.f32.mrf.mxu0
    %v3352 = vadd.f32 0.0, %v3351
    %v3353 = vpop.f32.mrf.mxu0
    %3354 = vmatprep.mubr.f32.mxu0 0.0
    %3355 = vmatmul.mubr.f32.gmra.mxu0 %v3250
    %v3356 = vpop.f32.mrf.mxu0
    %v3357 = vadd.f32 0.0, %v3356
    %v3358 = vpop.f32.mrf.mxu0
    %3359 = vmatprep.mubr.f32.mxu0 0.0
    %3360 = vmatmul.mubr.f32.gmra.mxu0 %v3251
    %v3361 = vpop.f32.mrf.mxu0
    %v3362 = vadd.f32 0.0, %v3361
    %v3363 = vpop.f32.mrf.mxu0
    %3364 = vmatprep.mubr.f32.mxu0 0.0
    %3365 = vmatmul.mubr.f32.gmra.mxu0 %v3252
    %v3366 = vpop.f32.mrf.mxu0
    %v3367 = vadd.f32 0.0, %v3366
    %v3368 = vpop.f32.mrf.mxu0
    %3369 = vmatprep.mubr.f32.mxu0 0.0
    %3370 = vmatmul.mubr.f32.gmra.mxu0 %v3253
    %v3371 = vpop.f32.mrf.mxu0
    %v3372 = vadd.f32 0.0, %v3371
    %v3373 = vpop.f32.mrf.mxu0
    %3374 = vmatprep.mubr.f32.mxu0 0.0
    %3375 = vmatmul.mubr.f32.gmra.mxu0 %v3254
    %v3376 = vpop.f32.mrf.mxu0
    %v3377 = vadd.f32 0.0, %v3376
    %v3378 = vpop.f32.mrf.mxu0
    %3379 = vmatprep.mubr.f32.mxu0 0.0
    %3380 = vmatmul.mubr.f32.gmra.mxu0 %v3255
    %v3381 = vpop.f32.mrf.mxu0
    %v3382 = vadd.f32 0.0, %v3381
    %v3383 = vpop.f32.mrf.mxu0
    %3384 = vmatprep.mubr.f32.mxu0 0.0
    %3385 = vmatmul.mubr.f32.gmra.mxu0 %v3256
    %v3386 = vpop.f32.mrf.mxu0
    %v3387 = vadd.f32 0.0, %v3386
    %v3388 = vpop.f32.mrf.mxu0
    %3389 = vmatprep.mubr.f32.mxu0 0.0
    %3390 = vmatmul.mubr.f32.gmra.mxu0 %v3257
    %v3391 = vpop.f32.mrf.mxu0
    %v3392 = vadd.f32 0.0, %v3391
    %v3393 = vpop.f32.mrf.mxu0
    %3394 = vmatprep.mubr.f32.mxu0 0.0
    %3395 = vmatmul.mubr.f32.gmra.mxu0 %v3258
    %v3396 = vpop.f32.mrf.mxu0
    %v3397 = vadd.f32 0.0, %v3396
    %v3398 = vpop.f32.mrf.mxu0
    %3399 = vmatprep.mubr.f32.mxu0 0.0
    %3400 = vmatmul.mubr.f32.gmra.mxu0 %v3259
    %v3401 = vpop.f32.mrf.mxu0
    %v3402 = vadd.f32 0.0, %v3401
    %v3403 = vpop.f32.mrf.mxu0
    %3404 = vmatprep.mubr.f32.mxu0 0.0
    %3405 = vmatmul.mubr.f32.gmra.mxu0 %v3260
    %v3406 = vpop.f32.mrf.mxu0
    %v3407 = vadd.f32 0.0, %v3406
    %v3408 = vpop.f32.mrf.mxu0
    %3409 = vmatprep.mubr.f32.mxu0 0.0
    %3410 = vmatmul.mubr.f32.gmra.mxu0 %v3261
    %v3411 = vpop.f32.mrf.mxu0
    %v3412 = vadd.f32 0.0, %v3411
    %v3413 = vpop.f32.mrf.mxu0
    %3414 = vmatprep.mubr.f32.mxu0 0.0
    %3415 = vmatmul.mubr.f32.gmra.mxu0 %v3262
    %v3416 = vpop.f32.mrf.mxu0
    %v3417 = vadd.f32 0.0, %v3416
    %v3418 = vpop.f32.mrf.mxu0
    %3419 = vmatprep.mubr.f32.mxu0 0.0
    %3420 = vmatmul.mubr.f32.gmra.mxu0 %v3263
    %v3421 = vpop.f32.mrf.mxu0
    %v3422 = vadd.f32 0.0, %v3421
    %v3423 = vpop.f32.mrf.mxu0
    %3424 = vdwg.mxu0
    %v3425 = vld [vmem:[%s11] sm:$0x1]
    %v3426 = vld [vmem:[%s12] sm:$0x1]
    %v3427 = vadd.f32 %v3347, %v3352
    %v3428 = vadd.f32 %v3427, %v3357
    %v3429 = vadd.f32 %v3428, %v3362
    %v3430 = vadd.f32 %v3429, %v3367
    %v3431 = vadd.f32 %v3430, %v3372
    %v3432 = vadd.f32 %v3431, %v3377
    %v3433 = vadd.f32 %v3432, %v3382
    %v3434 = vadd.f32 %v3433, %v3387
    %v3435 = vadd.f32 %v3434, %v3392
    %v3436 = vadd.f32 %v3435, %v3397
    %v3437 = vadd.f32 %v3436, %v3402
    %v3438 = vadd.f32 %v3437, %v3407
    %v3439 = vadd.f32 %v3438, %v3412
    %v3440 = vadd.f32 %v3439, %v3417
    %v3441 = vadd.f32 %v3440, %v3422
    %v3442 = vrot.slane %v3441, 4
    %v3443 = vadd.f32 %v3441, %v3442
    %v3444 = vrot.slane %v3443, 2
    %v3445 = vadd.f32 %v3443, %v3444
    %v3446 = vrot.slane %v3445, 1
    %v3447 = vadd.f32 %v3445, %v3446
    %v3448 = vmul.f32 %v3447, %v3112
    %v3449 = vmul.f32 %v3347, %v3347
    %v3450 = vmul.f32 %v3352, %v3352
    %v3451 = vmul.f32 %v3357, %v3357
    %v3452 = vmul.f32 %v3362, %v3362
    %v3453 = vmul.f32 %v3367, %v3367
    %v3454 = vmul.f32 %v3372, %v3372
    %v3455 = vmul.f32 %v3377, %v3377
    %v3456 = vmul.f32 %v3382, %v3382
    %v3457 = vmul.f32 %v3387, %v3387
    %v3458 = vmul.f32 %v3392, %v3392
    %v3459 = vmul.f32 %v3397, %v3397
    %v3460 = vmul.f32 %v3402, %v3402
    %v3461 = vmul.f32 %v3407, %v3407
    %v3462 = vmul.f32 %v3412, %v3412
    %v3463 = vmul.f32 %v3417, %v3417
    %v3464 = vmul.f32 %v3422, %v3422
    %v3465 = vadd.f32 %v3449, %v3450
    %v3466 = vadd.f32 %v3465, %v3451
    %v3467 = vadd.f32 %v3466, %v3452
    %v3468 = vadd.f32 %v3467, %v3453
    %v3469 = vadd.f32 %v3468, %v3454
    %v3470 = vadd.f32 %v3469, %v3455
    %v3471 = vadd.f32 %v3470, %v3456
    %v3472 = vadd.f32 %v3471, %v3457
    %v3473 = vadd.f32 %v3472, %v3458
    %v3474 = vadd.f32 %v3473, %v3459
    %v3475 = vadd.f32 %v3474, %v3460
    %v3476 = vadd.f32 %v3475, %v3461
    %v3477 = vadd.f32 %v3476, %v3462
    %v3478 = vadd.f32 %v3477, %v3463
    %v3479 = vadd.f32 %v3478, %v3464
    %v3480 = vrot.slane %v3479, 4
    %v3481 = vadd.f32 %v3479, %v3480
    %v3482 = vrot.slane %v3481, 2
    %v3483 = vadd.f32 %v3481, %v3482
    %v3484 = vrot.slane %v3483, 1
    %v3485 = vadd.f32 %v3483, %v3484
    %v3486 = vmul.f32 %v3485, %v3112
    %v3487 = vmul.f32 %v3448, %v3448
    %v3488 = vsub.f32 %v3486, %v3487
    %v3489 = vsub.f32 %v3347, %v3448
    %v3490 = vsub.f32 %v3352, %v3448
    %v3491 = vsub.f32 %v3357, %v3448
    %v3492 = vsub.f32 %v3362, %v3448
    %v3493 = vsub.f32 %v3367, %v3448
    %v3494 = vsub.f32 %v3372, %v3448
    %v3495 = vsub.f32 %v3377, %v3448
    %v3496 = vsub.f32 %v3382, %v3448
    %v3497 = vsub.f32 %v3387, %v3448
    %v3498 = vsub.f32 %v3392, %v3448
    %v3499 = vsub.f32 %v3397, %v3448
    %v3500 = vsub.f32 %v3402, %v3448
    %v3501 = vsub.f32 %v3407, %v3448
    %v3502 = vsub.f32 %v3412, %v3448
    %v3503 = vsub.f32 %v3417, %v3448
    %v3504 = vsub.f32 %v3422, %v3448
    %v3505 = vadd.f32 %v3488, 1e-05
    %v3506 = vrsqrt.pop %v3505
    %v3507 = vmul.f32 %v3489, %v3506
    %v3508 = vmul.f32 %v3490, %v3506
    %v3509 = vmul.f32 %v3491, %v3506
    %v3510 = vmul.f32 %v3492, %v3506
    %v3511 = vmul.f32 %v3493, %v3506
    %v3512 = vmul.f32 %v3494, %v3506
    %v3513 = vmul.f32 %v3495, %v3506
    %v3514 = vmul.f32 %v3496, %v3506
    %v3515 = vmul.f32 %v3497, %v3506
    %v3516 = vmul.f32 %v3498, %v3506
    %v3517 = vmul.f32 %v3499, %v3506
    %v3518 = vmul.f32 %v3500, %v3506
    %v3519 = vmul.f32 %v3501, %v3506
    %v3520 = vmul.f32 %v3502, %v3506
    %v3521 = vmul.f32 %v3503, %v3506
    %v3522 = vmul.f32 %v3504, %v3506
    %v3524 = vlaneseq
    %v3525 = vshrl.u32 %v3524, 7
    %v3526 = vsub.s32 0, %v3525
    %v3527 = vrot.slane %v3425, %v3526
    %v3529 = vmul.f32 %v3507, %v3527
    %v3530 = vmul.f32 %v3508, %v3527
    %v3531 = vmul.f32 %v3509, %v3527
    %v3532 = vmul.f32 %v3510, %v3527
    %v3533 = vmul.f32 %v3511, %v3527
    %v3534 = vmul.f32 %v3512, %v3527
    %v3535 = vmul.f32 %v3513, %v3527
    %v3536 = vmul.f32 %v3514, %v3527
    %v3537 = vmul.f32 %v3515, %v3527
    %v3538 = vmul.f32 %v3516, %v3527
    %v3539 = vmul.f32 %v3517, %v3527
    %v3540 = vmul.f32 %v3518, %v3527
    %v3541 = vmul.f32 %v3519, %v3527
    %v3542 = vmul.f32 %v3520, %v3527
    %v3543 = vmul.f32 %v3521, %v3527
    %v3544 = vmul.f32 %v3522, %v3527
    %v3546 = vlaneseq
    %v3547 = vshrl.u32 %v3546, 7
    %v3548 = vsub.s32 0, %v3547
    %v3549 = vrot.slane %v3426, %v3548
    %v3551 = vadd.f32 %v3529, %v3549
    %v3552 = vadd.f32 %v3530, %v3549
    %v3553 = vadd.f32 %v3531, %v3549
    %v3554 = vadd.f32 %v3532, %v3549
    %v3555 = vadd.f32 %v3533, %v3549
    %v3556 = vadd.f32 %v3534, %v3549
    %v3557 = vadd.f32 %v3535, %v3549
    %v3558 = vadd.f32 %v3536, %v3549
    %v3559 = vadd.f32 %v3537, %v3549
    %v3560 = vadd.f32 %v3538, %v3549
    %v3561 = vadd.f32 %v3539, %v3549
    %v3562 = vadd.f32 %v3540, %v3549
    %v3563 = vadd.f32 %v3541, %v3549
    %v3564 = vadd.f32 %v3542, %v3549
    %v3565 = vadd.f32 %v3543, %v3549
    %v3566 = vadd.f32 %v3544, %v3549
    %v3567 = vld [vmem:[#allocation9] sm:$0xff]
    %v3568 = vld [vmem:[#allocation9 + $0x8] sm:$0xff]
    %v3569 = vld [vmem:[#allocation9 + $0x10] sm:$0xff]
    %v3570 = vld [vmem:[#allocation9 + $0x18] sm:$0xff]
    %v3571 = vld [vmem:[#allocation9 + $0x20] sm:$0xff]
    %v3572 = vld [vmem:[#allocation9 + $0x28] sm:$0xff]
    %v3573 = vld [vmem:[#allocation9 + $0x30] sm:$0xff]
    %v3574 = vld [vmem:[#allocation9 + $0x38] sm:$0xff]
    %v3575 = vld [vmem:[#allocation9 + $0x40] sm:$0xff]
    %v3576 = vld [vmem:[#allocation9 + $0x48] sm:$0xff]
    %v3577 = vld [vmem:[#allocation9 + $0x50] sm:$0xff]
    %v3578 = vld [vmem:[#allocation9 + $0x58] sm:$0xff]
    %v3579 = vld [vmem:[#allocation9 + $0x60] sm:$0xff]
    %v3580 = vld [vmem:[#allocation9 + $0x68] sm:$0xff]
    %v3581 = vld [vmem:[#allocation9 + $0x70] sm:$0xff]
    %v3582 = vld [vmem:[#allocation9 + $0x78] sm:$0xff]
    %3583 = vmatprep.subr.mxu0 0.0
    %3584 = vmatpush1.msra.mxu0 %v3582
    %3585 = vmatprep.subr.mxu0 0.0
    %3586 = vmatpush1.msra.mxu0 %v3581
    %3587 = vmatprep.subr.mxu0 0.0
    %3588 = vmatpush1.msra.mxu0 %v3580
    %3589 = vmatprep.subr.mxu0 0.0
    %3590 = vmatpush1.msra.mxu0 %v3579
    %3591 = vmatprep.subr.mxu0 0.0
    %3592 = vmatpush1.msra.mxu0 %v3578
    %3593 = vmatprep.subr.mxu0 0.0
    %3594 = vmatpush1.msra.mxu0 %v3577
    %3595 = vmatprep.subr.mxu0 0.0
    %3596 = vmatpush1.msra.mxu0 %v3576
    %3597 = vmatprep.subr.mxu0 0.0
    %3598 = vmatpush1.msra.mxu0 %v3575
    %3599 = vmatprep.subr.mxu0 0.0
    %3600 = vmatpush1.msra.mxu0 %v3574
    %3601 = vmatprep.subr.mxu0 0.0
    %3602 = vmatpush1.msra.mxu0 %v3573
    %3603 = vmatprep.subr.mxu0 0.0
    %3604 = vmatpush1.msra.mxu0 %v3572
    %3605 = vmatprep.subr.mxu0 0.0
    %3606 = vmatpush1.msra.mxu0 %v3571
    %3607 = vmatprep.subr.mxu0 0.0
    %3608 = vmatpush1.msra.mxu0 %v3570
    %3609 = vmatprep.subr.mxu0 0.0
    %3610 = vmatpush1.msra.mxu0 %v3569
    %3611 = vmatprep.subr.mxu0 0.0
    %3612 = vmatpush1.msra.mxu0 %v3568
    %3613 = vmatprep.subr.mxu0 0.0
    %3614 = vmatpush1.msra.mxu0 %v3567
    %3615 = vmatprep.subr.mxu0 0.0
    %3616 = vmatpush2.msra.mxu0 0.0
    %3617 = vmatprep.subr.mxu0 0.0
    %3618 = vmatpush2.msra.mxu0 0.0
    %3619 = vmatprep.subr.mxu0 0.0
    %3620 = vmatpush2.msra.mxu0 0.0
    %3621 = vmatprep.subr.mxu0 0.0
    %3622 = vmatpush2.msra.mxu0 0.0
    %3623 = vmatprep.subr.mxu0 0.0
    %3624 = vmatpush2.msra.mxu0 0.0
    %3625 = vmatprep.subr.mxu0 0.0
    %3626 = vmatpush2.msra.mxu0 0.0
    %3627 = vmatprep.subr.mxu0 0.0
    %3628 = vmatpush2.msra.mxu0 0.0
    %3629 = vmatprep.subr.mxu0 0.0
    %3630 = vmatpush2.msra.mxu0 0.0
    %3631 = vmatprep.subr.mxu0 0.0
    %3632 = vmatpush2.msra.mxu0 0.0
    %3633 = vmatprep.subr.mxu0 0.0
    %3634 = vmatpush2.msra.mxu0 0.0
    %3635 = vmatprep.subr.mxu0 0.0
    %3636 = vmatpush2.msra.mxu0 0.0
    %3637 = vmatprep.subr.mxu0 0.0
    %3638 = vmatpush2.msra.mxu0 0.0
    %3639 = vmatprep.subr.mxu0 0.0
    %3640 = vmatpush2.msra.mxu0 0.0
    %3641 = vmatprep.subr.mxu0 0.0
    %3642 = vmatpush2.msra.mxu0 0.0
    %3643 = vmatprep.subr.mxu0 0.0
    %3644 = vmatpush2.msra.mxu0 0.0
    %3645 = vmatprep.subr.mxu0 0.0
    %3646 = vmatpush2.msra.mxu0 0.0
    %3647 = vmatprep.mubr.f32.mxu0 0.0
    %3648 = vmatmul.mubr.f32.gmra.mxu0 %v3232
    %v3649 = vpop.f32.mrf.mxu0
    %v3650 = vadd.f32 0.0, %v3649
    %v3651 = vpop.f32.mrf.mxu0
    %3652 = vmatprep.mubr.f32.mxu0 0.0
    %3653 = vmatmul.mubr.f32.gmra.mxu0 %v3233
    %v3654 = vpop.f32.mrf.mxu0
    %v3655 = vadd.f32 0.0, %v3654
    %v3656 = vpop.f32.mrf.mxu0
    %3657 = vmatprep.mubr.f32.mxu0 0.0
    %3658 = vmatmul.mubr.f32.gmra.mxu0 %v3234
    %v3659 = vpop.f32.mrf.mxu0
    %v3660 = vadd.f32 0.0, %v3659
    %v3661 = vpop.f32.mrf.mxu0
    %3662 = vmatprep.mubr.f32.mxu0 0.0
    %3663 = vmatmul.mubr.f32.gmra.mxu0 %v3235
    %v3664 = vpop.f32.mrf.mxu0
    %v3665 = vadd.f32 0.0, %v3664
    %v3666 = vpop.f32.mrf.mxu0
    %3667 = vmatprep.mubr.f32.mxu0 0.0
    %3668 = vmatmul.mubr.f32.gmra.mxu0 %v3236
    %v3669 = vpop.f32.mrf.mxu0
    %v3670 = vadd.f32 0.0, %v3669
    %v3671 = vpop.f32.mrf.mxu0
    %3672 = vmatprep.mubr.f32.mxu0 0.0
    %3673 = vmatmul.mubr.f32.gmra.mxu0 %v3237
    %v3674 = vpop.f32.mrf.mxu0
    %v3675 = vadd.f32 0.0, %v3674
    %v3676 = vpop.f32.mrf.mxu0
    %3677 = vmatprep.mubr.f32.mxu0 0.0
    %3678 = vmatmul.mubr.f32.gmra.mxu0 %v3238
    %v3679 = vpop.f32.mrf.mxu0
    %v3680 = vadd.f32 0.0, %v3679
    %v3681 = vpop.f32.mrf.mxu0
    %3682 = vmatprep.mubr.f32.mxu0 0.0
    %3683 = vmatmul.mubr.f32.gmra.mxu0 %v3239
    %v3684 = vpop.f32.mrf.mxu0
    %v3685 = vadd.f32 0.0, %v3684
    %v3686 = vpop.f32.mrf.mxu0
    %3687 = vmatprep.mubr.f32.mxu0 0.0
    %3688 = vmatmul.mubr.f32.gmra.mxu0 %v3240
    %v3689 = vpop.f32.mrf.mxu0
    %v3690 = vadd.f32 0.0, %v3689
    %v3691 = vpop.f32.mrf.mxu0
    %3692 = vmatprep.mubr.f32.mxu0 0.0
    %3693 = vmatmul.mubr.f32.gmra.mxu0 %v3241
    %v3694 = vpop.f32.mrf.mxu0
    %v3695 = vadd.f32 0.0, %v3694
    %v3696 = vpop.f32.mrf.mxu0
    %3697 = vmatprep.mubr.f32.mxu0 0.0
    %3698 = vmatmul.mubr.f32.gmra.mxu0 %v3242
    %v3699 = vpop.f32.mrf.mxu0
    %v3700 = vadd.f32 0.0, %v3699
    %v3701 = vpop.f32.mrf.mxu0
    %3702 = vmatprep.mubr.f32.mxu0 0.0
    %3703 = vmatmul.mubr.f32.gmra.mxu0 %v3243
    %v3704 = vpop.f32.mrf.mxu0
    %v3705 = vadd.f32 0.0, %v3704
    %v3706 = vpop.f32.mrf.mxu0
    %3707 = vmatprep.mubr.f32.mxu0 0.0
    %3708 = vmatmul.mubr.f32.gmra.mxu0 %v3244
    %v3709 = vpop.f32.mrf.mxu0
    %v3710 = vadd.f32 0.0, %v3709
    %v3711 = vpop.f32.mrf.mxu0
    %3712 = vmatprep.mubr.f32.mxu0 0.0
    %3713 = vmatmul.mubr.f32.gmra.mxu0 %v3245
    %v3714 = vpop.f32.mrf.mxu0
    %v3715 = vadd.f32 0.0, %v3714
    %v3716 = vpop.f32.mrf.mxu0
    %3717 = vmatprep.mubr.f32.mxu0 0.0
    %3718 = vmatmul.mubr.f32.gmra.mxu0 %v3246
    %v3719 = vpop.f32.mrf.mxu0
    %v3720 = vadd.f32 0.0, %v3719
    %v3721 = vpop.f32.mrf.mxu0
    %3722 = vmatprep.mubr.f32.mxu0 0.0
    %3723 = vmatmul.mubr.f32.gmra.mxu0 %v3247
    %v3724 = vpop.f32.mrf.mxu0
    %v3725 = vadd.f32 0.0, %v3724
    %v3726 = vpop.f32.mrf.mxu0
    %3727 = vdwg.mxu0
    %v3728 = vld [vmem:[%s8] sm:$0x1]
    %v3729 = vld [vmem:[%s9] sm:$0x1]
    %v3730 = vadd.f32 %v3650, %v3655
    %v3731 = vadd.f32 %v3730, %v3660
    %v3732 = vadd.f32 %v3731, %v3665
    %v3733 = vadd.f32 %v3732, %v3670
    %v3734 = vadd.f32 %v3733, %v3675
    %v3735 = vadd.f32 %v3734, %v3680
    %v3736 = vadd.f32 %v3735, %v3685
    %v3737 = vadd.f32 %v3736, %v3690
    %v3738 = vadd.f32 %v3737, %v3695
    %v3739 = vadd.f32 %v3738, %v3700
    %v3740 = vadd.f32 %v3739, %v3705
    %v3741 = vadd.f32 %v3740, %v3710
    %v3742 = vadd.f32 %v3741, %v3715
    %v3743 = vadd.f32 %v3742, %v3720
    %v3744 = vadd.f32 %v3743, %v3725
    %v3745 = vrot.slane %v3744, 4
    %v3746 = vadd.f32 %v3744, %v3745
    %v3747 = vrot.slane %v3746, 2
    %v3748 = vadd.f32 %v3746, %v3747
    %v3749 = vrot.slane %v3748, 1
    %v3750 = vadd.f32 %v3748, %v3749
    %v3751 = vmul.f32 %v3750, %v3112
    %v3752 = vmul.f32 %v3650, %v3650
    %v3753 = vmul.f32 %v3655, %v3655
    %v3754 = vmul.f32 %v3660, %v3660
    %v3755 = vmul.f32 %v3665, %v3665
    %v3756 = vmul.f32 %v3670, %v3670
    %v3757 = vmul.f32 %v3675, %v3675
    %v3758 = vmul.f32 %v3680, %v3680
    %v3759 = vmul.f32 %v3685, %v3685
    %v3760 = vmul.f32 %v3690, %v3690
    %v3761 = vmul.f32 %v3695, %v3695
    %v3762 = vmul.f32 %v3700, %v3700
    %v3763 = vmul.f32 %v3705, %v3705
    %v3764 = vmul.f32 %v3710, %v3710
    %v3765 = vmul.f32 %v3715, %v3715
    %v3766 = vmul.f32 %v3720, %v3720
    %v3767 = vmul.f32 %v3725, %v3725
    %v3768 = vadd.f32 %v3752, %v3753
    %v3769 = vadd.f32 %v3768, %v3754
    %v3770 = vadd.f32 %v3769, %v3755
    %v3771 = vadd.f32 %v3770, %v3756
    %v3772 = vadd.f32 %v3771, %v3757
    %v3773 = vadd.f32 %v3772, %v3758
    %v3774 = vadd.f32 %v3773, %v3759
    %v3775 = vadd.f32 %v3774, %v3760
    %v3776 = vadd.f32 %v3775, %v3761
    %v3777 = vadd.f32 %v3776, %v3762
    %v3778 = vadd.f32 %v3777, %v3763
    %v3779 = vadd.f32 %v3778, %v3764
    %v3780 = vadd.f32 %v3779, %v3765
    %v3781 = vadd.f32 %v3780, %v3766
    %v3782 = vadd.f32 %v3781, %v3767
    %v3783 = vrot.slane %v3782, 4
    %v3784 = vadd.f32 %v3782, %v3783
    %v3785 = vrot.slane %v3784, 2
    %v3786 = vadd.f32 %v3784, %v3785
    %v3787 = vrot.slane %v3786, 1
    %v3788 = vadd.f32 %v3786, %v3787
    %v3789 = vmul.f32 %v3788, %v3112
    %v3790 = vmul.f32 %v3751, %v3751
    %v3791 = vsub.f32 %v3789, %v3790
    %v3792 = vsub.f32 %v3650, %v3751
    %v3793 = vsub.f32 %v3655, %v3751
    %v3794 = vsub.f32 %v3660, %v3751
    %v3795 = vsub.f32 %v3665, %v3751
    %v3796 = vsub.f32 %v3670, %v3751
    %v3797 = vsub.f32 %v3675, %v3751
    %v3798 = vsub.f32 %v3680, %v3751
    %v3799 = vsub.f32 %v3685, %v3751
    %v3800 = vsub.f32 %v3690, %v3751
    %v3801 = vsub.f32 %v3695, %v3751
    %v3802 = vsub.f32 %v3700, %v3751
    %v3803 = vsub.f32 %v3705, %v3751
    %v3804 = vsub.f32 %v3710, %v3751
    %v3805 = vsub.f32 %v3715, %v3751
    %v3806 = vsub.f32 %v3720, %v3751
    %v3807 = vsub.f32 %v3725, %v3751
    %v3808 = vadd.f32 %v3791, 1e-05
    %v3809 = vrsqrt.pop %v3808
    %v3810 = vmul.f32 %v3792, %v3809
    %v3811 = vmul.f32 %v3793, %v3809
    %v3812 = vmul.f32 %v3794, %v3809
    %v3813 = vmul.f32 %v3795, %v3809
    %v3814 = vmul.f32 %v3796, %v3809
    %v3815 = vmul.f32 %v3797, %v3809
    %v3816 = vmul.f32 %v3798, %v3809
    %v3817 = vmul.f32 %v3799, %v3809
    %v3818 = vmul.f32 %v3800, %v3809
    %v3819 = vmul.f32 %v3801, %v3809
    %v3820 = vmul.f32 %v3802, %v3809
    %v3821 = vmul.f32 %v3803, %v3809
    %v3822 = vmul.f32 %v3804, %v3809
    %v3823 = vmul.f32 %v3805, %v3809
    %v3824 = vmul.f32 %v3806, %v3809
    %v3825 = vmul.f32 %v3807, %v3809
    %v3827 = vlaneseq
    %v3828 = vshrl.u32 %v3827, 7
    %v3829 = vsub.s32 0, %v3828
    %v3830 = vrot.slane %v3728, %v3829
    %v3832 = vmul.f32 %v3810, %v3830
    %v3833 = vmul.f32 %v3811, %v3830
    %v3834 = vmul.f32 %v3812, %v3830
    %v3835 = vmul.f32 %v3813, %v3830
    %v3836 = vmul.f32 %v3814, %v3830
    %v3837 = vmul.f32 %v3815, %v3830
    %v3838 = vmul.f32 %v3816, %v3830
    %v3839 = vmul.f32 %v3817, %v3830
    %v3840 = vmul.f32 %v3818, %v3830
    %v3841 = vmul.f32 %v3819, %v3830
    %v3842 = vmul.f32 %v3820, %v3830
    %v3843 = vmul.f32 %v3821, %v3830
    %v3844 = vmul.f32 %v3822, %v3830
    %v3845 = vmul.f32 %v3823, %v3830
    %v3846 = vmul.f32 %v3824, %v3830
    %v3847 = vmul.f32 %v3825, %v3830
    %v3849 = vlaneseq
    %v3850 = vshrl.u32 %v3849, 7
    %v3851 = vsub.s32 0, %v3850
    %v3852 = vrot.slane %v3729, %v3851
    %v3854 = vadd.f32 %v3832, %v3852
    %v3855 = vadd.f32 %v3833, %v3852
    %v3856 = vadd.f32 %v3834, %v3852
    %v3857 = vadd.f32 %v3835, %v3852
    %v3858 = vadd.f32 %v3836, %v3852
    %v3859 = vadd.f32 %v3837, %v3852
    %v3860 = vadd.f32 %v3838, %v3852
    %v3861 = vadd.f32 %v3839, %v3852
    %v3862 = vadd.f32 %v3840, %v3852
    %v3863 = vadd.f32 %v3841, %v3852
    %v3864 = vadd.f32 %v3842, %v3852
    %v3865 = vadd.f32 %v3843, %v3852
    %v3866 = vadd.f32 %v3844, %v3852
    %v3867 = vadd.f32 %v3845, %v3852
    %v3868 = vadd.f32 %v3846, %v3852
    %v3869 = vadd.f32 %v3847, %v3852
    %v3870 = vadd.f32 %v3854, %v3551
    %v3871 = vadd.f32 %v3855, %v3552
    %v3872 = vadd.f32 %v3856, %v3553
    %v3873 = vadd.f32 %v3857, %v3554
    %v3874 = vadd.f32 %v3858, %v3555
    %v3875 = vadd.f32 %v3859, %v3556
    %v3876 = vadd.f32 %v3860, %v3557
    %v3877 = vadd.f32 %v3861, %v3558
    %v3878 = vadd.f32 %v3862, %v3559
    %v3879 = vadd.f32 %v3863, %v3560
    %v3880 = vadd.f32 %v3864, %v3561
    %v3881 = vadd.f32 %v3865, %v3562
    %v3882 = vadd.f32 %v3866, %v3563
    %v3883 = vadd.f32 %v3867, %v3564
    %v3884 = vadd.f32 %v3868, %v3565
    %v3885 = vadd.f32 %v3869, %v3566
    %v3886 = vmax.f32 %v3870, 0.0
    %v3887 = vmax.f32 %v3871, 0.0
    %v3888 = vmax.f32 %v3872, 0.0
    %v3889 = vmax.f32 %v3873, 0.0
    %v3890 = vmax.f32 %v3874, 0.0
    %v3891 = vmax.f32 %v3875, 0.0
    %v3892 = vmax.f32 %v3876, 0.0
    %v3893 = vmax.f32 %v3877, 0.0
    %v3894 = vmax.f32 %v3878, 0.0
    %v3895 = vmax.f32 %v3879, 0.0
    %v3896 = vmax.f32 %v3880, 0.0
    %v3897 = vmax.f32 %v3881, 0.0
    %v3898 = vmax.f32 %v3882, 0.0
    %v3899 = vmax.f32 %v3883, 0.0
    %v3900 = vmax.f32 %v3884, 0.0
    %v3901 = vmax.f32 %v3885, 0.0
    %3902 = vst [vmem:[#allocation12] sm:$0xff] %v3886
    %3903 = vst [vmem:[#allocation12 + $0x8] sm:$0xff] %v3887
    %3904 = vst [vmem:[#allocation12 + $0x10] sm:$0xff] %v3888
    %3905 = vst [vmem:[#allocation12 + $0x18] sm:$0xff] %v3889
    %3906 = vst [vmem:[#allocation12 + $0x20] sm:$0xff] %v3890
    %3907 = vst [vmem:[#allocation12 + $0x28] sm:$0xff] %v3891
    %3908 = vst [vmem:[#allocation12 + $0x30] sm:$0xff] %v3892
    %3909 = vst [vmem:[#allocation12 + $0x38] sm:$0xff] %v3893
    %3910 = vst [vmem:[#allocation12 + $0x40] sm:$0xff] %v3894
    %3911 = vst [vmem:[#allocation12 + $0x48] sm:$0xff] %v3895
    %3912 = vst [vmem:[#allocation12 + $0x50] sm:$0xff] %v3896
    %3913 = vst [vmem:[#allocation12 + $0x58] sm:$0xff] %v3897
    %3914 = vst [vmem:[#allocation12 + $0x60] sm:$0xff] %v3898
    %3915 = vst [vmem:[#allocation12 + $0x68] sm:$0xff] %v3899
    %3916 = vst [vmem:[#allocation12 + $0x70] sm:$0xff] %v3900
    %3917 = vst [vmem:[#allocation12 + $0x78] sm:$0xff] %v3901
    // Predicated region
    $region74: #{tpu_custom_call.1} parent=1 // pred_check
      _
    $region75: #{tpu_custom_call.1} parent=1 // pred_check_branch
      %3919 = sbr.rel (0) target = $region77
    $region76: #{tpu_custom_call.1} parent=1 // pred_region
      %s3921 = ssub.s32 2048, 2048
      %3922 = vsyncadd [#allocation5], %s3921
      %s3923 = sshll.u32 [#allocation12], 4
      %s3924 = int_to_ptr.vmem [resolvable:$true] %s3923
      %3929 = dma.vmem_to_hbm [thread:$0]  %s3924, 2048, %s13, [#allocation5], 128, 128, 8
    $region77: #{tpu_custom_call.1} parent=1 // pred_fallthru
      _
    // Predicated region
    $region78: #{tpu_custom_call.1} parent=1 // pred_check
      _
    $region79: #{tpu_custom_call.1} parent=1 // pred_check_branch
      %3931 = sbr.rel (0) target = $region81
    $region80: #{tpu_custom_call.1} parent=1 // pred_region
      %3932 = dma.done [#allocation5], 2048
    $region81: #{tpu_custom_call.1} parent=1 // pred_fallthru
      _
    %3933 = vsyncpa [#allocation4], 1
    %3934 = vsyncpa [#allocation7], 1
    %3935 = vsyncpa [#allocation10], 1
    %3936 = vsyncpa [#allocation5], 1

</llo_original>
